<compile_context>
chip_gen: v7x
topology: tpu7x:2x2x1
jax: 0.10.0
libtpu: 0.0.40
codegen_flags: <defaults>
</compile_context>

<pallas_src>
import jax
import jax.numpy as jnp
from jax.experimental import pallas as pl
from jax.experimental.pallas import tpu as pltpu

_MAX_TILE_ROWS = 512     # row tile for the conv / fc matmuls (multiple of 16)
_FC_PAD = 128            # lane-dense fc output width (10 -> 128)


def _round_up(n, m):
    return ((n + m - 1) // m) * m


# ----------------------------- Pallas kernels ------------------------------

def _conv_relu_pool_kernel(p00_ref, p01_ref, p10_ref, p11_ref, w_ref, b_ref, o_ref):
    """Fused conv (im2col matmul) + bias + ReLU + 2x2 max-pool.

    p??_ref : (TILE, K)   bf16 im2col patches, one per pool-tap position.
    w_ref   : (K, Cout)   bf16 weights, rows ordered (kh, kw, cin).
    b_ref   : (1, Cout)   f32 bias.
    o_ref   : (TILE, Cout) bf16 pooled output rows, ordered (b, ho, wo).
    """
    w = w_ref[...]

    def conv_tap(p_ref):
        return jnp.dot(p_ref[...], w, preferred_element_type=jnp.float32)

    m = jnp.maximum(jnp.maximum(conv_tap(p00_ref), conv_tap(p01_ref)),
                    jnp.maximum(conv_tap(p10_ref), conv_tap(p11_ref)))
    # bias is identical across the 4 taps and ReLU is monotone, so
    # max_i(relu(dot_i + b)) == relu(max_i(dot_i) + b).
    o_ref[...] = jnp.maximum(m + b_ref[...], 0.0).astype(o_ref.dtype)


def _matmul_bias_kernel(x_ref, w_ref, b_ref, o_ref):
    acc = jnp.dot(x_ref[...], w_ref[...], preferred_element_type=jnp.float32)
    o_ref[...] = (acc + b_ref[...]).astype(o_ref.dtype)


_PARALLEL = pltpu.CompilerParams(dimension_semantics=("parallel",))


# ------------------------------ layer wrappers ------------------------------

def conv_relu_pool(x_nhwc, w_kc, b_1c):
    """Conv2d(k=5, pad=2) + ReLU + MaxPool2d(2) (NHWC) via one fused kernel."""
    B, H, W, Cin = x_nhwc.shape
    Ho, Wo = H // 2, W // 2
    K, Cout = w_kc.shape

    xp = jnp.pad(x_nhwc.astype(jnp.bfloat16), ((0, 0), (2, 2), (2, 2), (0, 0)))

    def tap_matrix(ph, pw):
        # rows: (b, ho, wo); cols: (kh, kw, cin) -- matches the prepared weights.
        cols = [xp[:, ph + kh: ph + kh + H: 2, pw + kw: pw + kw + W: 2, :]
                for kh in range(5) for kw in range(5)]
        pm = jnp.stack(cols, axis=3).reshape(B * Ho * Wo, 25 * Cin)
        if 25 * Cin < K:                         # conv1: K padded 25 -> 32
            pm = jnp.pad(pm, ((0, 0), (0, K - 25 * Cin)))
        return pm

    taps = [tap_matrix(0, 0), tap_matrix(0, 1), tap_matrix(1, 0), tap_matrix(1, 1)]

    rows = B * Ho * Wo
    tile = min(_MAX_TILE_ROWS, _round_up(rows, 16))
    rows_p = _round_up(rows, tile)
    taps = [jnp.pad(t, ((0, rows_p - rows), (0, 0))) for t in taps]

    out = pl.pallas_call(
        _conv_relu_pool_kernel,
        out_shape=jax.ShapeDtypeStruct((rows_p, Cout), jnp.bfloat16),
        grid_spec=pltpu.PrefetchScalarGridSpec(
            num_scalar_prefetch=0,
            grid=(rows_p // tile,),
            in_specs=[pl.BlockSpec((tile, K), lambda i: (i, 0))] * 4
                     + [pl.BlockSpec((K, Cout), lambda i: (0, 0)),
                        pl.BlockSpec((1, Cout), lambda i: (0, 0))],
            out_specs=pl.BlockSpec((tile, Cout), lambda i: (i, 0)),
        ),
        compiler_params=_PARALLEL,
    )(*taps, w_kc, b_1c)
    return out[:rows].reshape(B, Ho, Wo, Cout)


def linear(x, w_km, b_1m):
    """x @ w + b with a row-tiled kernel and lane-dense (padded) output."""
    B, K = x.shape
    M = w_km.shape[1]
    tile = min(256, _round_up(B, 16))
    Bp = _round_up(B, tile)
    xp = jnp.pad(x.astype(jnp.bfloat16), ((0, Bp - B), (0, 0)))
    out = pl.pallas_call(
        _matmul_bias_kernel,
        out_shape=jax.ShapeDtypeStruct((Bp, M), jnp.float32),
        grid_spec=pltpu.PrefetchScalarGridSpec(
            num_scalar_prefetch=0,
            grid=(Bp // tile,),
            in_specs=[pl.BlockSpec((tile, K), lambda i: (i, 0)),
                      pl.BlockSpec((K, M), lambda i: (0, 0)),
                      pl.BlockSpec((1, M), lambda i: (0, 0))],
            out_specs=pl.BlockSpec((tile, M), lambda i: (i, 0)),
        ),
        compiler_params=_PARALLEL,
    )(xp, w_km, b_1m)
    return out[:B]


# ------------------------------ params & model ------------------------------

def init_params(key):
    """Deterministic init matching the PyTorch module's parameter shapes."""
    k1, k2, k3, k4, k5, k6 = jax.random.split(key, 6)

    def uniform(k, shape, fan_in):
        bound = 1.0 / jnp.sqrt(float(fan_in))
        return jax.random.uniform(k, shape, jnp.float32, -bound, bound)

    return {
        "conv1_w": uniform(k1, (16, 1, 5, 5), 1 * 5 * 5),
        "conv1_b": uniform(k2, (16,), 1 * 5 * 5),
        "conv2_w": uniform(k3, (32, 16, 5, 5), 16 * 5 * 5),
        "conv2_b": uniform(k4, (32,), 16 * 5 * 5),
        "fc_w":    uniform(k5, (10, 7 * 7 * 32), 7 * 7 * 32),
        "fc_b":    uniform(k6, (10,), 7 * 7 * 32),
    }


def prepare_params(params):
    """One-time weight re-layout (hoisted out of the per-forward hot path)."""
    # conv weights: (Cout, Cin, kh, kw) -> (kh, kw, Cin, Cout) -> (25*Cin, Cout)
    w1 = jnp.transpose(params["conv1_w"], (2, 3, 1, 0)).reshape(25 * 1, 16)
    w1 = jnp.pad(w1, ((0, 32 - 25), (0, 0))).astype(jnp.bfloat16)    # K: 25 -> 32
    w2 = jnp.transpose(params["conv2_w"], (2, 3, 1, 0)).reshape(25 * 16, 32)
    w2 = w2.astype(jnp.bfloat16)
    # fc: PyTorch flattens NCHW (feature index = c*49 + h*7 + w); permute the
    # weight rows to NHWC order so the pooled activations flatten directly.
    fcw = params["fc_w"].reshape(10, 32, 7, 7)
    fcw = jnp.transpose(fcw, (2, 3, 1, 0)).reshape(7 * 7 * 32, 10)
    fcw = jnp.pad(fcw, ((0, 0), (0, _FC_PAD - 10))).astype(jnp.bfloat16)
    fcb = jnp.pad(params["fc_b"], (0, _FC_PAD - 10)).reshape(1, _FC_PAD)
    return {
        "w1": w1, "b1": params["conv1_b"].reshape(1, 16).astype(jnp.float32),
        "w2": w2, "b2": params["conv2_b"].reshape(1, 32).astype(jnp.float32),
        "fcw": fcw, "fcb": fcb.astype(jnp.float32),
    }


def cnn_forward(prepped, x_nchw):
    B = x_nchw.shape[0]
    x = jnp.transpose(x_nchw, (0, 2, 3, 1))                  # NCHW -> NHWC
    h1 = conv_relu_pool(x, prepped["w1"], prepped["b1"])     # (B, 14, 14, 16) bf16
    h2 = conv_relu_pool(h1, prepped["w2"], prepped["b2"])    # (B, 7, 7, 32)  bf16
    flat = h2.reshape(B, 7 * 7 * 32)                         # NHWC flatten (fc rows permuted to match)
    logits = linear(flat, prepped["fcw"], prepped["fcb"])    # (B, 128) f32
    return logits[:, :10]


def cnn_reference(params, x_nchw):
    """Pure-JAX f32 reference mirroring the PyTorch module exactly."""
    dn = ("NCHW", "OIHW", "NCHW")
    out = jax.lax.conv_general_dilated(x_nchw, params["conv1_w"], (1, 1),
                                       ((2, 2), (2, 2)), dimension_numbers=dn)
    out = jax.nn.relu(out + params["conv1_b"][None, :, None, None])
    out = jax.lax.reduce_window(out, -jnp.inf, jax.lax.max,
                                (1, 1, 2, 2), (1, 1, 2, 2), "VALID")
    out = jax.lax.conv_general_dilated(out, params["conv2_w"], (1, 1),
                                       ((2, 2), (2, 2)), dimension_numbers=dn)
    out = jax.nn.relu(out + params["conv2_b"][None, :, None, None])
    out = jax.lax.reduce_window(out, -jnp.inf, jax.lax.max,
                                (1, 1, 2, 2), (1, 1, 2, 2), "VALID")
    flat = out.reshape(out.shape[0], -1)
    return flat @ params["fc_w"].T + params["fc_b"]


if __name__ == "__main__":
    key = jax.random.PRNGKey(0)
    k_param, k_x = jax.random.split(key)
    params = init_params(k_param)
    prepped = prepare_params(params)
    # Input spatial size is fixed at 28x28 by the fc layer (7*7*32 = 1568).
    x = jax.random.normal(k_x, (2, 1, 28, 28), dtype=jnp.float32)

    logits = jax.jit(cnn_forward)(prepped, x)
    jax.block_until_ready(logits)
    assert logits.shape == (2, 10) and logits.dtype == jnp.float32

    # Loose tolerance: kernels use bf16 MXU operands with f32 accumulation.
    ref = cnn_reference(params, x)
    err = float(jnp.max(jnp.abs(logits - ref)))
    assert err < 5e-2, f"max abs error vs f32 reference: {err}"
    print("KERNEL_OK")
</pallas_src>

<mosaic_0001>
module attributes {stable_mosaic.version = 11 : i64} {
  func.func @_conv_relu_pool_kernel(%arg0: i32, %arg1: memref<400x32xbf16, #tpu.memory_space<vmem>>, %arg2: memref<400x32xbf16, #tpu.memory_space<vmem>>, %arg3: memref<400x32xbf16, #tpu.memory_space<vmem>>, %arg4: memref<400x32xbf16, #tpu.memory_space<vmem>>, %arg5: memref<32x16xbf16, #tpu.memory_space<vmem>>, %arg6: memref<1x16xf32, #tpu.memory_space<vmem>>, %arg7: memref<400x16xbf16, #tpu.memory_space<vmem>>) attributes {dimension_semantics = [#tpu.dimension_semantics<parallel>], iteration_bounds = array<i64: 1>, scalar_prefetch = 0 : i64, scratch_operands = 0 : i64, tpu.core_type = #tpu.core_type<tc>, window_params = [{transform_indices = @transform_0, window_bounds = array<i64: 400, 32>}, {transform_indices = @transform_1, window_bounds = array<i64: 400, 32>}, {transform_indices = @transform_2, window_bounds = array<i64: 400, 32>}, {transform_indices = @transform_3, window_bounds = array<i64: 400, 32>}, {pipeline_mode = #tpu.pipeline_mode<synchronous>, transform_indices = @transform_4, window_bounds = array<i64: 32, 16>}, {pipeline_mode = #tpu.pipeline_mode<synchronous>, transform_indices = @transform_5, window_bounds = array<i64: 1, 16>}, {transform_indices = @transform_6, window_bounds = array<i64: 400, 16>}]} {
    %c0 = arith.constant 0 : index
    %c0_0 = arith.constant 0 : index
    %0 = vector.load %arg5[%c0, %c0_0] : memref<32x16xbf16, #tpu.memory_space<vmem>>, vector<32x16xbf16>
    %c0_1 = arith.constant 0 : index
    %c0_2 = arith.constant 0 : index
    %1 = vector.load %arg1[%c0_1, %c0_2] : memref<400x32xbf16, #tpu.memory_space<vmem>>, vector<400x32xbf16>
    %cst = arith.constant dense<0.000000e+00> : vector<400x16xf32>
    %2 = tpu.matmul %1, %0, %cst {dimension_numbers = #tpu.dot_dimension_numbers<[1], [0], [0], [1], [0, 0, 1, 1], [], []>} : vector<400x32xbf16>, vector<32x16xbf16>, vector<400x16xf32> -> vector<400x16xf32>
    %c0_3 = arith.constant 0 : index
    %c0_4 = arith.constant 0 : index
    %3 = vector.load %arg2[%c0_3, %c0_4] : memref<400x32xbf16, #tpu.memory_space<vmem>>, vector<400x32xbf16>
    %cst_5 = arith.constant dense<0.000000e+00> : vector<400x16xf32>
    %4 = tpu.matmul %3, %0, %cst_5 {dimension_numbers = #tpu.dot_dimension_numbers<[1], [0], [0], [1], [0, 0, 1, 1], [], []>} : vector<400x32xbf16>, vector<32x16xbf16>, vector<400x16xf32> -> vector<400x16xf32>
    %5 = arith.maximumf %2, %4 : vector<400x16xf32>
    %c0_6 = arith.constant 0 : index
    %c0_7 = arith.constant 0 : index
    %6 = vector.load %arg3[%c0_6, %c0_7] : memref<400x32xbf16, #tpu.memory_space<vmem>>, vector<400x32xbf16>
    %cst_8 = arith.constant dense<0.000000e+00> : vector<400x16xf32>
    %7 = tpu.matmul %6, %0, %cst_8 {dimension_numbers = #tpu.dot_dimension_numbers<[1], [0], [0], [1], [0, 0, 1, 1], [], []>} : vector<400x32xbf16>, vector<32x16xbf16>, vector<400x16xf32> -> vector<400x16xf32>
    %c0_9 = arith.constant 0 : index
    %c0_10 = arith.constant 0 : index
    %8 = vector.load %arg4[%c0_9, %c0_10] : memref<400x32xbf16, #tpu.memory_space<vmem>>, vector<400x32xbf16>
    %cst_11 = arith.constant dense<0.000000e+00> : vector<400x16xf32>
    %9 = tpu.matmul %8, %0, %cst_11 {dimension_numbers = #tpu.dot_dimension_numbers<[1], [0], [0], [1], [0, 0, 1, 1], [], []>} : vector<400x32xbf16>, vector<32x16xbf16>, vector<400x16xf32> -> vector<400x16xf32>
    %10 = arith.maximumf %7, %9 : vector<400x16xf32>
    %11 = arith.maximumf %5, %10 : vector<400x16xf32>
    %c0_12 = arith.constant 0 : index
    %c0_13 = arith.constant 0 : index
    %12 = vector.load %arg6[%c0_12, %c0_13] : memref<1x16xf32, #tpu.memory_space<vmem>>, vector<1x16xf32>
    %13 = vector.broadcast %12 : vector<1x16xf32> to vector<400x16xf32>
    %14 = arith.addf %11, %13 : vector<400x16xf32>
    %cst_14 = arith.constant 0.000000e+00 : f32
    %15 = vector.broadcast %cst_14 : f32 to vector<400x16xf32>
    %16 = arith.maximumf %14, %15 : vector<400x16xf32>
    %17 = arith.truncf %16 : vector<400x16xf32> to vector<400x16xbf16>
    %c0_15 = arith.constant 0 : index
    %c0_16 = arith.constant 0 : index
    %18 = vector.load %arg7[%c0_15, %c0_16] : memref<400x16xbf16, #tpu.memory_space<vmem>>, vector<400x16xbf16>
    tpu.vector_store %arg7[%c0_15, %c0_16], %17 {strides = array<i32>} : memref<400x16xbf16, #tpu.memory_space<vmem>>, vector<400x16xbf16>,
    return
  }
  func.func @transform_0(%arg0: i32) -> (i32, i32) {
    %c0_i32 = arith.constant 0 : i32
    %c0_i32_0 = arith.constant 0 : i32
    return %arg0, %c0_i32 : i32, i32
  }
  func.func @transform_1(%arg0: i32) -> (i32, i32) {
    %c0_i32 = arith.constant 0 : i32
    %c0_i32_0 = arith.constant 0 : i32
    return %arg0, %c0_i32 : i32, i32
  }
  func.func @transform_2(%arg0: i32) -> (i32, i32) {
    %c0_i32 = arith.constant 0 : i32
    %c0_i32_0 = arith.constant 0 : i32
    return %arg0, %c0_i32 : i32, i32
  }
  func.func @transform_3(%arg0: i32) -> (i32, i32) {
    %c0_i32 = arith.constant 0 : i32
    %c0_i32_0 = arith.constant 0 : i32
    return %arg0, %c0_i32 : i32, i32
  }
  func.func @transform_4(%arg0: i32) -> (i32, i32) {
    %c0_i32 = arith.constant 0 : i32
    %c0_i32_0 = arith.constant 0 : i32
    %c0_i32_1 = arith.constant 0 : i32
    return %c0_i32, %c0_i32_0 : i32, i32
  }
  func.func @transform_5(%arg0: i32) -> (i32, i32) {
    %c0_i32 = arith.constant 0 : i32
    %c0_i32_0 = arith.constant 0 : i32
    %c0_i32_1 = arith.constant 0 : i32
    return %c0_i32, %c0_i32_0 : i32, i32
  }
  func.func @transform_6(%arg0: i32) -> (i32, i32) {
    %c0_i32 = arith.constant 0 : i32
    %c0_i32_0 = arith.constant 0 : i32
    return %arg0, %c0_i32 : i32, i32
  }
}

module attributes {stable_mosaic.version = 11 : i64} {
  func.func @_conv_relu_pool_kernel(%arg0: i32, %arg1: memref<112x400xbf16, #tpu.memory_space<vmem>>, %arg2: memref<112x400xbf16, #tpu.memory_space<vmem>>, %arg3: memref<112x400xbf16, #tpu.memory_space<vmem>>, %arg4: memref<112x400xbf16, #tpu.memory_space<vmem>>, %arg5: memref<400x32xbf16, #tpu.memory_space<vmem>>, %arg6: memref<1x32xf32, #tpu.memory_space<vmem>>, %arg7: memref<112x32xbf16, #tpu.memory_space<vmem>>) attributes {dimension_semantics = [#tpu.dimension_semantics<parallel>], iteration_bounds = array<i64: 1>, scalar_prefetch = 0 : i64, scratch_operands = 0 : i64, tpu.core_type = #tpu.core_type<tc>, window_params = [{transform_indices = @transform_0, window_bounds = array<i64: 112, 400>}, {transform_indices = @transform_1, window_bounds = array<i64: 112, 400>}, {transform_indices = @transform_2, window_bounds = array<i64: 112, 400>}, {transform_indices = @transform_3, window_bounds = array<i64: 112, 400>}, {pipeline_mode = #tpu.pipeline_mode<synchronous>, transform_indices = @transform_4, window_bounds = array<i64: 400, 32>}, {pipeline_mode = #tpu.pipeline_mode<synchronous>, transform_indices = @transform_5, window_bounds = array<i64: 1, 32>}, {transform_indices = @transform_6, window_bounds = array<i64: 112, 32>}]} {
    %c0 = arith.constant 0 : index
    %c0_0 = arith.constant 0 : index
    %0 = vector.load %arg5[%c0, %c0_0] : memref<400x32xbf16, #tpu.memory_space<vmem>>, vector<400x32xbf16>
    %c0_1 = arith.constant 0 : index
    %c0_2 = arith.constant 0 : index
    %1 = vector.load %arg1[%c0_1, %c0_2] : memref<112x400xbf16, #tpu.memory_space<vmem>>, vector<112x400xbf16>
    %cst = arith.constant dense<0.000000e+00> : vector<112x32xf32>
    %2 = tpu.matmul %1, %0, %cst {dimension_numbers = #tpu.dot_dimension_numbers<[1], [0], [0], [1], [0, 0, 1, 1], [], []>} : vector<112x400xbf16>, vector<400x32xbf16>, vector<112x32xf32> -> vector<112x32xf32>
    %c0_3 = arith.constant 0 : index
    %c0_4 = arith.constant 0 : index
    %3 = vector.load %arg2[%c0_3, %c0_4] : memref<112x400xbf16, #tpu.memory_space<vmem>>, vector<112x400xbf16>
    %cst_5 = arith.constant dense<0.000000e+00> : vector<112x32xf32>
    %4 = tpu.matmul %3, %0, %cst_5 {dimension_numbers = #tpu.dot_dimension_numbers<[1], [0], [0], [1], [0, 0, 1, 1], [], []>} : vector<112x400xbf16>, vector<400x32xbf16>, vector<112x32xf32> -> vector<112x32xf32>
    %5 = arith.maximumf %2, %4 : vector<112x32xf32>
    %c0_6 = arith.constant 0 : index
    %c0_7 = arith.constant 0 : index
    %6 = vector.load %arg3[%c0_6, %c0_7] : memref<112x400xbf16, #tpu.memory_space<vmem>>, vector<112x400xbf16>
    %cst_8 = arith.constant dense<0.000000e+00> : vector<112x32xf32>
    %7 = tpu.matmul %6, %0, %cst_8 {dimension_numbers = #tpu.dot_dimension_numbers<[1], [0], [0], [1], [0, 0, 1, 1], [], []>} : vector<112x400xbf16>, vector<400x32xbf16>, vector<112x32xf32> -> vector<112x32xf32>
    %c0_9 = arith.constant 0 : index
    %c0_10 = arith.constant 0 : index
    %8 = vector.load %arg4[%c0_9, %c0_10] : memref<112x400xbf16, #tpu.memory_space<vmem>>, vector<112x400xbf16>
    %cst_11 = arith.constant dense<0.000000e+00> : vector<112x32xf32>
    %9 = tpu.matmul %8, %0, %cst_11 {dimension_numbers = #tpu.dot_dimension_numbers<[1], [0], [0], [1], [0, 0, 1, 1], [], []>} : vector<112x400xbf16>, vector<400x32xbf16>, vector<112x32xf32> -> vector<112x32xf32>
    %10 = arith.maximumf %7, %9 : vector<112x32xf32>
    %11 = arith.maximumf %5, %10 : vector<112x32xf32>
    %c0_12 = arith.constant 0 : index
    %c0_13 = arith.constant 0 : index
    %12 = vector.load %arg6[%c0_12, %c0_13] : memref<1x32xf32, #tpu.memory_space<vmem>>, vector<1x32xf32>
    %13 = vector.broadcast %12 : vector<1x32xf32> to vector<112x32xf32>
    %14 = arith.addf %11, %13 : vector<112x32xf32>
    %cst_14 = arith.constant 0.000000e+00 : f32
    %15 = vector.broadcast %cst_14 : f32 to vector<112x32xf32>
    %16 = arith.maximumf %14, %15 : vector<112x32xf32>
    %17 = arith.truncf %16 : vector<112x32xf32> to vector<112x32xbf16>
    %c0_15 = arith.constant 0 : index
    %c0_16 = arith.constant 0 : index
    %18 = vector.load %arg7[%c0_15, %c0_16] : memref<112x32xbf16, #tpu.memory_space<vmem>>, vector<112x32xbf16>
    tpu.vector_store %arg7[%c0_15, %c0_16], %17 {strides = array<i32>} : memref<112x32xbf16, #tpu.memory_space<vmem>>, vector<112x32xbf16>,
    return
  }
  func.func @transform_0(%arg0: i32) -> (i32, i32) {
    %c0_i32 = arith.constant 0 : i32
    %c0_i32_0 = arith.constant 0 : i32
    return %arg0, %c0_i32 : i32, i32
  }
  func.func @transform_1(%arg0: i32) -> (i32, i32) {
    %c0_i32 = arith.constant 0 : i32
    %c0_i32_0 = arith.constant 0 : i32
    return %arg0, %c0_i32 : i32, i32
  }
  func.func @transform_2(%arg0: i32) -> (i32, i32) {
    %c0_i32 = arith.constant 0 : i32
    %c0_i32_0 = arith.constant 0 : i32
    return %arg0, %c0_i32 : i32, i32
  }
  func.func @transform_3(%arg0: i32) -> (i32, i32) {
    %c0_i32 = arith.constant 0 : i32
    %c0_i32_0 = arith.constant 0 : i32
    return %arg0, %c0_i32 : i32, i32
  }
  func.func @transform_4(%arg0: i32) -> (i32, i32) {
    %c0_i32 = arith.constant 0 : i32
    %c0_i32_0 = arith.constant 0 : i32
    %c0_i32_1 = arith.constant 0 : i32
    return %c0_i32, %c0_i32_0 : i32, i32
  }
  func.func @transform_5(%arg0: i32) -> (i32, i32) {
    %c0_i32 = arith.constant 0 : i32
    %c0_i32_0 = arith.constant 0 : i32
    %c0_i32_1 = arith.constant 0 : i32
    return %c0_i32, %c0_i32_0 : i32, i32
  }
  func.func @transform_6(%arg0: i32) -> (i32, i32) {
    %c0_i32 = arith.constant 0 : i32
    %c0_i32_0 = arith.constant 0 : i32
    return %arg0, %c0_i32 : i32, i32
  }
}

module attributes {stable_mosaic.version = 11 : i64} {
  func.func @_matmul_bias_kernel(%arg0: i32, %arg1: memref<16x1568xbf16, #tpu.memory_space<vmem>>, %arg2: memref<1568x128xbf16, #tpu.memory_space<vmem>>, %arg3: memref<1x128xf32, #tpu.memory_space<vmem>>, %arg4: memref<16x128xf32, #tpu.memory_space<vmem>>) attributes {dimension_semantics = [#tpu.dimension_semantics<parallel>], iteration_bounds = array<i64: 1>, scalar_prefetch = 0 : i64, scratch_operands = 0 : i64, tpu.core_type = #tpu.core_type<tc>, window_params = [{transform_indices = @transform_0, window_bounds = array<i64: 16, 1568>}, {pipeline_mode = #tpu.pipeline_mode<synchronous>, transform_indices = @transform_1, window_bounds = array<i64: 1568, 128>}, {pipeline_mode = #tpu.pipeline_mode<synchronous>, transform_indices = @transform_2, window_bounds = array<i64: 1, 128>}, {transform_indices = @transform_3, window_bounds = array<i64: 16, 128>}]} {
    %c0 = arith.constant 0 : index
    %c0_0 = arith.constant 0 : index
    %0 = vector.load %arg1[%c0, %c0_0] : memref<16x1568xbf16, #tpu.memory_space<vmem>>, vector<16x1568xbf16>
    %c0_1 = arith.constant 0 : index
    %c0_2 = arith.constant 0 : index
    %1 = vector.load %arg2[%c0_1, %c0_2] : memref<1568x128xbf16, #tpu.memory_space<vmem>>, vector<1568x128xbf16>
    %cst = arith.constant dense<0.000000e+00> : vector<16x128xf32>
    %2 = tpu.matmul %0, %1, %cst {dimension_numbers = #tpu.dot_dimension_numbers<[1], [0], [0], [1], [0, 0, 1, 1], [], []>} : vector<16x1568xbf16>, vector<1568x128xbf16>, vector<16x128xf32> -> vector<16x128xf32>
    %c0_3 = arith.constant 0 : index
    %c0_4 = arith.constant 0 : index
    %3 = vector.load %arg3[%c0_3, %c0_4] : memref<1x128xf32, #tpu.memory_space<vmem>>, vector<1x128xf32>
    %4 = vector.broadcast %3 : vector<1x128xf32> to vector<16x128xf32>
    %5 = arith.addf %2, %4 : vector<16x128xf32>
    %c0_5 = arith.constant 0 : index
    %c0_6 = arith.constant 0 : index
    %6 = vector.load %arg4[%c0_5, %c0_6] : memref<16x128xf32, #tpu.memory_space<vmem>>, vector<16x128xf32>
    tpu.vector_store %arg4[%c0_5, %c0_6], %5 {strides = array<i32>} : memref<16x128xf32, #tpu.memory_space<vmem>>, vector<16x128xf32>,
    return
  }
  func.func @transform_0(%arg0: i32) -> (i32, i32) {
    %c0_i32 = arith.constant 0 : i32
    %c0_i32_0 = arith.constant 0 : i32
    return %arg0, %c0_i32 : i32, i32
  }
  func.func @transform_1(%arg0: i32) -> (i32, i32) {
    %c0_i32 = arith.constant 0 : i32
    %c0_i32_0 = arith.constant 0 : i32
    %c0_i32_1 = arith.constant 0 : i32
    return %c0_i32, %c0_i32_0 : i32, i32
  }
  func.func @transform_2(%arg0: i32) -> (i32, i32) {
    %c0_i32 = arith.constant 0 : i32
    %c0_i32_0 = arith.constant 0 : i32
    %c0_i32_1 = arith.constant 0 : i32
    return %c0_i32, %c0_i32_0 : i32, i32
  }
  func.func @transform_3(%arg0: i32) -> (i32, i32) {
    %c0_i32 = arith.constant 0 : i32
    %c0_i32_0 = arith.constant 0 : i32
    return %arg0, %c0_i32 : i32, i32
  }
}

</mosaic_0001>

<llo_original>
// kernel: cnn_forward.3
$region0: #{cnn_forward.3}
  #allocation0 [shape = 'u32[]', space=smem, size = 0x4, offset = 0x4, fixed_abs, tag = 'smem constant byte address 0x4 - core index']
  #allocation1 [shape = 'u32[144,128]{1,0:T(1,128)}', space=vmem, size = 0x12000, scoped, tag = 'internal scratch']
  %s0 = inlined_call_operand.vmem [shape: bf16[400,32], index: 0, kind: input, shape index: {}]
  %s1 = inlined_call_operand.vmem [shape: bf16[400,32], index: 1, kind: input, shape index: {}]
  %s2 = inlined_call_operand.vmem [shape: bf16[400,32], index: 2, kind: input, shape index: {}]
  %s3 = inlined_call_operand.vmem [shape: bf16[400,32], index: 3, kind: input, shape index: {}]
  %s4 = inlined_call_operand.vmem [shape: bf16[32,16], index: 4, kind: input, shape index: {}]
  %s5 = inlined_call_operand.vmem [shape: f32[1,16], index: 5, kind: input, shape index: {}]
  %s6 = inlined_call_operand.vmem [shape: bf16[400,16], index: 6, kind: output, shape index: {}]
  %s7 = sld [smem:[#allocation0]]
  $region34: #{cnn_forward.3} parent=0
    _
  %s9 = ssub.s32 1, %s7
  %s10 = scalar_select 0, %s9, %s7
  // Predicated region
  $region2: #{cnn_forward.3} parent=0 // pred_check
    _
  $region3: #{cnn_forward.3} parent=0 // pred_check_branch
    %12 = sbr.rel (0) target = $region5
  $region4: #{cnn_forward.3} parent=0 // pred_region
    _
  $region5: #{cnn_forward.3} parent=0 // pred_fallthru
    _
  // Predicated region
  $region6: #{cnn_forward.3} parent=0 // pred_check
    _
  $region7: #{cnn_forward.3} parent=0 // pred_check_branch
    %14 = sbr.rel (0) target = $region9
  $region8: #{cnn_forward.3} parent=0 // pred_region
    _
  $region9: #{cnn_forward.3} parent=0 // pred_fallthru
    _
  // Predicated region
  $region10: #{cnn_forward.3} parent=0 // pred_check
    _
  $region11: #{cnn_forward.3} parent=0 // pred_check_branch
    %16 = sbr.rel (0) target = $region13
  $region12: #{cnn_forward.3} parent=0 // pred_region
    _
  $region13: #{cnn_forward.3} parent=0 // pred_fallthru
    _
  // Predicated region
  $region14: #{cnn_forward.3} parent=0 // pred_check
    _
  $region15: #{cnn_forward.3} parent=0 // pred_check_branch
    %18 = sbr.rel (0) target = $region17
  $region16: #{cnn_forward.3} parent=0 // pred_region
    _
  $region17: #{cnn_forward.3} parent=0 // pred_fallthru
    _
  // Predicated region
  $region18: #{cnn_forward.3} parent=0 // pred_check
    _
  $region19: #{cnn_forward.3} parent=0 // pred_check_branch
    %20 = sbr.rel (0) target = $region21
  $region20: #{cnn_forward.3} parent=0 // pred_region
    _
  $region21: #{cnn_forward.3} parent=0 // pred_fallthru
    _
  // Predicated region
  $region22: #{cnn_forward.3} parent=0 // pred_check
    _
  $region23: #{cnn_forward.3} parent=0 // pred_check_branch
    %22 = sbr.rel (0) target = $region25
  $region24: #{cnn_forward.3} parent=0 // pred_region
    _
  $region25: #{cnn_forward.3} parent=0 // pred_fallthru
    _
  %v24 = vld [vmem:[%s4] sm:$0xf]
  %v25 = vld [vmem:[%s4 + $0x4] sm:$0xf]
  %v26 = vld [vmem:[%s4 + $0x8] sm:$0xf]
  %v27 = vld [vmem:[%s4 + $0xc] sm:$0xf]
  %v28 = vld [vmem:[%s0] sm:$0xf]
  %v29 = vld [vmem:[%s0 + $0x4] sm:$0xf]
  %v30 = vld [vmem:[%s0 + $0x8] sm:$0xf]
  %v31 = vld [vmem:[%s0 + $0xc] sm:$0xf]
  %v32 = vld [vmem:[%s0 + $0x10] sm:$0xf]
  %v33 = vld [vmem:[%s0 + $0x14] sm:$0xf]
  %v34 = vld [vmem:[%s0 + $0x18] sm:$0xf]
  %v35 = vld [vmem:[%s0 + $0x1c] sm:$0xf]
  %v36 = vld [vmem:[%s0 + $0x20] sm:$0xf]
  %v37 = vld [vmem:[%s0 + $0x24] sm:$0xf]
  %v38 = vld [vmem:[%s0 + $0x28] sm:$0xf]
  %v39 = vld [vmem:[%s0 + $0x2c] sm:$0xf]
  %v40 = vld [vmem:[%s0 + $0x30] sm:$0xf]
  %v41 = vld [vmem:[%s0 + $0x34] sm:$0xf]
  %v42 = vld [vmem:[%s0 + $0x38] sm:$0xf]
  %v43 = vld [vmem:[%s0 + $0x3c] sm:$0xf]
  %v44 = vld [vmem:[%s0 + $0x40] sm:$0xf]
  %v45 = vld [vmem:[%s0 + $0x44] sm:$0xf]
  %v46 = vld [vmem:[%s0 + $0x48] sm:$0xf]
  %v47 = vld [vmem:[%s0 + $0x4c] sm:$0xf]
  %v48 = vld [vmem:[%s0 + $0x50] sm:$0xf]
  %v49 = vld [vmem:[%s0 + $0x54] sm:$0xf]
  %v50 = vld [vmem:[%s0 + $0x58] sm:$0xf]
  %v51 = vld [vmem:[%s0 + $0x5c] sm:$0xf]
  %v52 = vld [vmem:[%s0 + $0x60] sm:$0xf]
  %v53 = vld [vmem:[%s0 + $0x64] sm:$0xf]
  %v54 = vld [vmem:[%s0 + $0x68] sm:$0xf]
  %v55 = vld [vmem:[%s0 + $0x6c] sm:$0xf]
  %v56 = vld [vmem:[%s0 + $0x70] sm:$0xf]
  %v57 = vld [vmem:[%s0 + $0x74] sm:$0xf]
  %v58 = vld [vmem:[%s0 + $0x78] sm:$0xf]
  %v59 = vld [vmem:[%s0 + $0x7c] sm:$0xf]
  %v60 = vld [vmem:[%s0 + $0x80] sm:$0xf]
  %v61 = vld [vmem:[%s0 + $0x84] sm:$0xf]
  %v62 = vld [vmem:[%s0 + $0x88] sm:$0xf]
  %v63 = vld [vmem:[%s0 + $0x8c] sm:$0xf]
  %v64 = vld [vmem:[%s0 + $0x90] sm:$0xf]
  %v65 = vld [vmem:[%s0 + $0x94] sm:$0xf]
  %v66 = vld [vmem:[%s0 + $0x98] sm:$0xf]
  %v67 = vld [vmem:[%s0 + $0x9c] sm:$0xf]
  %v68 = vld [vmem:[%s0 + $0xa0] sm:$0xf]
  %v69 = vld [vmem:[%s0 + $0xa4] sm:$0xf]
  %v70 = vld [vmem:[%s0 + $0xa8] sm:$0xf]
  %v71 = vld [vmem:[%s0 + $0xac] sm:$0xf]
  %v72 = vld [vmem:[%s0 + $0xb0] sm:$0xf]
  %v73 = vld [vmem:[%s0 + $0xb4] sm:$0xf]
  %v74 = vld [vmem:[%s0 + $0xb8] sm:$0xf]
  %v75 = vld [vmem:[%s0 + $0xbc] sm:$0xf]
  %v76 = vld [vmem:[%s0 + $0xc0] sm:$0xf]
  %v77 = vld [vmem:[%s0 + $0xc4] sm:$0xf]
  %v128 = vunpack.c.l.b16 %v28
  %v129 = vunpack.c.l.b16 %v29
  %v130 = vunpack.c.l.b16 %v30
  %v131 = vunpack.c.l.b16 %v31
  %v132 = vunpack.c.l.b16 %v32
  %v133 = vunpack.c.l.b16 %v33
  %v134 = vunpack.c.l.b16 %v34
  %v135 = vunpack.c.l.b16 %v35
  %v136 = vunpack.c.l.b16 %v36
  %v137 = vunpack.c.l.b16 %v37
  %v138 = vunpack.c.l.b16 %v38
  %v139 = vunpack.c.l.b16 %v39
  %v140 = vunpack.c.l.b16 %v40
  %v141 = vunpack.c.l.b16 %v41
  %v142 = vunpack.c.l.b16 %v42
  %v143 = vunpack.c.l.b16 %v43
  %v144 = vunpack.c.l.b16 %v44
  %v145 = vunpack.c.l.b16 %v45
  %v146 = vunpack.c.l.b16 %v46
  %v147 = vunpack.c.l.b16 %v47
  %v148 = vunpack.c.l.b16 %v48
  %v149 = vunpack.c.l.b16 %v49
  %v150 = vunpack.c.l.b16 %v50
  %v151 = vunpack.c.l.b16 %v51
  %v152 = vunpack.c.l.b16 %v52
  %v153 = vunpack.c.l.b16 %v53
  %v154 = vunpack.c.l.b16 %v54
  %v155 = vunpack.c.l.b16 %v55
  %v156 = vunpack.c.l.b16 %v56
  %v157 = vunpack.c.l.b16 %v57
  %v158 = vunpack.c.l.b16 %v58
  %v159 = vunpack.c.l.b16 %v59
  %v160 = vunpack.c.l.b16 %v60
  %v161 = vunpack.c.l.b16 %v61
  %v162 = vunpack.c.l.b16 %v62
  %v163 = vunpack.c.l.b16 %v63
  %v164 = vunpack.c.l.b16 %v64
  %v165 = vunpack.c.l.b16 %v65
  %v166 = vunpack.c.l.b16 %v66
  %v167 = vunpack.c.l.b16 %v67
  %v168 = vunpack.c.l.b16 %v68
  %v169 = vunpack.c.l.b16 %v69
  %v170 = vunpack.c.l.b16 %v70
  %v171 = vunpack.c.l.b16 %v71
  %v172 = vunpack.c.l.b16 %v72
  %v173 = vunpack.c.l.b16 %v73
  %v174 = vunpack.c.l.b16 %v74
  %v175 = vunpack.c.l.b16 %v75
  %v176 = vunpack.c.l.b16 %v76
  %v177 = vunpack.c.l.b16 %v77
  %v178 = vpack.c.b16 %v129, %v128
  %v179 = vpack.c.b16 %v131, %v130
  %v180 = vpack.c.b16 %v133, %v132
  %v181 = vpack.c.b16 %v135, %v134
  %v182 = vpack.c.b16 %v137, %v136
  %v183 = vpack.c.b16 %v139, %v138
  %v184 = vpack.c.b16 %v141, %v140
  %v185 = vpack.c.b16 %v143, %v142
  %v186 = vpack.c.b16 %v145, %v144
  %v187 = vpack.c.b16 %v147, %v146
  %v188 = vpack.c.b16 %v149, %v148
  %v189 = vpack.c.b16 %v151, %v150
  %v190 = vpack.c.b16 %v153, %v152
  %v191 = vpack.c.b16 %v155, %v154
  %v192 = vpack.c.b16 %v157, %v156
  %v193 = vpack.c.b16 %v159, %v158
  %v194 = vpack.c.b16 %v161, %v160
  %v195 = vpack.c.b16 %v163, %v162
  %v196 = vpack.c.b16 %v165, %v164
  %v197 = vpack.c.b16 %v167, %v166
  %v198 = vpack.c.b16 %v169, %v168
  %v199 = vpack.c.b16 %v171, %v170
  %v200 = vpack.c.b16 %v173, %v172
  %v201 = vpack.c.b16 %v175, %v174
  %v202 = vpack.c.b16 %v177, %v176
  %v207 = vunpack.c.l.b16 %v24
  %v208 = vunpack.c.l.b16 %v25
  %v209 = vunpack.c.l.b16 %v26
  %v210 = vunpack.c.l.b16 %v27
  %v211 = vpack.c.b16 %v208, %v207
  %v212 = vpack.c.b16 %v210, %v209
  %vm215 = vcmask 261120
  %v217 = vsel %vm215, %v178, 0
  %v220 = vsel %vm215, %v179, 0
  %v223 = vsel %vm215, %v180, 0
  %v226 = vsel %vm215, %v181, 0
  %v229 = vsel %vm215, %v182, 0
  %v232 = vsel %vm215, %v183, 0
  %v235 = vsel %vm215, %v184, 0
  %v238 = vsel %vm215, %v185, 0
  %v241 = vsel %vm215, %v186, 0
  %v244 = vsel %vm215, %v187, 0
  %v247 = vsel %vm215, %v188, 0
  %v250 = vsel %vm215, %v189, 0
  %v253 = vsel %vm215, %v190, 0
  %v256 = vsel %vm215, %v191, 0
  %v259 = vsel %vm215, %v192, 0
  %v262 = vsel %vm215, %v193, 0
  %v265 = vsel %vm215, %v194, 0
  %v268 = vsel %vm215, %v195, 0
  %v271 = vsel %vm215, %v196, 0
  %v274 = vsel %vm215, %v197, 0
  %v277 = vsel %vm215, %v198, 0
  %v280 = vsel %vm215, %v199, 0
  %v283 = vsel %vm215, %v200, 0
  %v286 = vsel %vm215, %v201, 0
  %v289 = vsel %vm215, %v202, 0
  %291 = vmatprep.subr.bf16.mxu0 0
  %292 = vmatpush1.bf16.msra.mxu0 %v211
  %293 = vmatprep.subr.bf16.mxu0 0
  %294 = vmatpush1.bf16.msra.mxu0 %v212
  %295 = vmatprep.subr.bf16.mxu0 0
  %296 = vmatpush1.bf16.msra.mxu0 0
  %297 = vmatprep.subr.bf16.mxu0 0
  %298 = vmatpush1.bf16.msra.mxu0 0
  %299 = vmatprep.subr.bf16.mxu0 0
  %300 = vmatpush1.bf16.msra.mxu0 0
  %301 = vmatprep.subr.bf16.mxu0 0
  %302 = vmatpush1.bf16.msra.mxu0 0
  %303 = vmatprep.subr.bf16.mxu0 0
  %304 = vmatpush1.bf16.msra.mxu0 0
  %305 = vmatprep.subr.bf16.mxu0 0
  %306 = vmatpush1.bf16.msra.mxu0 0
  %307 = vmatprep.subr.bf16.mxu0 0
  %308 = vmatpush1.bf16.msra.mxu0 0
  %309 = vmatprep.subr.bf16.mxu0 0
  %310 = vmatpush1.bf16.msra.mxu0 0
  %311 = vmatprep.subr.bf16.mxu0 0
  %312 = vmatpush1.bf16.msra.mxu0 0
  %313 = vmatprep.subr.bf16.mxu0 0
  %314 = vmatpush1.bf16.msra.mxu0 0
  %315 = vmatprep.subr.bf16.mxu0 0
  %316 = vmatpush1.bf16.msra.mxu0 0
  %317 = vmatprep.subr.bf16.mxu0 0
  %318 = vmatpush1.bf16.msra.mxu0 0
  %319 = vmatprep.subr.bf16.mxu0 0
  %320 = vmatpush1.bf16.msra.mxu0 0
  %321 = vmatprep.subr.bf16.mxu0 0
  %322 = vmatpush1.bf16.msra.mxu0 0
  %323 = vmatprep.mubr.bf16.mxu0 0
  %324 = vmatmul.mubr.bf16.gmra.mrb[0].mxu0 %v217
  %v325 = vpop.f32.mrb[0].mxu0
  %v326 = vadd.f32 0.0, %v325
  %v327 = vpop.f32.mrb[0].mxu0
  %v328 = vpop.f32.mrb[0].mxu0
  %v329 = vadd.f32 0.0, %v328
  %v330 = vpop.f32.mrb[0].mxu0
  %331 = vmatprep.mubr.bf16.mxu0 0
  %332 = vmatmul.mubr.bf16.gmra.mrb[0].mxu0 %v220
  %v333 = vpop.f32.mrb[0].mxu0
  %v334 = vadd.f32 0.0, %v333
  %v335 = vpop.f32.mrb[0].mxu0
  %v336 = vpop.f32.mrb[0].mxu0
  %v337 = vadd.f32 0.0, %v336
  %v338 = vpop.f32.mrb[0].mxu0
  %339 = vmatprep.mubr.bf16.mxu0 0
  %340 = vmatmul.mubr.bf16.gmra.mrb[0].mxu0 %v223
  %v341 = vpop.f32.mrb[0].mxu0
  %v342 = vadd.f32 0.0, %v341
  %v343 = vpop.f32.mrb[0].mxu0
  %v344 = vpop.f32.mrb[0].mxu0
  %v345 = vadd.f32 0.0, %v344
  %v346 = vpop.f32.mrb[0].mxu0
  %347 = vmatprep.mubr.bf16.mxu0 0
  %348 = vmatmul.mubr.bf16.gmra.mrb[0].mxu0 %v226
  %v349 = vpop.f32.mrb[0].mxu0
  %v350 = vadd.f32 0.0, %v349
  %v351 = vpop.f32.mrb[0].mxu0
  %v352 = vpop.f32.mrb[0].mxu0
  %v353 = vadd.f32 0.0, %v352
  %v354 = vpop.f32.mrb[0].mxu0
  %355 = vmatprep.mubr.bf16.mxu0 0
  %356 = vmatmul.mubr.bf16.gmra.mrb[0].mxu0 %v229
  %v357 = vpop.f32.mrb[0].mxu0
  %v358 = vadd.f32 0.0, %v357
  %v359 = vpop.f32.mrb[0].mxu0
  %v360 = vpop.f32.mrb[0].mxu0
  %v361 = vadd.f32 0.0, %v360
  %v362 = vpop.f32.mrb[0].mxu0
  %363 = vmatprep.mubr.bf16.mxu0 0
  %364 = vmatmul.mubr.bf16.gmra.mrb[0].mxu0 %v232
  %v365 = vpop.f32.mrb[0].mxu0
  %v366 = vadd.f32 0.0, %v365
  %v367 = vpop.f32.mrb[0].mxu0
  %v368 = vpop.f32.mrb[0].mxu0
  %v369 = vadd.f32 0.0, %v368
  %v370 = vpop.f32.mrb[0].mxu0
  %371 = vmatprep.mubr.bf16.mxu0 0
  %372 = vmatmul.mubr.bf16.gmra.mrb[0].mxu0 %v235
  %v373 = vpop.f32.mrb[0].mxu0
  %v374 = vadd.f32 0.0, %v373
  %v375 = vpop.f32.mrb[0].mxu0
  %v376 = vpop.f32.mrb[0].mxu0
  %v377 = vadd.f32 0.0, %v376
  %v378 = vpop.f32.mrb[0].mxu0
  %379 = vmatprep.mubr.bf16.mxu0 0
  %380 = vmatmul.mubr.bf16.gmra.mrb[0].mxu0 %v238
  %v381 = vpop.f32.mrb[0].mxu0
  %v382 = vadd.f32 0.0, %v381
  %v383 = vpop.f32.mrb[0].mxu0
  %v384 = vpop.f32.mrb[0].mxu0
  %v385 = vadd.f32 0.0, %v384
  %v386 = vpop.f32.mrb[0].mxu0
  %387 = vmatprep.mubr.bf16.mxu0 0
  %388 = vmatmul.mubr.bf16.gmra.mrb[0].mxu0 %v241
  %v389 = vpop.f32.mrb[0].mxu0
  %v390 = vadd.f32 0.0, %v389
  %v391 = vpop.f32.mrb[0].mxu0
  %v392 = vpop.f32.mrb[0].mxu0
  %v393 = vadd.f32 0.0, %v392
  %v394 = vpop.f32.mrb[0].mxu0
  %395 = vmatprep.mubr.bf16.mxu0 0
  %396 = vmatmul.mubr.bf16.gmra.mrb[0].mxu0 %v244
  %v397 = vpop.f32.mrb[0].mxu0
  %v398 = vadd.f32 0.0, %v397
  %v399 = vpop.f32.mrb[0].mxu0
  %v400 = vpop.f32.mrb[0].mxu0
  %v401 = vadd.f32 0.0, %v400
  %v402 = vpop.f32.mrb[0].mxu0
  %403 = vmatprep.mubr.bf16.mxu0 0
  %404 = vmatmul.mubr.bf16.gmra.mrb[0].mxu0 %v247
  %v405 = vpop.f32.mrb[0].mxu0
  %v406 = vadd.f32 0.0, %v405
  %v407 = vpop.f32.mrb[0].mxu0
  %v408 = vpop.f32.mrb[0].mxu0
  %v409 = vadd.f32 0.0, %v408
  %v410 = vpop.f32.mrb[0].mxu0
  %411 = vmatprep.mubr.bf16.mxu0 0
  %412 = vmatmul.mubr.bf16.gmra.mrb[0].mxu0 %v250
  %v413 = vpop.f32.mrb[0].mxu0
  %v414 = vadd.f32 0.0, %v413
  %v415 = vpop.f32.mrb[0].mxu0
  %v416 = vpop.f32.mrb[0].mxu0
  %v417 = vadd.f32 0.0, %v416
  %v418 = vpop.f32.mrb[0].mxu0
  %419 = vmatprep.mubr.bf16.mxu0 0
  %420 = vmatmul.mubr.bf16.gmra.mrb[0].mxu0 %v253
  %v421 = vpop.f32.mrb[0].mxu0
  %v422 = vadd.f32 0.0, %v421
  %v423 = vpop.f32.mrb[0].mxu0
  %v424 = vpop.f32.mrb[0].mxu0
  %v425 = vadd.f32 0.0, %v424
  %v426 = vpop.f32.mrb[0].mxu0
  %427 = vmatprep.mubr.bf16.mxu0 0
  %428 = vmatmul.mubr.bf16.gmra.mrb[0].mxu0 %v256
  %v429 = vpop.f32.mrb[0].mxu0
  %v430 = vadd.f32 0.0, %v429
  %v431 = vpop.f32.mrb[0].mxu0
  %v432 = vpop.f32.mrb[0].mxu0
  %v433 = vadd.f32 0.0, %v432
  %v434 = vpop.f32.mrb[0].mxu0
  %435 = vmatprep.mubr.bf16.mxu0 0
  %436 = vmatmul.mubr.bf16.gmra.mrb[0].mxu0 %v259
  %v437 = vpop.f32.mrb[0].mxu0
  %v438 = vadd.f32 0.0, %v437
  %v439 = vpop.f32.mrb[0].mxu0
  %v440 = vpop.f32.mrb[0].mxu0
  %v441 = vadd.f32 0.0, %v440
  %v442 = vpop.f32.mrb[0].mxu0
  %443 = vmatprep.mubr.bf16.mxu0 0
  %444 = vmatmul.mubr.bf16.gmra.mrb[0].mxu0 %v262
  %v445 = vpop.f32.mrb[0].mxu0
  %v446 = vadd.f32 0.0, %v445
  %v447 = vpop.f32.mrb[0].mxu0
  %v448 = vpop.f32.mrb[0].mxu0
  %v449 = vadd.f32 0.0, %v448
  %v450 = vpop.f32.mrb[0].mxu0
  %451 = vmatprep.mubr.bf16.mxu0 0
  %452 = vmatmul.mubr.bf16.gmra.mrb[0].mxu0 %v265
  %v453 = vpop.f32.mrb[0].mxu0
  %v454 = vadd.f32 0.0, %v453
  %v455 = vpop.f32.mrb[0].mxu0
  %v456 = vpop.f32.mrb[0].mxu0
  %v457 = vadd.f32 0.0, %v456
  %v458 = vpop.f32.mrb[0].mxu0
  %459 = vmatprep.mubr.bf16.mxu0 0
  %460 = vmatmul.mubr.bf16.gmra.mrb[0].mxu0 %v268
  %v461 = vpop.f32.mrb[0].mxu0
  %v462 = vadd.f32 0.0, %v461
  %v463 = vpop.f32.mrb[0].mxu0
  %v464 = vpop.f32.mrb[0].mxu0
  %v465 = vadd.f32 0.0, %v464
  %v466 = vpop.f32.mrb[0].mxu0
  %467 = vmatprep.mubr.bf16.mxu0 0
  %468 = vmatmul.mubr.bf16.gmra.mrb[0].mxu0 %v271
  %v469 = vpop.f32.mrb[0].mxu0
  %v470 = vadd.f32 0.0, %v469
  %v471 = vpop.f32.mrb[0].mxu0
  %v472 = vpop.f32.mrb[0].mxu0
  %v473 = vadd.f32 0.0, %v472
  %v474 = vpop.f32.mrb[0].mxu0
  %475 = vmatprep.mubr.bf16.mxu0 0
  %476 = vmatmul.mubr.bf16.gmra.mrb[0].mxu0 %v274
  %v477 = vpop.f32.mrb[0].mxu0
  %v478 = vadd.f32 0.0, %v477
  %v479 = vpop.f32.mrb[0].mxu0
  %v480 = vpop.f32.mrb[0].mxu0
  %v481 = vadd.f32 0.0, %v480
  %v482 = vpop.f32.mrb[0].mxu0
  %483 = vmatprep.mubr.bf16.mxu0 0
  %484 = vmatmul.mubr.bf16.gmra.mrb[0].mxu0 %v277
  %v485 = vpop.f32.mrb[0].mxu0
  %v486 = vadd.f32 0.0, %v485
  %v487 = vpop.f32.mrb[0].mxu0
  %v488 = vpop.f32.mrb[0].mxu0
  %v489 = vadd.f32 0.0, %v488
  %v490 = vpop.f32.mrb[0].mxu0
  %491 = vmatprep.mubr.bf16.mxu0 0
  %492 = vmatmul.mubr.bf16.gmra.mrb[0].mxu0 %v280
  %v493 = vpop.f32.mrb[0].mxu0
  %v494 = vadd.f32 0.0, %v493
  %v495 = vpop.f32.mrb[0].mxu0
  %v496 = vpop.f32.mrb[0].mxu0
  %v497 = vadd.f32 0.0, %v496
  %v498 = vpop.f32.mrb[0].mxu0
  %499 = vmatprep.mubr.bf16.mxu0 0
  %500 = vmatmul.mubr.bf16.gmra.mrb[0].mxu0 %v283
  %v501 = vpop.f32.mrb[0].mxu0
  %v502 = vadd.f32 0.0, %v501
  %v503 = vpop.f32.mrb[0].mxu0
  %v504 = vpop.f32.mrb[0].mxu0
  %v505 = vadd.f32 0.0, %v504
  %v506 = vpop.f32.mrb[0].mxu0
  %507 = vmatprep.mubr.bf16.mxu0 0
  %508 = vmatmul.mubr.bf16.gmra.mrb[0].mxu0 %v286
  %v509 = vpop.f32.mrb[0].mxu0
  %v510 = vadd.f32 0.0, %v509
  %v511 = vpop.f32.mrb[0].mxu0
  %v512 = vpop.f32.mrb[0].mxu0
  %v513 = vadd.f32 0.0, %v512
  %v514 = vpop.f32.mrb[0].mxu0
  %515 = vmatprep.mubr.bf16.mxu0 0
  %516 = vmatmul.mubr.bf16.gmra.mrb[0].mxu0 %v289
  %v517 = vpop.f32.mrb[0].mxu0
  %v518 = vadd.f32 0.0, %v517
  %v519 = vpop.f32.mrb[0].mxu0
  %v520 = vpop.f32.mrb[0].mxu0
  %v521 = vadd.f32 0.0, %v520
  %v522 = vpop.f32.mrb[0].mxu0
  %523 = vdwg.mxu0
  %v524 = vld [vmem:[%s1] sm:$0xf]
  %v525 = vld [vmem:[%s1 + $0x4] sm:$0xf]
  %v526 = vld [vmem:[%s1 + $0x8] sm:$0xf]
  %v527 = vld [vmem:[%s1 + $0xc] sm:$0xf]
  %v528 = vld [vmem:[%s1 + $0x10] sm:$0xf]
  %v529 = vld [vmem:[%s1 + $0x14] sm:$0xf]
  %v530 = vld [vmem:[%s1 + $0x18] sm:$0xf]
  %v531 = vld [vmem:[%s1 + $0x1c] sm:$0xf]
  %v532 = vld [vmem:[%s1 + $0x20] sm:$0xf]
  %v533 = vld [vmem:[%s1 + $0x24] sm:$0xf]
  %v534 = vld [vmem:[%s1 + $0x28] sm:$0xf]
  %v535 = vld [vmem:[%s1 + $0x2c] sm:$0xf]
  %v536 = vld [vmem:[%s1 + $0x30] sm:$0xf]
  %v537 = vld [vmem:[%s1 + $0x34] sm:$0xf]
  %v538 = vld [vmem:[%s1 + $0x38] sm:$0xf]
  %v539 = vld [vmem:[%s1 + $0x3c] sm:$0xf]
  %v540 = vld [vmem:[%s1 + $0x40] sm:$0xf]
  %v541 = vld [vmem:[%s1 + $0x44] sm:$0xf]
  %v542 = vld [vmem:[%s1 + $0x48] sm:$0xf]
  %v543 = vld [vmem:[%s1 + $0x4c] sm:$0xf]
  %v544 = vld [vmem:[%s1 + $0x50] sm:$0xf]
  %v545 = vld [vmem:[%s1 + $0x54] sm:$0xf]
  %v546 = vld [vmem:[%s1 + $0x58] sm:$0xf]
  %v547 = vld [vmem:[%s1 + $0x5c] sm:$0xf]
  %v548 = vld [vmem:[%s1 + $0x60] sm:$0xf]
  %v549 = vld [vmem:[%s1 + $0x64] sm:$0xf]
  %v550 = vld [vmem:[%s1 + $0x68] sm:$0xf]
  %v551 = vld [vmem:[%s1 + $0x6c] sm:$0xf]
  %v552 = vld [vmem:[%s1 + $0x70] sm:$0xf]
  %v553 = vld [vmem:[%s1 + $0x74] sm:$0xf]
  %v554 = vld [vmem:[%s1 + $0x78] sm:$0xf]
  %v555 = vld [vmem:[%s1 + $0x7c] sm:$0xf]
  %v556 = vld [vmem:[%s1 + $0x80] sm:$0xf]
  %v557 = vld [vmem:[%s1 + $0x84] sm:$0xf]
  %v558 = vld [vmem:[%s1 + $0x88] sm:$0xf]
  %v559 = vld [vmem:[%s1 + $0x8c] sm:$0xf]
  %v560 = vld [vmem:[%s1 + $0x90] sm:$0xf]
  %v561 = vld [vmem:[%s1 + $0x94] sm:$0xf]
  %v562 = vld [vmem:[%s1 + $0x98] sm:$0xf]
  %v563 = vld [vmem:[%s1 + $0x9c] sm:$0xf]
  %v564 = vld [vmem:[%s1 + $0xa0] sm:$0xf]
  %v565 = vld [vmem:[%s1 + $0xa4] sm:$0xf]
  %v566 = vld [vmem:[%s1 + $0xa8] sm:$0xf]
  %v567 = vld [vmem:[%s1 + $0xac] sm:$0xf]
  %v568 = vld [vmem:[%s1 + $0xb0] sm:$0xf]
  %v569 = vld [vmem:[%s1 + $0xb4] sm:$0xf]
  %v570 = vld [vmem:[%s1 + $0xb8] sm:$0xf]
  %v571 = vld [vmem:[%s1 + $0xbc] sm:$0xf]
  %v572 = vld [vmem:[%s1 + $0xc0] sm:$0xf]
  %v573 = vld [vmem:[%s1 + $0xc4] sm:$0xf]
  %v624 = vunpack.c.l.b16 %v524
  %v625 = vunpack.c.l.b16 %v525
  %v626 = vunpack.c.l.b16 %v526
  %v627 = vunpack.c.l.b16 %v527
  %v628 = vunpack.c.l.b16 %v528
  %v629 = vunpack.c.l.b16 %v529
  %v630 = vunpack.c.l.b16 %v530
  %v631 = vunpack.c.l.b16 %v531
  %v632 = vunpack.c.l.b16 %v532
  %v633 = vunpack.c.l.b16 %v533
  %v634 = vunpack.c.l.b16 %v534
  %v635 = vunpack.c.l.b16 %v535
  %v636 = vunpack.c.l.b16 %v536
  %v637 = vunpack.c.l.b16 %v537
  %v638 = vunpack.c.l.b16 %v538
  %v639 = vunpack.c.l.b16 %v539
  %v640 = vunpack.c.l.b16 %v540
  %v641 = vunpack.c.l.b16 %v541
  %v642 = vunpack.c.l.b16 %v542
  %v643 = vunpack.c.l.b16 %v543
  %v644 = vunpack.c.l.b16 %v544
  %v645 = vunpack.c.l.b16 %v545
  %v646 = vunpack.c.l.b16 %v546
  %v647 = vunpack.c.l.b16 %v547
  %v648 = vunpack.c.l.b16 %v548
  %v649 = vunpack.c.l.b16 %v549
  %v650 = vunpack.c.l.b16 %v550
  %v651 = vunpack.c.l.b16 %v551
  %v652 = vunpack.c.l.b16 %v552
  %v653 = vunpack.c.l.b16 %v553
  %v654 = vunpack.c.l.b16 %v554
  %v655 = vunpack.c.l.b16 %v555
  %v656 = vunpack.c.l.b16 %v556
  %v657 = vunpack.c.l.b16 %v557
  %v658 = vunpack.c.l.b16 %v558
  %v659 = vunpack.c.l.b16 %v559
  %v660 = vunpack.c.l.b16 %v560
  %v661 = vunpack.c.l.b16 %v561
  %v662 = vunpack.c.l.b16 %v562
  %v663 = vunpack.c.l.b16 %v563
  %v664 = vunpack.c.l.b16 %v564
  %v665 = vunpack.c.l.b16 %v565
  %v666 = vunpack.c.l.b16 %v566
  %v667 = vunpack.c.l.b16 %v567
  %v668 = vunpack.c.l.b16 %v568
  %v669 = vunpack.c.l.b16 %v569
  %v670 = vunpack.c.l.b16 %v570
  %v671 = vunpack.c.l.b16 %v571
  %v672 = vunpack.c.l.b16 %v572
  %v673 = vunpack.c.l.b16 %v573
  %v674 = vpack.c.b16 %v625, %v624
  %v675 = vpack.c.b16 %v627, %v626
  %v676 = vpack.c.b16 %v629, %v628
  %v677 = vpack.c.b16 %v631, %v630
  %v678 = vpack.c.b16 %v633, %v632
  %v679 = vpack.c.b16 %v635, %v634
  %v680 = vpack.c.b16 %v637, %v636
  %v681 = vpack.c.b16 %v639, %v638
  %v682 = vpack.c.b16 %v641, %v640
  %v683 = vpack.c.b16 %v643, %v642
  %v684 = vpack.c.b16 %v645, %v644
  %v685 = vpack.c.b16 %v647, %v646
  %v686 = vpack.c.b16 %v649, %v648
  %v687 = vpack.c.b16 %v651, %v650
  %v688 = vpack.c.b16 %v653, %v652
  %v689 = vpack.c.b16 %v655, %v654
  %v690 = vpack.c.b16 %v657, %v656
  %v691 = vpack.c.b16 %v659, %v658
  %v692 = vpack.c.b16 %v661, %v660
  %v693 = vpack.c.b16 %v663, %v662
  %v694 = vpack.c.b16 %v665, %v664
  %v695 = vpack.c.b16 %v667, %v666
  %v696 = vpack.c.b16 %v669, %v668
  %v697 = vpack.c.b16 %v671, %v670
  %v698 = vpack.c.b16 %v673, %v672
  %v700 = vsel %vm215, %v674, 0
  %v703 = vsel %vm215, %v675, 0
  %v706 = vsel %vm215, %v676, 0
  %v709 = vsel %vm215, %v677, 0
  %v712 = vsel %vm215, %v678, 0
  %v715 = vsel %vm215, %v679, 0
  %v718 = vsel %vm215, %v680, 0
  %v721 = vsel %vm215, %v681, 0
  %v724 = vsel %vm215, %v682, 0
  %v727 = vsel %vm215, %v683, 0
  %v730 = vsel %vm215, %v684, 0
  %v733 = vsel %vm215, %v685, 0
  %v736 = vsel %vm215, %v686, 0
  %v739 = vsel %vm215, %v687, 0
  %v742 = vsel %vm215, %v688, 0
  %v745 = vsel %vm215, %v689, 0
  %v748 = vsel %vm215, %v690, 0
  %v751 = vsel %vm215, %v691, 0
  %v754 = vsel %vm215, %v692, 0
  %v757 = vsel %vm215, %v693, 0
  %v760 = vsel %vm215, %v694, 0
  %v763 = vsel %vm215, %v695, 0
  %v766 = vsel %vm215, %v696, 0
  %v769 = vsel %vm215, %v697, 0
  %v772 = vsel %vm215, %v698, 0
  %774 = vmatprep.subr.bf16.mxu0 0
  %775 = vmatpush1.bf16.msra.mxu0 %v211
  %776 = vmatprep.subr.bf16.mxu0 0
  %777 = vmatpush1.bf16.msra.mxu0 %v212
  %778 = vmatprep.subr.bf16.mxu0 0
  %779 = vmatpush1.bf16.msra.mxu0 0
  %780 = vmatprep.subr.bf16.mxu0 0
  %781 = vmatpush1.bf16.msra.mxu0 0
  %782 = vmatprep.subr.bf16.mxu0 0
  %783 = vmatpush1.bf16.msra.mxu0 0
  %784 = vmatprep.subr.bf16.mxu0 0
  %785 = vmatpush1.bf16.msra.mxu0 0
  %786 = vmatprep.subr.bf16.mxu0 0
  %787 = vmatpush1.bf16.msra.mxu0 0
  %788 = vmatprep.subr.bf16.mxu0 0
  %789 = vmatpush1.bf16.msra.mxu0 0
  %790 = vmatprep.subr.bf16.mxu0 0
  %791 = vmatpush1.bf16.msra.mxu0 0
  %792 = vmatprep.subr.bf16.mxu0 0
  %793 = vmatpush1.bf16.msra.mxu0 0
  %794 = vmatprep.subr.bf16.mxu0 0
  %795 = vmatpush1.bf16.msra.mxu0 0
  %796 = vmatprep.subr.bf16.mxu0 0
  %797 = vmatpush1.bf16.msra.mxu0 0
  %798 = vmatprep.subr.bf16.mxu0 0
  %799 = vmatpush1.bf16.msra.mxu0 0
  %800 = vmatprep.subr.bf16.mxu0 0
  %801 = vmatpush1.bf16.msra.mxu0 0
  %802 = vmatprep.subr.bf16.mxu0 0
  %803 = vmatpush1.bf16.msra.mxu0 0
  %804 = vmatprep.subr.bf16.mxu0 0
  %805 = vmatpush1.bf16.msra.mxu0 0
  %806 = vmatprep.mubr.bf16.mxu0 0
  %807 = vmatmul.mubr.bf16.gmra.mrb[0].mxu0 %v700
  %v808 = vpop.f32.mrb[0].mxu0
  %v809 = vadd.f32 0.0, %v808
  %v810 = vpop.f32.mrb[0].mxu0
  %v811 = vpop.f32.mrb[0].mxu0
  %v812 = vadd.f32 0.0, %v811
  %v813 = vpop.f32.mrb[0].mxu0
  %814 = vmatprep.mubr.bf16.mxu0 0
  %815 = vmatmul.mubr.bf16.gmra.mrb[0].mxu0 %v703
  %v816 = vpop.f32.mrb[0].mxu0
  %v817 = vadd.f32 0.0, %v816
  %v818 = vpop.f32.mrb[0].mxu0
  %v819 = vpop.f32.mrb[0].mxu0
  %v820 = vadd.f32 0.0, %v819
  %v821 = vpop.f32.mrb[0].mxu0
  %822 = vmatprep.mubr.bf16.mxu0 0
  %823 = vmatmul.mubr.bf16.gmra.mrb[0].mxu0 %v706
  %v824 = vpop.f32.mrb[0].mxu0
  %v825 = vadd.f32 0.0, %v824
  %v826 = vpop.f32.mrb[0].mxu0
  %v827 = vpop.f32.mrb[0].mxu0
  %v828 = vadd.f32 0.0, %v827
  %v829 = vpop.f32.mrb[0].mxu0
  %830 = vmatprep.mubr.bf16.mxu0 0
  %831 = vmatmul.mubr.bf16.gmra.mrb[0].mxu0 %v709
  %v832 = vpop.f32.mrb[0].mxu0
  %v833 = vadd.f32 0.0, %v832
  %v834 = vpop.f32.mrb[0].mxu0
  %v835 = vpop.f32.mrb[0].mxu0
  %v836 = vadd.f32 0.0, %v835
  %v837 = vpop.f32.mrb[0].mxu0
  %838 = vmatprep.mubr.bf16.mxu0 0
  %839 = vmatmul.mubr.bf16.gmra.mrb[0].mxu0 %v712
  %v840 = vpop.f32.mrb[0].mxu0
  %v841 = vadd.f32 0.0, %v840
  %v842 = vpop.f32.mrb[0].mxu0
  %v843 = vpop.f32.mrb[0].mxu0
  %v844 = vadd.f32 0.0, %v843
  %v845 = vpop.f32.mrb[0].mxu0
  %846 = vmatprep.mubr.bf16.mxu0 0
  %847 = vmatmul.mubr.bf16.gmra.mrb[0].mxu0 %v715
  %v848 = vpop.f32.mrb[0].mxu0
  %v849 = vadd.f32 0.0, %v848
  %v850 = vpop.f32.mrb[0].mxu0
  %v851 = vpop.f32.mrb[0].mxu0
  %v852 = vadd.f32 0.0, %v851
  %v853 = vpop.f32.mrb[0].mxu0
  %854 = vmatprep.mubr.bf16.mxu0 0
  %855 = vmatmul.mubr.bf16.gmra.mrb[0].mxu0 %v718
  %v856 = vpop.f32.mrb[0].mxu0
  %v857 = vadd.f32 0.0, %v856
  %v858 = vpop.f32.mrb[0].mxu0
  %v859 = vpop.f32.mrb[0].mxu0
  %v860 = vadd.f32 0.0, %v859
  %v861 = vpop.f32.mrb[0].mxu0
  %862 = vmatprep.mubr.bf16.mxu0 0
  %863 = vmatmul.mubr.bf16.gmra.mrb[0].mxu0 %v721
  %v864 = vpop.f32.mrb[0].mxu0
  %v865 = vadd.f32 0.0, %v864
  %v866 = vpop.f32.mrb[0].mxu0
  %v867 = vpop.f32.mrb[0].mxu0
  %v868 = vadd.f32 0.0, %v867
  %v869 = vpop.f32.mrb[0].mxu0
  %870 = vmatprep.mubr.bf16.mxu0 0
  %871 = vmatmul.mubr.bf16.gmra.mrb[0].mxu0 %v724
  %v872 = vpop.f32.mrb[0].mxu0
  %v873 = vadd.f32 0.0, %v872
  %v874 = vpop.f32.mrb[0].mxu0
  %v875 = vpop.f32.mrb[0].mxu0
  %v876 = vadd.f32 0.0, %v875
  %v877 = vpop.f32.mrb[0].mxu0
  %878 = vmatprep.mubr.bf16.mxu0 0
  %879 = vmatmul.mubr.bf16.gmra.mrb[0].mxu0 %v727
  %v880 = vpop.f32.mrb[0].mxu0
  %v881 = vadd.f32 0.0, %v880
  %v882 = vpop.f32.mrb[0].mxu0
  %v883 = vpop.f32.mrb[0].mxu0
  %v884 = vadd.f32 0.0, %v883
  %v885 = vpop.f32.mrb[0].mxu0
  %886 = vmatprep.mubr.bf16.mxu0 0
  %887 = vmatmul.mubr.bf16.gmra.mrb[0].mxu0 %v730
  %v888 = vpop.f32.mrb[0].mxu0
  %v889 = vadd.f32 0.0, %v888
  %v890 = vpop.f32.mrb[0].mxu0
  %v891 = vpop.f32.mrb[0].mxu0
  %v892 = vadd.f32 0.0, %v891
  %v893 = vpop.f32.mrb[0].mxu0
  %894 = vmatprep.mubr.bf16.mxu0 0
  %895 = vmatmul.mubr.bf16.gmra.mrb[0].mxu0 %v733
  %v896 = vpop.f32.mrb[0].mxu0
  %v897 = vadd.f32 0.0, %v896
  %v898 = vpop.f32.mrb[0].mxu0
  %v899 = vpop.f32.mrb[0].mxu0
  %v900 = vadd.f32 0.0, %v899
  %v901 = vpop.f32.mrb[0].mxu0
  %902 = vmatprep.mubr.bf16.mxu0 0
  %903 = vmatmul.mubr.bf16.gmra.mrb[0].mxu0 %v736
  %v904 = vpop.f32.mrb[0].mxu0
  %v905 = vadd.f32 0.0, %v904
  %v906 = vpop.f32.mrb[0].mxu0
  %v907 = vpop.f32.mrb[0].mxu0
  %v908 = vadd.f32 0.0, %v907
  %v909 = vpop.f32.mrb[0].mxu0
  %910 = vmatprep.mubr.bf16.mxu0 0
  %911 = vmatmul.mubr.bf16.gmra.mrb[0].mxu0 %v739
  %v912 = vpop.f32.mrb[0].mxu0
  %v913 = vadd.f32 0.0, %v912
  %v914 = vpop.f32.mrb[0].mxu0
  %v915 = vpop.f32.mrb[0].mxu0
  %v916 = vadd.f32 0.0, %v915
  %v917 = vpop.f32.mrb[0].mxu0
  %918 = vmatprep.mubr.bf16.mxu0 0
  %919 = vmatmul.mubr.bf16.gmra.mrb[0].mxu0 %v742
  %v920 = vpop.f32.mrb[0].mxu0
  %v921 = vadd.f32 0.0, %v920
  %v922 = vpop.f32.mrb[0].mxu0
  %v923 = vpop.f32.mrb[0].mxu0
  %v924 = vadd.f32 0.0, %v923
  %v925 = vpop.f32.mrb[0].mxu0
  %926 = vmatprep.mubr.bf16.mxu0 0
  %927 = vmatmul.mubr.bf16.gmra.mrb[0].mxu0 %v745
  %v928 = vpop.f32.mrb[0].mxu0
  %v929 = vadd.f32 0.0, %v928
  %v930 = vpop.f32.mrb[0].mxu0
  %v931 = vpop.f32.mrb[0].mxu0
  %v932 = vadd.f32 0.0, %v931
  %v933 = vpop.f32.mrb[0].mxu0
  %934 = vmatprep.mubr.bf16.mxu0 0
  %935 = vmatmul.mubr.bf16.gmra.mrb[0].mxu0 %v748
  %v936 = vpop.f32.mrb[0].mxu0
  %v937 = vadd.f32 0.0, %v936
  %v938 = vpop.f32.mrb[0].mxu0
  %v939 = vpop.f32.mrb[0].mxu0
  %v940 = vadd.f32 0.0, %v939
  %v941 = vpop.f32.mrb[0].mxu0
  %942 = vmatprep.mubr.bf16.mxu0 0
  %943 = vmatmul.mubr.bf16.gmra.mrb[0].mxu0 %v751
  %v944 = vpop.f32.mrb[0].mxu0
  %v945 = vadd.f32 0.0, %v944
  %v946 = vpop.f32.mrb[0].mxu0
  %v947 = vpop.f32.mrb[0].mxu0
  %v948 = vadd.f32 0.0, %v947
  %v949 = vpop.f32.mrb[0].mxu0
  %950 = vmatprep.mubr.bf16.mxu0 0
  %951 = vmatmul.mubr.bf16.gmra.mrb[0].mxu0 %v754
  %v952 = vpop.f32.mrb[0].mxu0
  %v953 = vadd.f32 0.0, %v952
  %v954 = vpop.f32.mrb[0].mxu0
  %v955 = vpop.f32.mrb[0].mxu0
  %v956 = vadd.f32 0.0, %v955
  %v957 = vpop.f32.mrb[0].mxu0
  %958 = vmatprep.mubr.bf16.mxu0 0
  %959 = vmatmul.mubr.bf16.gmra.mrb[0].mxu0 %v757
  %v960 = vpop.f32.mrb[0].mxu0
  %v961 = vadd.f32 0.0, %v960
  %v962 = vpop.f32.mrb[0].mxu0
  %v963 = vpop.f32.mrb[0].mxu0
  %v964 = vadd.f32 0.0, %v963
  %v965 = vpop.f32.mrb[0].mxu0
  %966 = vmatprep.mubr.bf16.mxu0 0
  %967 = vmatmul.mubr.bf16.gmra.mrb[0].mxu0 %v760
  %v968 = vpop.f32.mrb[0].mxu0
  %v969 = vadd.f32 0.0, %v968
  %v970 = vpop.f32.mrb[0].mxu0
  %v971 = vpop.f32.mrb[0].mxu0
  %v972 = vadd.f32 0.0, %v971
  %v973 = vpop.f32.mrb[0].mxu0
  %974 = vmatprep.mubr.bf16.mxu0 0
  %975 = vmatmul.mubr.bf16.gmra.mrb[0].mxu0 %v763
  %v976 = vpop.f32.mrb[0].mxu0
  %v977 = vadd.f32 0.0, %v976
  %v978 = vpop.f32.mrb[0].mxu0
  %v979 = vpop.f32.mrb[0].mxu0
  %v980 = vadd.f32 0.0, %v979
  %v981 = vpop.f32.mrb[0].mxu0
  %982 = vmatprep.mubr.bf16.mxu0 0
  %983 = vmatmul.mubr.bf16.gmra.mrb[0].mxu0 %v766
  %v984 = vpop.f32.mrb[0].mxu0
  %v985 = vadd.f32 0.0, %v984
  %v986 = vpop.f32.mrb[0].mxu0
  %v987 = vpop.f32.mrb[0].mxu0
  %v988 = vadd.f32 0.0, %v987
  %v989 = vpop.f32.mrb[0].mxu0
  %990 = vmatprep.mubr.bf16.mxu0 0
  %991 = vmatmul.mubr.bf16.gmra.mrb[0].mxu0 %v769
  %v992 = vpop.f32.mrb[0].mxu0
  %v993 = vadd.f32 0.0, %v992
  %v994 = vpop.f32.mrb[0].mxu0
  %v995 = vpop.f32.mrb[0].mxu0
  %v996 = vadd.f32 0.0, %v995
  %v997 = vpop.f32.mrb[0].mxu0
  %998 = vmatprep.mubr.bf16.mxu0 0
  %999 = vmatmul.mubr.bf16.gmra.mrb[0].mxu0 %v772
  %v1000 = vpop.f32.mrb[0].mxu0
  %v1001 = vadd.f32 0.0, %v1000
  %v1002 = vpop.f32.mrb[0].mxu0
  %v1003 = vpop.f32.mrb[0].mxu0
  %v1004 = vadd.f32 0.0, %v1003
  %v1005 = vpop.f32.mrb[0].mxu0
  %1006 = vdwg.mxu0
  %v1007 = vmax.f32 %v326, %v809
  %v1008 = vmax.f32 %v329, %v812
  %v1009 = vmax.f32 %v334, %v817
  %v1010 = vmax.f32 %v337, %v820
  %v1011 = vmax.f32 %v342, %v825
  %v1012 = vmax.f32 %v345, %v828
  %v1013 = vmax.f32 %v350, %v833
  %v1014 = vmax.f32 %v353, %v836
  %v1015 = vmax.f32 %v358, %v841
  %v1016 = vmax.f32 %v361, %v844
  %v1017 = vmax.f32 %v366, %v849
  %v1018 = vmax.f32 %v369, %v852
  %v1019 = vmax.f32 %v374, %v857
  %v1020 = vmax.f32 %v377, %v860
  %v1021 = vmax.f32 %v382, %v865
  %v1022 = vmax.f32 %v385, %v868
  %v1023 = vmax.f32 %v390, %v873
  %v1024 = vmax.f32 %v393, %v876
  %v1025 = vmax.f32 %v398, %v881
  %v1026 = vmax.f32 %v401, %v884
  %v1027 = vmax.f32 %v406, %v889
  %v1028 = vmax.f32 %v409, %v892
  %v1029 = vmax.f32 %v414, %v897
  %v1030 = vmax.f32 %v417, %v900
  %v1031 = vmax.f32 %v422, %v905
  %v1032 = vmax.f32 %v425, %v908
  %v1033 = vmax.f32 %v430, %v913
  %v1034 = vmax.f32 %v433, %v916
  %v1035 = vmax.f32 %v438, %v921
  %v1036 = vmax.f32 %v441, %v924
  %v1037 = vmax.f32 %v446, %v929
  %v1038 = vmax.f32 %v449, %v932
  %v1039 = vmax.f32 %v454, %v937
  %v1040 = vmax.f32 %v457, %v940
  %v1041 = vmax.f32 %v462, %v945
  %v1042 = vmax.f32 %v465, %v948
  %v1043 = vmax.f32 %v470, %v953
  %v1044 = vmax.f32 %v473, %v956
  %v1045 = vmax.f32 %v478, %v961
  %v1046 = vmax.f32 %v481, %v964
  %v1047 = vmax.f32 %v486, %v969
  %v1048 = vmax.f32 %v489, %v972
  %v1049 = vmax.f32 %v494, %v977
  %v1050 = vmax.f32 %v497, %v980
  %v1051 = vmax.f32 %v502, %v985
  %v1052 = vmax.f32 %v505, %v988
  %v1053 = vmax.f32 %v510, %v993
  %v1054 = vmax.f32 %v513, %v996
  %v1055 = vmax.f32 %v518, %v1001
  %v1056 = vmax.f32 %v521, %v1004
  %v1057 = vld [vmem:[%s2] sm:$0xf]
  %v1058 = vld [vmem:[%s2 + $0x4] sm:$0xf]
  %v1059 = vld [vmem:[%s2 + $0x8] sm:$0xf]
  %v1060 = vld [vmem:[%s2 + $0xc] sm:$0xf]
  %v1061 = vld [vmem:[%s2 + $0x10] sm:$0xf]
  %v1062 = vld [vmem:[%s2 + $0x14] sm:$0xf]
  %v1063 = vld [vmem:[%s2 + $0x18] sm:$0xf]
  %v1064 = vld [vmem:[%s2 + $0x1c] sm:$0xf]
  %v1065 = vld [vmem:[%s2 + $0x20] sm:$0xf]
  %v1066 = vld [vmem:[%s2 + $0x24] sm:$0xf]
  %v1067 = vld [vmem:[%s2 + $0x28] sm:$0xf]
  %v1068 = vld [vmem:[%s2 + $0x2c] sm:$0xf]
  %v1069 = vld [vmem:[%s2 + $0x30] sm:$0xf]
  %v1070 = vld [vmem:[%s2 + $0x34] sm:$0xf]
  %v1071 = vld [vmem:[%s2 + $0x38] sm:$0xf]
  %v1072 = vld [vmem:[%s2 + $0x3c] sm:$0xf]
  %v1073 = vld [vmem:[%s2 + $0x40] sm:$0xf]
  %v1074 = vld [vmem:[%s2 + $0x44] sm:$0xf]
  %v1075 = vld [vmem:[%s2 + $0x48] sm:$0xf]
  %v1076 = vld [vmem:[%s2 + $0x4c] sm:$0xf]
  %v1077 = vld [vmem:[%s2 + $0x50] sm:$0xf]
  %v1078 = vld [vmem:[%s2 + $0x54] sm:$0xf]
  %v1079 = vld [vmem:[%s2 + $0x58] sm:$0xf]
  %v1080 = vld [vmem:[%s2 + $0x5c] sm:$0xf]
  %v1081 = vld [vmem:[%s2 + $0x60] sm:$0xf]
  %v1082 = vld [vmem:[%s2 + $0x64] sm:$0xf]
  %v1083 = vld [vmem:[%s2 + $0x68] sm:$0xf]
  %v1084 = vld [vmem:[%s2 + $0x6c] sm:$0xf]
  %v1085 = vld [vmem:[%s2 + $0x70] sm:$0xf]
  %v1086 = vld [vmem:[%s2 + $0x74] sm:$0xf]
  %v1087 = vld [vmem:[%s2 + $0x78] sm:$0xf]
  %v1088 = vld [vmem:[%s2 + $0x7c] sm:$0xf]
  %v1089 = vld [vmem:[%s2 + $0x80] sm:$0xf]
  %v1090 = vld [vmem:[%s2 + $0x84] sm:$0xf]
  %v1091 = vld [vmem:[%s2 + $0x88] sm:$0xf]
  %v1092 = vld [vmem:[%s2 + $0x8c] sm:$0xf]
  %v1093 = vld [vmem:[%s2 + $0x90] sm:$0xf]
  %v1094 = vld [vmem:[%s2 + $0x94] sm:$0xf]
  %v1095 = vld [vmem:[%s2 + $0x98] sm:$0xf]
  %v1096 = vld [vmem:[%s2 + $0x9c] sm:$0xf]
  %v1097 = vld [vmem:[%s2 + $0xa0] sm:$0xf]
  %v1098 = vld [vmem:[%s2 + $0xa4] sm:$0xf]
  %v1099 = vld [vmem:[%s2 + $0xa8] sm:$0xf]
  %v1100 = vld [vmem:[%s2 + $0xac] sm:$0xf]
  %v1101 = vld [vmem:[%s2 + $0xb0] sm:$0xf]
  %v1102 = vld [vmem:[%s2 + $0xb4] sm:$0xf]
  %v1103 = vld [vmem:[%s2 + $0xb8] sm:$0xf]
  %v1104 = vld [vmem:[%s2 + $0xbc] sm:$0xf]
  %v1105 = vld [vmem:[%s2 + $0xc0] sm:$0xf]
  %v1106 = vld [vmem:[%s2 + $0xc4] sm:$0xf]
  %v1157 = vunpack.c.l.b16 %v1057
  %v1158 = vunpack.c.l.b16 %v1058
  %v1159 = vunpack.c.l.b16 %v1059
  %v1160 = vunpack.c.l.b16 %v1060
  %v1161 = vunpack.c.l.b16 %v1061
  %v1162 = vunpack.c.l.b16 %v1062
  %v1163 = vunpack.c.l.b16 %v1063
  %v1164 = vunpack.c.l.b16 %v1064
  %v1165 = vunpack.c.l.b16 %v1065
  %v1166 = vunpack.c.l.b16 %v1066
  %v1167 = vunpack.c.l.b16 %v1067
  %v1168 = vunpack.c.l.b16 %v1068
  %v1169 = vunpack.c.l.b16 %v1069
  %v1170 = vunpack.c.l.b16 %v1070
  %v1171 = vunpack.c.l.b16 %v1071
  %v1172 = vunpack.c.l.b16 %v1072
  %v1173 = vunpack.c.l.b16 %v1073
  %v1174 = vunpack.c.l.b16 %v1074
  %v1175 = vunpack.c.l.b16 %v1075
  %v1176 = vunpack.c.l.b16 %v1076
  %v1177 = vunpack.c.l.b16 %v1077
  %v1178 = vunpack.c.l.b16 %v1078
  %v1179 = vunpack.c.l.b16 %v1079
  %v1180 = vunpack.c.l.b16 %v1080
  %v1181 = vunpack.c.l.b16 %v1081
  %v1182 = vunpack.c.l.b16 %v1082
  %v1183 = vunpack.c.l.b16 %v1083
  %v1184 = vunpack.c.l.b16 %v1084
  %v1185 = vunpack.c.l.b16 %v1085
  %v1186 = vunpack.c.l.b16 %v1086
  %v1187 = vunpack.c.l.b16 %v1087
  %v1188 = vunpack.c.l.b16 %v1088
  %v1189 = vunpack.c.l.b16 %v1089
  %v1190 = vunpack.c.l.b16 %v1090
  %v1191 = vunpack.c.l.b16 %v1091
  %v1192 = vunpack.c.l.b16 %v1092
  %v1193 = vunpack.c.l.b16 %v1093
  %v1194 = vunpack.c.l.b16 %v1094
  %v1195 = vunpack.c.l.b16 %v1095
  %v1196 = vunpack.c.l.b16 %v1096
  %v1197 = vunpack.c.l.b16 %v1097
  %v1198 = vunpack.c.l.b16 %v1098
  %v1199 = vunpack.c.l.b16 %v1099
  %v1200 = vunpack.c.l.b16 %v1100
  %v1201 = vunpack.c.l.b16 %v1101
  %v1202 = vunpack.c.l.b16 %v1102
  %v1203 = vunpack.c.l.b16 %v1103
  %v1204 = vunpack.c.l.b16 %v1104
  %v1205 = vunpack.c.l.b16 %v1105
  %v1206 = vunpack.c.l.b16 %v1106
  %v1207 = vpack.c.b16 %v1158, %v1157
  %v1208 = vpack.c.b16 %v1160, %v1159
  %v1209 = vpack.c.b16 %v1162, %v1161
  %v1210 = vpack.c.b16 %v1164, %v1163
  %v1211 = vpack.c.b16 %v1166, %v1165
  %v1212 = vpack.c.b16 %v1168, %v1167
  %v1213 = vpack.c.b16 %v1170, %v1169
  %v1214 = vpack.c.b16 %v1172, %v1171
  %v1215 = vpack.c.b16 %v1174, %v1173
  %v1216 = vpack.c.b16 %v1176, %v1175
  %v1217 = vpack.c.b16 %v1178, %v1177
  %v1218 = vpack.c.b16 %v1180, %v1179
  %v1219 = vpack.c.b16 %v1182, %v1181
  %v1220 = vpack.c.b16 %v1184, %v1183
  %v1221 = vpack.c.b16 %v1186, %v1185
  %v1222 = vpack.c.b16 %v1188, %v1187
  %v1223 = vpack.c.b16 %v1190, %v1189
  %v1224 = vpack.c.b16 %v1192, %v1191
  %v1225 = vpack.c.b16 %v1194, %v1193
  %v1226 = vpack.c.b16 %v1196, %v1195
  %v1227 = vpack.c.b16 %v1198, %v1197
  %v1228 = vpack.c.b16 %v1200, %v1199
  %v1229 = vpack.c.b16 %v1202, %v1201
  %v1230 = vpack.c.b16 %v1204, %v1203
  %v1231 = vpack.c.b16 %v1206, %v1205
  %v1233 = vsel %vm215, %v1207, 0
  %v1236 = vsel %vm215, %v1208, 0
  %v1239 = vsel %vm215, %v1209, 0
  %v1242 = vsel %vm215, %v1210, 0
  %v1245 = vsel %vm215, %v1211, 0
  %v1248 = vsel %vm215, %v1212, 0
  %v1251 = vsel %vm215, %v1213, 0
  %v1254 = vsel %vm215, %v1214, 0
  %v1257 = vsel %vm215, %v1215, 0
  %v1260 = vsel %vm215, %v1216, 0
  %v1263 = vsel %vm215, %v1217, 0
  %v1266 = vsel %vm215, %v1218, 0
  %v1269 = vsel %vm215, %v1219, 0
  %v1272 = vsel %vm215, %v1220, 0
  %v1275 = vsel %vm215, %v1221, 0
  %v1278 = vsel %vm215, %v1222, 0
  %v1281 = vsel %vm215, %v1223, 0
  %v1284 = vsel %vm215, %v1224, 0
  %v1287 = vsel %vm215, %v1225, 0
  %v1290 = vsel %vm215, %v1226, 0
  %v1293 = vsel %vm215, %v1227, 0
  %v1296 = vsel %vm215, %v1228, 0
  %v1299 = vsel %vm215, %v1229, 0
  %v1302 = vsel %vm215, %v1230, 0
  %v1305 = vsel %vm215, %v1231, 0
  %1307 = vmatprep.subr.bf16.mxu0 0
  %1308 = vmatpush1.bf16.msra.mxu0 %v211
  %1309 = vmatprep.subr.bf16.mxu0 0
  %1310 = vmatpush1.bf16.msra.mxu0 %v212
  %1311 = vmatprep.subr.bf16.mxu0 0
  %1312 = vmatpush1.bf16.msra.mxu0 0
  %1313 = vmatprep.subr.bf16.mxu0 0
  %1314 = vmatpush1.bf16.msra.mxu0 0
  %1315 = vmatprep.subr.bf16.mxu0 0
  %1316 = vmatpush1.bf16.msra.mxu0 0
  %1317 = vmatprep.subr.bf16.mxu0 0
  %1318 = vmatpush1.bf16.msra.mxu0 0
  %1319 = vmatprep.subr.bf16.mxu0 0
  %1320 = vmatpush1.bf16.msra.mxu0 0
  %1321 = vmatprep.subr.bf16.mxu0 0
  %1322 = vmatpush1.bf16.msra.mxu0 0
  %1323 = vmatprep.subr.bf16.mxu0 0
  %1324 = vmatpush1.bf16.msra.mxu0 0
  %1325 = vmatprep.subr.bf16.mxu0 0
  %1326 = vmatpush1.bf16.msra.mxu0 0
  %1327 = vmatprep.subr.bf16.mxu0 0
  %1328 = vmatpush1.bf16.msra.mxu0 0
  %1329 = vmatprep.subr.bf16.mxu0 0
  %1330 = vmatpush1.bf16.msra.mxu0 0
  %1331 = vmatprep.subr.bf16.mxu0 0
  %1332 = vmatpush1.bf16.msra.mxu0 0
  %1333 = vmatprep.subr.bf16.mxu0 0
  %1334 = vmatpush1.bf16.msra.mxu0 0
  %1335 = vmatprep.subr.bf16.mxu0 0
  %1336 = vmatpush1.bf16.msra.mxu0 0
  %1337 = vmatprep.subr.bf16.mxu0 0
  %1338 = vmatpush1.bf16.msra.mxu0 0
  %1339 = vmatprep.mubr.bf16.mxu0 0
  %1340 = vmatmul.mubr.bf16.gmra.mrb[0].mxu0 %v1233
  %v1341 = vpop.f32.mrb[0].mxu0
  %v1342 = vadd.f32 0.0, %v1341
  %v1343 = vpop.f32.mrb[0].mxu0
  %v1344 = vpop.f32.mrb[0].mxu0
  %v1345 = vadd.f32 0.0, %v1344
  %v1346 = vpop.f32.mrb[0].mxu0
  %1347 = vmatprep.mubr.bf16.mxu0 0
  %1348 = vmatmul.mubr.bf16.gmra.mrb[0].mxu0 %v1236
  %v1349 = vpop.f32.mrb[0].mxu0
  %v1350 = vadd.f32 0.0, %v1349
  %v1351 = vpop.f32.mrb[0].mxu0
  %v1352 = vpop.f32.mrb[0].mxu0
  %v1353 = vadd.f32 0.0, %v1352
  %v1354 = vpop.f32.mrb[0].mxu0
  %1355 = vmatprep.mubr.bf16.mxu0 0
  %1356 = vmatmul.mubr.bf16.gmra.mrb[0].mxu0 %v1239
  %v1357 = vpop.f32.mrb[0].mxu0
  %v1358 = vadd.f32 0.0, %v1357
  %v1359 = vpop.f32.mrb[0].mxu0
  %v1360 = vpop.f32.mrb[0].mxu0
  %v1361 = vadd.f32 0.0, %v1360
  %v1362 = vpop.f32.mrb[0].mxu0
  %1363 = vmatprep.mubr.bf16.mxu0 0
  %1364 = vmatmul.mubr.bf16.gmra.mrb[0].mxu0 %v1242
  %v1365 = vpop.f32.mrb[0].mxu0
  %v1366 = vadd.f32 0.0, %v1365
  %v1367 = vpop.f32.mrb[0].mxu0
  %v1368 = vpop.f32.mrb[0].mxu0
  %v1369 = vadd.f32 0.0, %v1368
  %v1370 = vpop.f32.mrb[0].mxu0
  %1371 = vmatprep.mubr.bf16.mxu0 0
  %1372 = vmatmul.mubr.bf16.gmra.mrb[0].mxu0 %v1245
  %v1373 = vpop.f32.mrb[0].mxu0
  %v1374 = vadd.f32 0.0, %v1373
  %v1375 = vpop.f32.mrb[0].mxu0
  %v1376 = vpop.f32.mrb[0].mxu0
  %v1377 = vadd.f32 0.0, %v1376
  %v1378 = vpop.f32.mrb[0].mxu0
  %1379 = vmatprep.mubr.bf16.mxu0 0
  %1380 = vmatmul.mubr.bf16.gmra.mrb[0].mxu0 %v1248
  %v1381 = vpop.f32.mrb[0].mxu0
  %v1382 = vadd.f32 0.0, %v1381
  %v1383 = vpop.f32.mrb[0].mxu0
  %v1384 = vpop.f32.mrb[0].mxu0
  %v1385 = vadd.f32 0.0, %v1384
  %v1386 = vpop.f32.mrb[0].mxu0
  %1387 = vmatprep.mubr.bf16.mxu0 0
  %1388 = vmatmul.mubr.bf16.gmra.mrb[0].mxu0 %v1251
  %v1389 = vpop.f32.mrb[0].mxu0
  %v1390 = vadd.f32 0.0, %v1389
  %v1391 = vpop.f32.mrb[0].mxu0
  %v1392 = vpop.f32.mrb[0].mxu0
  %v1393 = vadd.f32 0.0, %v1392
  %v1394 = vpop.f32.mrb[0].mxu0
  %1395 = vmatprep.mubr.bf16.mxu0 0
  %1396 = vmatmul.mubr.bf16.gmra.mrb[0].mxu0 %v1254
  %v1397 = vpop.f32.mrb[0].mxu0
  %v1398 = vadd.f32 0.0, %v1397
  %v1399 = vpop.f32.mrb[0].mxu0
  %v1400 = vpop.f32.mrb[0].mxu0
  %v1401 = vadd.f32 0.0, %v1400
  %v1402 = vpop.f32.mrb[0].mxu0
  %1403 = vmatprep.mubr.bf16.mxu0 0
  %1404 = vmatmul.mubr.bf16.gmra.mrb[0].mxu0 %v1257
  %v1405 = vpop.f32.mrb[0].mxu0
  %v1406 = vadd.f32 0.0, %v1405
  %v1407 = vpop.f32.mrb[0].mxu0
  %v1408 = vpop.f32.mrb[0].mxu0
  %v1409 = vadd.f32 0.0, %v1408
  %v1410 = vpop.f32.mrb[0].mxu0
  %1411 = vmatprep.mubr.bf16.mxu0 0
  %1412 = vmatmul.mubr.bf16.gmra.mrb[0].mxu0 %v1260
  %v1413 = vpop.f32.mrb[0].mxu0
  %v1414 = vadd.f32 0.0, %v1413
  %v1415 = vpop.f32.mrb[0].mxu0
  %v1416 = vpop.f32.mrb[0].mxu0
  %v1417 = vadd.f32 0.0, %v1416
  %v1418 = vpop.f32.mrb[0].mxu0
  %1419 = vmatprep.mubr.bf16.mxu0 0
  %1420 = vmatmul.mubr.bf16.gmra.mrb[0].mxu0 %v1263
  %v1421 = vpop.f32.mrb[0].mxu0
  %v1422 = vadd.f32 0.0, %v1421
  %v1423 = vpop.f32.mrb[0].mxu0
  %v1424 = vpop.f32.mrb[0].mxu0
  %v1425 = vadd.f32 0.0, %v1424
  %v1426 = vpop.f32.mrb[0].mxu0
  %1427 = vmatprep.mubr.bf16.mxu0 0
  %1428 = vmatmul.mubr.bf16.gmra.mrb[0].mxu0 %v1266
  %v1429 = vpop.f32.mrb[0].mxu0
  %v1430 = vadd.f32 0.0, %v1429
  %v1431 = vpop.f32.mrb[0].mxu0
  %v1432 = vpop.f32.mrb[0].mxu0
  %v1433 = vadd.f32 0.0, %v1432
  %v1434 = vpop.f32.mrb[0].mxu0
  %1435 = vmatprep.mubr.bf16.mxu0 0
  %1436 = vmatmul.mubr.bf16.gmra.mrb[0].mxu0 %v1269
  %v1437 = vpop.f32.mrb[0].mxu0
  %v1438 = vadd.f32 0.0, %v1437
  %v1439 = vpop.f32.mrb[0].mxu0
  %v1440 = vpop.f32.mrb[0].mxu0
  %v1441 = vadd.f32 0.0, %v1440
  %v1442 = vpop.f32.mrb[0].mxu0
  %1443 = vmatprep.mubr.bf16.mxu0 0
  %1444 = vmatmul.mubr.bf16.gmra.mrb[0].mxu0 %v1272
  %v1445 = vpop.f32.mrb[0].mxu0
  %v1446 = vadd.f32 0.0, %v1445
  %v1447 = vpop.f32.mrb[0].mxu0
  %v1448 = vpop.f32.mrb[0].mxu0
  %v1449 = vadd.f32 0.0, %v1448
  %v1450 = vpop.f32.mrb[0].mxu0
  %1451 = vmatprep.mubr.bf16.mxu0 0
  %1452 = vmatmul.mubr.bf16.gmra.mrb[0].mxu0 %v1275
  %v1453 = vpop.f32.mrb[0].mxu0
  %v1454 = vadd.f32 0.0, %v1453
  %v1455 = vpop.f32.mrb[0].mxu0
  %v1456 = vpop.f32.mrb[0].mxu0
  %v1457 = vadd.f32 0.0, %v1456
  %v1458 = vpop.f32.mrb[0].mxu0
  %1459 = vmatprep.mubr.bf16.mxu0 0
  %1460 = vmatmul.mubr.bf16.gmra.mrb[0].mxu0 %v1278
  %v1461 = vpop.f32.mrb[0].mxu0
  %v1462 = vadd.f32 0.0, %v1461
  %v1463 = vpop.f32.mrb[0].mxu0
  %v1464 = vpop.f32.mrb[0].mxu0
  %v1465 = vadd.f32 0.0, %v1464
  %v1466 = vpop.f32.mrb[0].mxu0
  %1467 = vmatprep.mubr.bf16.mxu0 0
  %1468 = vmatmul.mubr.bf16.gmra.mrb[0].mxu0 %v1281
  %v1469 = vpop.f32.mrb[0].mxu0
  %v1470 = vadd.f32 0.0, %v1469
  %v1471 = vpop.f32.mrb[0].mxu0
  %v1472 = vpop.f32.mrb[0].mxu0
  %v1473 = vadd.f32 0.0, %v1472
  %v1474 = vpop.f32.mrb[0].mxu0
  %1475 = vmatprep.mubr.bf16.mxu0 0
  %1476 = vmatmul.mubr.bf16.gmra.mrb[0].mxu0 %v1284
  %v1477 = vpop.f32.mrb[0].mxu0
  %v1478 = vadd.f32 0.0, %v1477
  %v1479 = vpop.f32.mrb[0].mxu0
  %v1480 = vpop.f32.mrb[0].mxu0
  %v1481 = vadd.f32 0.0, %v1480
  %v1482 = vpop.f32.mrb[0].mxu0
  %1483 = vmatprep.mubr.bf16.mxu0 0
  %1484 = vmatmul.mubr.bf16.gmra.mrb[0].mxu0 %v1287
  %v1485 = vpop.f32.mrb[0].mxu0
  %v1486 = vadd.f32 0.0, %v1485
  %v1487 = vpop.f32.mrb[0].mxu0
  %v1488 = vpop.f32.mrb[0].mxu0
  %v1489 = vadd.f32 0.0, %v1488
  %v1490 = vpop.f32.mrb[0].mxu0
  %1491 = vmatprep.mubr.bf16.mxu0 0
  %1492 = vmatmul.mubr.bf16.gmra.mrb[0].mxu0 %v1290
  %v1493 = vpop.f32.mrb[0].mxu0
  %v1494 = vadd.f32 0.0, %v1493
  %v1495 = vpop.f32.mrb[0].mxu0
  %v1496 = vpop.f32.mrb[0].mxu0
  %v1497 = vadd.f32 0.0, %v1496
  %v1498 = vpop.f32.mrb[0].mxu0
  %1499 = vmatprep.mubr.bf16.mxu0 0
  %1500 = vmatmul.mubr.bf16.gmra.mrb[0].mxu0 %v1293
  %v1501 = vpop.f32.mrb[0].mxu0
  %v1502 = vadd.f32 0.0, %v1501
  %v1503 = vpop.f32.mrb[0].mxu0
  %v1504 = vpop.f32.mrb[0].mxu0
  %v1505 = vadd.f32 0.0, %v1504
  %v1506 = vpop.f32.mrb[0].mxu0
  %1507 = vmatprep.mubr.bf16.mxu0 0
  %1508 = vmatmul.mubr.bf16.gmra.mrb[0].mxu0 %v1296
  %v1509 = vpop.f32.mrb[0].mxu0
  %v1510 = vadd.f32 0.0, %v1509
  %v1511 = vpop.f32.mrb[0].mxu0
  %v1512 = vpop.f32.mrb[0].mxu0
  %v1513 = vadd.f32 0.0, %v1512
  %v1514 = vpop.f32.mrb[0].mxu0
  %1515 = vmatprep.mubr.bf16.mxu0 0
  %1516 = vmatmul.mubr.bf16.gmra.mrb[0].mxu0 %v1299
  %v1517 = vpop.f32.mrb[0].mxu0
  %v1518 = vadd.f32 0.0, %v1517
  %v1519 = vpop.f32.mrb[0].mxu0
  %v1520 = vpop.f32.mrb[0].mxu0
  %v1521 = vadd.f32 0.0, %v1520
  %v1522 = vpop.f32.mrb[0].mxu0
  %1523 = vmatprep.mubr.bf16.mxu0 0
  %1524 = vmatmul.mubr.bf16.gmra.mrb[0].mxu0 %v1302
  %v1525 = vpop.f32.mrb[0].mxu0
  %v1526 = vadd.f32 0.0, %v1525
  %v1527 = vpop.f32.mrb[0].mxu0
  %v1528 = vpop.f32.mrb[0].mxu0
  %v1529 = vadd.f32 0.0, %v1528
  %v1530 = vpop.f32.mrb[0].mxu0
  %1531 = vmatprep.mubr.bf16.mxu0 0
  %1532 = vmatmul.mubr.bf16.gmra.mrb[0].mxu0 %v1305
  %v1533 = vpop.f32.mrb[0].mxu0
  %v1534 = vadd.f32 0.0, %v1533
  %v1535 = vpop.f32.mrb[0].mxu0
  %v1536 = vpop.f32.mrb[0].mxu0
  %v1537 = vadd.f32 0.0, %v1536
  %v1538 = vpop.f32.mrb[0].mxu0
  %1539 = vdwg.mxu0
  %v1540 = vld [vmem:[%s3] sm:$0xf]
  %v1541 = vld [vmem:[%s3 + $0x4] sm:$0xf]
  %v1542 = vld [vmem:[%s3 + $0x8] sm:$0xf]
  %v1543 = vld [vmem:[%s3 + $0xc] sm:$0xf]
  %v1544 = vld [vmem:[%s3 + $0x10] sm:$0xf]
  %v1545 = vld [vmem:[%s3 + $0x14] sm:$0xf]
  %v1546 = vld [vmem:[%s3 + $0x18] sm:$0xf]
  %v1547 = vld [vmem:[%s3 + $0x1c] sm:$0xf]
  %v1548 = vld [vmem:[%s3 + $0x20] sm:$0xf]
  %v1549 = vld [vmem:[%s3 + $0x24] sm:$0xf]
  %v1550 = vld [vmem:[%s3 + $0x28] sm:$0xf]
  %v1551 = vld [vmem:[%s3 + $0x2c] sm:$0xf]
  %v1552 = vld [vmem:[%s3 + $0x30] sm:$0xf]
  %v1553 = vld [vmem:[%s3 + $0x34] sm:$0xf]
  %v1554 = vld [vmem:[%s3 + $0x38] sm:$0xf]
  %v1555 = vld [vmem:[%s3 + $0x3c] sm:$0xf]
  %v1556 = vld [vmem:[%s3 + $0x40] sm:$0xf]
  %v1557 = vld [vmem:[%s3 + $0x44] sm:$0xf]
  %v1558 = vld [vmem:[%s3 + $0x48] sm:$0xf]
  %v1559 = vld [vmem:[%s3 + $0x4c] sm:$0xf]
  %v1560 = vld [vmem:[%s3 + $0x50] sm:$0xf]
  %v1561 = vld [vmem:[%s3 + $0x54] sm:$0xf]
  %v1562 = vld [vmem:[%s3 + $0x58] sm:$0xf]
  %v1563 = vld [vmem:[%s3 + $0x5c] sm:$0xf]
  %v1564 = vld [vmem:[%s3 + $0x60] sm:$0xf]
  %v1565 = vld [vmem:[%s3 + $0x64] sm:$0xf]
  %v1566 = vld [vmem:[%s3 + $0x68] sm:$0xf]
  %v1567 = vld [vmem:[%s3 + $0x6c] sm:$0xf]
  %v1568 = vld [vmem:[%s3 + $0x70] sm:$0xf]
  %v1569 = vld [vmem:[%s3 + $0x74] sm:$0xf]
  %v1570 = vld [vmem:[%s3 + $0x78] sm:$0xf]
  %v1571 = vld [vmem:[%s3 + $0x7c] sm:$0xf]
  %v1572 = vld [vmem:[%s3 + $0x80] sm:$0xf]
  %v1573 = vld [vmem:[%s3 + $0x84] sm:$0xf]
  %v1574 = vld [vmem:[%s3 + $0x88] sm:$0xf]
  %v1575 = vld [vmem:[%s3 + $0x8c] sm:$0xf]
  %v1576 = vld [vmem:[%s3 + $0x90] sm:$0xf]
  %v1577 = vld [vmem:[%s3 + $0x94] sm:$0xf]
  %v1578 = vld [vmem:[%s3 + $0x98] sm:$0xf]
  %v1579 = vld [vmem:[%s3 + $0x9c] sm:$0xf]
  %v1580 = vld [vmem:[%s3 + $0xa0] sm:$0xf]
  %v1581 = vld [vmem:[%s3 + $0xa4] sm:$0xf]
  %v1582 = vld [vmem:[%s3 + $0xa8] sm:$0xf]
  %v1583 = vld [vmem:[%s3 + $0xac] sm:$0xf]
  %v1584 = vld [vmem:[%s3 + $0xb0] sm:$0xf]
  %v1585 = vld [vmem:[%s3 + $0xb4] sm:$0xf]
  %v1586 = vld [vmem:[%s3 + $0xb8] sm:$0xf]
  %v1587 = vld [vmem:[%s3 + $0xbc] sm:$0xf]
  %v1588 = vld [vmem:[%s3 + $0xc0] sm:$0xf]
  %v1589 = vld [vmem:[%s3 + $0xc4] sm:$0xf]
  %v1640 = vunpack.c.l.b16 %v1540
  %v1641 = vunpack.c.l.b16 %v1541
  %v1642 = vunpack.c.l.b16 %v1542
  %v1643 = vunpack.c.l.b16 %v1543
  %v1644 = vunpack.c.l.b16 %v1544
  %v1645 = vunpack.c.l.b16 %v1545
  %v1646 = vunpack.c.l.b16 %v1546
  %v1647 = vunpack.c.l.b16 %v1547
  %v1648 = vunpack.c.l.b16 %v1548
  %v1649 = vunpack.c.l.b16 %v1549
  %v1650 = vunpack.c.l.b16 %v1550
  %v1651 = vunpack.c.l.b16 %v1551
  %v1652 = vunpack.c.l.b16 %v1552
  %v1653 = vunpack.c.l.b16 %v1553
  %v1654 = vunpack.c.l.b16 %v1554
  %v1655 = vunpack.c.l.b16 %v1555
  %v1656 = vunpack.c.l.b16 %v1556
  %v1657 = vunpack.c.l.b16 %v1557
  %v1658 = vunpack.c.l.b16 %v1558
  %v1659 = vunpack.c.l.b16 %v1559
  %v1660 = vunpack.c.l.b16 %v1560
  %v1661 = vunpack.c.l.b16 %v1561
  %v1662 = vunpack.c.l.b16 %v1562
  %v1663 = vunpack.c.l.b16 %v1563
  %v1664 = vunpack.c.l.b16 %v1564
  %v1665 = vunpack.c.l.b16 %v1565
  %v1666 = vunpack.c.l.b16 %v1566
  %v1667 = vunpack.c.l.b16 %v1567
  %v1668 = vunpack.c.l.b16 %v1568
  %v1669 = vunpack.c.l.b16 %v1569
  %v1670 = vunpack.c.l.b16 %v1570
  %v1671 = vunpack.c.l.b16 %v1571
  %v1672 = vunpack.c.l.b16 %v1572
  %v1673 = vunpack.c.l.b16 %v1573
  %v1674 = vunpack.c.l.b16 %v1574
  %v1675 = vunpack.c.l.b16 %v1575
  %v1676 = vunpack.c.l.b16 %v1576
  %v1677 = vunpack.c.l.b16 %v1577
  %v1678 = vunpack.c.l.b16 %v1578
  %v1679 = vunpack.c.l.b16 %v1579
  %v1680 = vunpack.c.l.b16 %v1580
  %v1681 = vunpack.c.l.b16 %v1581
  %v1682 = vunpack.c.l.b16 %v1582
  %v1683 = vunpack.c.l.b16 %v1583
  %v1684 = vunpack.c.l.b16 %v1584
  %v1685 = vunpack.c.l.b16 %v1585
  %v1686 = vunpack.c.l.b16 %v1586
  %v1687 = vunpack.c.l.b16 %v1587
  %v1688 = vunpack.c.l.b16 %v1588
  %v1689 = vunpack.c.l.b16 %v1589
  %v1690 = vpack.c.b16 %v1641, %v1640
  %v1691 = vpack.c.b16 %v1643, %v1642
  %v1692 = vpack.c.b16 %v1645, %v1644
  %v1693 = vpack.c.b16 %v1647, %v1646
  %v1694 = vpack.c.b16 %v1649, %v1648
  %v1695 = vpack.c.b16 %v1651, %v1650
  %v1696 = vpack.c.b16 %v1653, %v1652
  %v1697 = vpack.c.b16 %v1655, %v1654
  %v1698 = vpack.c.b16 %v1657, %v1656
  %v1699 = vpack.c.b16 %v1659, %v1658
  %v1700 = vpack.c.b16 %v1661, %v1660
  %v1701 = vpack.c.b16 %v1663, %v1662
  %v1702 = vpack.c.b16 %v1665, %v1664
  %v1703 = vpack.c.b16 %v1667, %v1666
  %v1704 = vpack.c.b16 %v1669, %v1668
  %v1705 = vpack.c.b16 %v1671, %v1670
  %v1706 = vpack.c.b16 %v1673, %v1672
  %v1707 = vpack.c.b16 %v1675, %v1674
  %v1708 = vpack.c.b16 %v1677, %v1676
  %v1709 = vpack.c.b16 %v1679, %v1678
  %v1710 = vpack.c.b16 %v1681, %v1680
  %v1711 = vpack.c.b16 %v1683, %v1682
  %v1712 = vpack.c.b16 %v1685, %v1684
  %v1713 = vpack.c.b16 %v1687, %v1686
  %v1714 = vpack.c.b16 %v1689, %v1688
  %v1716 = vsel %vm215, %v1690, 0
  %v1719 = vsel %vm215, %v1691, 0
  %v1722 = vsel %vm215, %v1692, 0
  %v1725 = vsel %vm215, %v1693, 0
  %v1728 = vsel %vm215, %v1694, 0
  %v1731 = vsel %vm215, %v1695, 0
  %v1734 = vsel %vm215, %v1696, 0
  %v1737 = vsel %vm215, %v1697, 0
  %v1740 = vsel %vm215, %v1698, 0
  %v1743 = vsel %vm215, %v1699, 0
  %v1746 = vsel %vm215, %v1700, 0
  %v1749 = vsel %vm215, %v1701, 0
  %v1752 = vsel %vm215, %v1702, 0
  %v1755 = vsel %vm215, %v1703, 0
  %v1758 = vsel %vm215, %v1704, 0
  %v1761 = vsel %vm215, %v1705, 0
  %v1764 = vsel %vm215, %v1706, 0
  %v1767 = vsel %vm215, %v1707, 0
  %v1770 = vsel %vm215, %v1708, 0
  %v1773 = vsel %vm215, %v1709, 0
  %v1776 = vsel %vm215, %v1710, 0
  %v1779 = vsel %vm215, %v1711, 0
  %v1782 = vsel %vm215, %v1712, 0
  %v1785 = vsel %vm215, %v1713, 0
  %v1788 = vsel %vm215, %v1714, 0
  %1790 = vmatprep.subr.bf16.mxu0 0
  %1791 = vmatpush1.bf16.msra.mxu0 %v211
  %1792 = vmatprep.subr.bf16.mxu0 0
  %1793 = vmatpush1.bf16.msra.mxu0 %v212
  %1794 = vmatprep.subr.bf16.mxu0 0
  %1795 = vmatpush1.bf16.msra.mxu0 0
  %1796 = vmatprep.subr.bf16.mxu0 0
  %1797 = vmatpush1.bf16.msra.mxu0 0
  %1798 = vmatprep.subr.bf16.mxu0 0
  %1799 = vmatpush1.bf16.msra.mxu0 0
  %1800 = vmatprep.subr.bf16.mxu0 0
  %1801 = vmatpush1.bf16.msra.mxu0 0
  %1802 = vmatprep.subr.bf16.mxu0 0
  %1803 = vmatpush1.bf16.msra.mxu0 0
  %1804 = vmatprep.subr.bf16.mxu0 0
  %1805 = vmatpush1.bf16.msra.mxu0 0
  %1806 = vmatprep.subr.bf16.mxu0 0
  %1807 = vmatpush1.bf16.msra.mxu0 0
  %1808 = vmatprep.subr.bf16.mxu0 0
  %1809 = vmatpush1.bf16.msra.mxu0 0
  %1810 = vmatprep.subr.bf16.mxu0 0
  %1811 = vmatpush1.bf16.msra.mxu0 0
  %1812 = vmatprep.subr.bf16.mxu0 0
  %1813 = vmatpush1.bf16.msra.mxu0 0
  %1814 = vmatprep.subr.bf16.mxu0 0
  %1815 = vmatpush1.bf16.msra.mxu0 0
  %1816 = vmatprep.subr.bf16.mxu0 0
  %1817 = vmatpush1.bf16.msra.mxu0 0
  %1818 = vmatprep.subr.bf16.mxu0 0
  %1819 = vmatpush1.bf16.msra.mxu0 0
  %1820 = vmatprep.subr.bf16.mxu0 0
  %1821 = vmatpush1.bf16.msra.mxu0 0
  %1822 = vmatprep.mubr.bf16.mxu0 0
  %1823 = vmatmul.mubr.bf16.gmra.mrb[0].mxu0 %v1716
  %v1824 = vpop.f32.mrb[0].mxu0
  %v1825 = vadd.f32 0.0, %v1824
  %v1826 = vpop.f32.mrb[0].mxu0
  %v1827 = vpop.f32.mrb[0].mxu0
  %v1828 = vadd.f32 0.0, %v1827
  %v1829 = vpop.f32.mrb[0].mxu0
  %1830 = vmatprep.mubr.bf16.mxu0 0
  %1831 = vmatmul.mubr.bf16.gmra.mrb[0].mxu0 %v1719
  %v1832 = vpop.f32.mrb[0].mxu0
  %v1833 = vadd.f32 0.0, %v1832
  %v1834 = vpop.f32.mrb[0].mxu0
  %v1835 = vpop.f32.mrb[0].mxu0
  %v1836 = vadd.f32 0.0, %v1835
  %v1837 = vpop.f32.mrb[0].mxu0
  %1838 = vmatprep.mubr.bf16.mxu0 0
  %1839 = vmatmul.mubr.bf16.gmra.mrb[0].mxu0 %v1722
  %v1840 = vpop.f32.mrb[0].mxu0
  %v1841 = vadd.f32 0.0, %v1840
  %v1842 = vpop.f32.mrb[0].mxu0
  %v1843 = vpop.f32.mrb[0].mxu0
  %v1844 = vadd.f32 0.0, %v1843
  %v1845 = vpop.f32.mrb[0].mxu0
  %1846 = vmatprep.mubr.bf16.mxu0 0
  %1847 = vmatmul.mubr.bf16.gmra.mrb[0].mxu0 %v1725
  %v1848 = vpop.f32.mrb[0].mxu0
  %v1849 = vadd.f32 0.0, %v1848
  %v1850 = vpop.f32.mrb[0].mxu0
  %v1851 = vpop.f32.mrb[0].mxu0
  %v1852 = vadd.f32 0.0, %v1851
  %v1853 = vpop.f32.mrb[0].mxu0
  %1854 = vmatprep.mubr.bf16.mxu0 0
  %1855 = vmatmul.mubr.bf16.gmra.mrb[0].mxu0 %v1728
  %v1856 = vpop.f32.mrb[0].mxu0
  %v1857 = vadd.f32 0.0, %v1856
  %v1858 = vpop.f32.mrb[0].mxu0
  %v1859 = vpop.f32.mrb[0].mxu0
  %v1860 = vadd.f32 0.0, %v1859
  %v1861 = vpop.f32.mrb[0].mxu0
  %1862 = vmatprep.mubr.bf16.mxu0 0
  %1863 = vmatmul.mubr.bf16.gmra.mrb[0].mxu0 %v1731
  %v1864 = vpop.f32.mrb[0].mxu0
  %v1865 = vadd.f32 0.0, %v1864
  %v1866 = vpop.f32.mrb[0].mxu0
  %v1867 = vpop.f32.mrb[0].mxu0
  %v1868 = vadd.f32 0.0, %v1867
  %v1869 = vpop.f32.mrb[0].mxu0
  %1870 = vmatprep.mubr.bf16.mxu0 0
  %1871 = vmatmul.mubr.bf16.gmra.mrb[0].mxu0 %v1734
  %v1872 = vpop.f32.mrb[0].mxu0
  %v1873 = vadd.f32 0.0, %v1872
  %v1874 = vpop.f32.mrb[0].mxu0
  %v1875 = vpop.f32.mrb[0].mxu0
  %v1876 = vadd.f32 0.0, %v1875
  %v1877 = vpop.f32.mrb[0].mxu0
  %1878 = vmatprep.mubr.bf16.mxu0 0
  %1879 = vmatmul.mubr.bf16.gmra.mrb[0].mxu0 %v1737
  %v1880 = vpop.f32.mrb[0].mxu0
  %v1881 = vadd.f32 0.0, %v1880
  %v1882 = vpop.f32.mrb[0].mxu0
  %v1883 = vpop.f32.mrb[0].mxu0
  %v1884 = vadd.f32 0.0, %v1883
  %v1885 = vpop.f32.mrb[0].mxu0
  %1886 = vmatprep.mubr.bf16.mxu0 0
  %1887 = vmatmul.mubr.bf16.gmra.mrb[0].mxu0 %v1740
  %v1888 = vpop.f32.mrb[0].mxu0
  %v1889 = vadd.f32 0.0, %v1888
  %v1890 = vpop.f32.mrb[0].mxu0
  %v1891 = vpop.f32.mrb[0].mxu0
  %v1892 = vadd.f32 0.0, %v1891
  %v1893 = vpop.f32.mrb[0].mxu0
  %1894 = vmatprep.mubr.bf16.mxu0 0
  %1895 = vmatmul.mubr.bf16.gmra.mrb[0].mxu0 %v1743
  %v1896 = vpop.f32.mrb[0].mxu0
  %v1897 = vadd.f32 0.0, %v1896
  %v1898 = vpop.f32.mrb[0].mxu0
  %v1899 = vpop.f32.mrb[0].mxu0
  %v1900 = vadd.f32 0.0, %v1899
  %v1901 = vpop.f32.mrb[0].mxu0
  %1902 = vmatprep.mubr.bf16.mxu0 0
  %1903 = vmatmul.mubr.bf16.gmra.mrb[0].mxu0 %v1746
  %v1904 = vpop.f32.mrb[0].mxu0
  %v1905 = vadd.f32 0.0, %v1904
  %v1906 = vpop.f32.mrb[0].mxu0
  %v1907 = vpop.f32.mrb[0].mxu0
  %v1908 = vadd.f32 0.0, %v1907
  %v1909 = vpop.f32.mrb[0].mxu0
  %1910 = vmatprep.mubr.bf16.mxu0 0
  %1911 = vmatmul.mubr.bf16.gmra.mrb[0].mxu0 %v1749
  %v1912 = vpop.f32.mrb[0].mxu0
  %v1913 = vadd.f32 0.0, %v1912
  %v1914 = vpop.f32.mrb[0].mxu0
  %v1915 = vpop.f32.mrb[0].mxu0
  %v1916 = vadd.f32 0.0, %v1915
  %v1917 = vpop.f32.mrb[0].mxu0
  %1918 = vmatprep.mubr.bf16.mxu0 0
  %1919 = vmatmul.mubr.bf16.gmra.mrb[0].mxu0 %v1752
  %v1920 = vpop.f32.mrb[0].mxu0
  %v1921 = vadd.f32 0.0, %v1920
  %v1922 = vpop.f32.mrb[0].mxu0
  %v1923 = vpop.f32.mrb[0].mxu0
  %v1924 = vadd.f32 0.0, %v1923
  %v1925 = vpop.f32.mrb[0].mxu0
  %1926 = vmatprep.mubr.bf16.mxu0 0
  %1927 = vmatmul.mubr.bf16.gmra.mrb[0].mxu0 %v1755
  %v1928 = vpop.f32.mrb[0].mxu0
  %v1929 = vadd.f32 0.0, %v1928
  %v1930 = vpop.f32.mrb[0].mxu0
  %v1931 = vpop.f32.mrb[0].mxu0
  %v1932 = vadd.f32 0.0, %v1931
  %v1933 = vpop.f32.mrb[0].mxu0
  %1934 = vmatprep.mubr.bf16.mxu0 0
  %1935 = vmatmul.mubr.bf16.gmra.mrb[0].mxu0 %v1758
  %v1936 = vpop.f32.mrb[0].mxu0
  %v1937 = vadd.f32 0.0, %v1936
  %v1938 = vpop.f32.mrb[0].mxu0
  %v1939 = vpop.f32.mrb[0].mxu0
  %v1940 = vadd.f32 0.0, %v1939
  %v1941 = vpop.f32.mrb[0].mxu0
  %1942 = vmatprep.mubr.bf16.mxu0 0
  %1943 = vmatmul.mubr.bf16.gmra.mrb[0].mxu0 %v1761
  %v1944 = vpop.f32.mrb[0].mxu0
  %v1945 = vadd.f32 0.0, %v1944
  %v1946 = vpop.f32.mrb[0].mxu0
  %v1947 = vpop.f32.mrb[0].mxu0
  %v1948 = vadd.f32 0.0, %v1947
  %v1949 = vpop.f32.mrb[0].mxu0
  %1950 = vmatprep.mubr.bf16.mxu0 0
  %1951 = vmatmul.mubr.bf16.gmra.mrb[0].mxu0 %v1764
  %v1952 = vpop.f32.mrb[0].mxu0
  %v1953 = vadd.f32 0.0, %v1952
  %v1954 = vpop.f32.mrb[0].mxu0
  %v1955 = vpop.f32.mrb[0].mxu0
  %v1956 = vadd.f32 0.0, %v1955
  %v1957 = vpop.f32.mrb[0].mxu0
  %1958 = vmatprep.mubr.bf16.mxu0 0
  %1959 = vmatmul.mubr.bf16.gmra.mrb[0].mxu0 %v1767
  %v1960 = vpop.f32.mrb[0].mxu0
  %v1961 = vadd.f32 0.0, %v1960
  %v1962 = vpop.f32.mrb[0].mxu0
  %v1963 = vpop.f32.mrb[0].mxu0
  %v1964 = vadd.f32 0.0, %v1963
  %v1965 = vpop.f32.mrb[0].mxu0
  %1966 = vmatprep.mubr.bf16.mxu0 0
  %1967 = vmatmul.mubr.bf16.gmra.mrb[0].mxu0 %v1770
  %v1968 = vpop.f32.mrb[0].mxu0
  %v1969 = vadd.f32 0.0, %v1968
  %v1970 = vpop.f32.mrb[0].mxu0
  %v1971 = vpop.f32.mrb[0].mxu0
  %v1972 = vadd.f32 0.0, %v1971
  %v1973 = vpop.f32.mrb[0].mxu0
  %1974 = vmatprep.mubr.bf16.mxu0 0
  %1975 = vmatmul.mubr.bf16.gmra.mrb[0].mxu0 %v1773
  %v1976 = vpop.f32.mrb[0].mxu0
  %v1977 = vadd.f32 0.0, %v1976
  %v1978 = vpop.f32.mrb[0].mxu0
  %v1979 = vpop.f32.mrb[0].mxu0
  %v1980 = vadd.f32 0.0, %v1979
  %v1981 = vpop.f32.mrb[0].mxu0
  %1982 = vmatprep.mubr.bf16.mxu0 0
  %1983 = vmatmul.mubr.bf16.gmra.mrb[0].mxu0 %v1776
  %v1984 = vpop.f32.mrb[0].mxu0
  %v1985 = vadd.f32 0.0, %v1984
  %v1986 = vpop.f32.mrb[0].mxu0
  %v1987 = vpop.f32.mrb[0].mxu0
  %v1988 = vadd.f32 0.0, %v1987
  %v1989 = vpop.f32.mrb[0].mxu0
  %1990 = vmatprep.mubr.bf16.mxu0 0
  %1991 = vmatmul.mubr.bf16.gmra.mrb[0].mxu0 %v1779
  %v1992 = vpop.f32.mrb[0].mxu0
  %v1993 = vadd.f32 0.0, %v1992
  %v1994 = vpop.f32.mrb[0].mxu0
  %v1995 = vpop.f32.mrb[0].mxu0
  %v1996 = vadd.f32 0.0, %v1995
  %v1997 = vpop.f32.mrb[0].mxu0
  %1998 = vmatprep.mubr.bf16.mxu0 0
  %1999 = vmatmul.mubr.bf16.gmra.mrb[0].mxu0 %v1782
  %v2000 = vpop.f32.mrb[0].mxu0
  %v2001 = vadd.f32 0.0, %v2000
  %v2002 = vpop.f32.mrb[0].mxu0
  %v2003 = vpop.f32.mrb[0].mxu0
  %v2004 = vadd.f32 0.0, %v2003
  %v2005 = vpop.f32.mrb[0].mxu0
  %2006 = vmatprep.mubr.bf16.mxu0 0
  %2007 = vmatmul.mubr.bf16.gmra.mrb[0].mxu0 %v1785
  %v2008 = vpop.f32.mrb[0].mxu0
  %v2009 = vadd.f32 0.0, %v2008
  %v2010 = vpop.f32.mrb[0].mxu0
  %v2011 = vpop.f32.mrb[0].mxu0
  %v2012 = vadd.f32 0.0, %v2011
  %v2013 = vpop.f32.mrb[0].mxu0
  %2014 = vmatprep.mubr.bf16.mxu0 0
  %2015 = vmatmul.mubr.bf16.gmra.mrb[0].mxu0 %v1788
  %v2016 = vpop.f32.mrb[0].mxu0
  %v2017 = vadd.f32 0.0, %v2016
  %v2018 = vpop.f32.mrb[0].mxu0
  %v2019 = vpop.f32.mrb[0].mxu0
  %v2020 = vadd.f32 0.0, %v2019
  %v2021 = vpop.f32.mrb[0].mxu0
  %2022 = vdwg.mxu0
  %v2023 = vmax.f32 %v1342, %v1825
  %v2024 = vmax.f32 %v1345, %v1828
  %v2025 = vmax.f32 %v1350, %v1833
  %v2026 = vmax.f32 %v1353, %v1836
  %v2027 = vmax.f32 %v1358, %v1841
  %v2028 = vmax.f32 %v1361, %v1844
  %v2029 = vmax.f32 %v1366, %v1849
  %v2030 = vmax.f32 %v1369, %v1852
  %v2031 = vmax.f32 %v1374, %v1857
  %v2032 = vmax.f32 %v1377, %v1860
  %v2033 = vmax.f32 %v1382, %v1865
  %v2034 = vmax.f32 %v1385, %v1868
  %v2035 = vmax.f32 %v1390, %v1873
  %v2036 = vmax.f32 %v1393, %v1876
  %v2037 = vmax.f32 %v1398, %v1881
  %v2038 = vmax.f32 %v1401, %v1884
  %v2039 = vmax.f32 %v1406, %v1889
  %v2040 = vmax.f32 %v1409, %v1892
  %v2041 = vmax.f32 %v1414, %v1897
  %v2042 = vmax.f32 %v1417, %v1900
  %v2043 = vmax.f32 %v1422, %v1905
  %v2044 = vmax.f32 %v1425, %v1908
  %v2045 = vmax.f32 %v1430, %v1913
  %v2046 = vmax.f32 %v1433, %v1916
  %v2047 = vmax.f32 %v1438, %v1921
  %v2048 = vmax.f32 %v1441, %v1924
  %v2049 = vmax.f32 %v1446, %v1929
  %v2050 = vmax.f32 %v1449, %v1932
  %v2051 = vmax.f32 %v1454, %v1937
  %v2052 = vmax.f32 %v1457, %v1940
  %v2053 = vmax.f32 %v1462, %v1945
  %v2054 = vmax.f32 %v1465, %v1948
  %v2055 = vmax.f32 %v1470, %v1953
  %v2056 = vmax.f32 %v1473, %v1956
  %v2057 = vmax.f32 %v1478, %v1961
  %v2058 = vmax.f32 %v1481, %v1964
  %v2059 = vmax.f32 %v1486, %v1969
  %v2060 = vmax.f32 %v1489, %v1972
  %v2061 = vmax.f32 %v1494, %v1977
  %v2062 = vmax.f32 %v1497, %v1980
  %v2063 = vmax.f32 %v1502, %v1985
  %v2064 = vmax.f32 %v1505, %v1988
  %v2065 = vmax.f32 %v1510, %v1993
  %v2066 = vmax.f32 %v1513, %v1996
  %v2067 = vmax.f32 %v1518, %v2001
  %v2068 = vmax.f32 %v1521, %v2004
  %v2069 = vmax.f32 %v1526, %v2009
  %v2070 = vmax.f32 %v1529, %v2012
  %v2071 = vmax.f32 %v1534, %v2017
  %v2072 = vmax.f32 %v1537, %v2020
  %v2073 = vmax.f32 %v1007, %v2023
  %v2074 = vmax.f32 %v1008, %v2024
  %v2075 = vmax.f32 %v1009, %v2025
  %v2076 = vmax.f32 %v1010, %v2026
  %v2077 = vmax.f32 %v1011, %v2027
  %v2078 = vmax.f32 %v1012, %v2028
  %v2079 = vmax.f32 %v1013, %v2029
  %v2080 = vmax.f32 %v1014, %v2030
  %v2081 = vmax.f32 %v1015, %v2031
  %v2082 = vmax.f32 %v1016, %v2032
  %v2083 = vmax.f32 %v1017, %v2033
  %v2084 = vmax.f32 %v1018, %v2034
  %v2085 = vmax.f32 %v1019, %v2035
  %v2086 = vmax.f32 %v1020, %v2036
  %v2087 = vmax.f32 %v1021, %v2037
  %v2088 = vmax.f32 %v1022, %v2038
  %v2089 = vmax.f32 %v1023, %v2039
  %v2090 = vmax.f32 %v1024, %v2040
  %v2091 = vmax.f32 %v1025, %v2041
  %v2092 = vmax.f32 %v1026, %v2042
  %v2093 = vmax.f32 %v1027, %v2043
  %v2094 = vmax.f32 %v1028, %v2044
  %v2095 = vmax.f32 %v1029, %v2045
  %v2096 = vmax.f32 %v1030, %v2046
  %v2097 = vmax.f32 %v1031, %v2047
  %v2098 = vmax.f32 %v1032, %v2048
  %v2099 = vmax.f32 %v1033, %v2049
  %v2100 = vmax.f32 %v1034, %v2050
  %v2101 = vmax.f32 %v1035, %v2051
  %v2102 = vmax.f32 %v1036, %v2052
  %v2103 = vmax.f32 %v1037, %v2053
  %v2104 = vmax.f32 %v1038, %v2054
  %v2105 = vmax.f32 %v1039, %v2055
  %v2106 = vmax.f32 %v1040, %v2056
  %v2107 = vmax.f32 %v1041, %v2057
  %v2108 = vmax.f32 %v1042, %v2058
  %v2109 = vmax.f32 %v1043, %v2059
  %v2110 = vmax.f32 %v1044, %v2060
  %v2111 = vmax.f32 %v1045, %v2061
  %v2112 = vmax.f32 %v1046, %v2062
  %v2113 = vmax.f32 %v1047, %v2063
  %v2114 = vmax.f32 %v1048, %v2064
  %v2115 = vmax.f32 %v1049, %v2065
  %v2116 = vmax.f32 %v1050, %v2066
  %v2117 = vmax.f32 %v1051, %v2067
  %v2118 = vmax.f32 %v1052, %v2068
  %v2119 = vmax.f32 %v1053, %v2069
  %v2120 = vmax.f32 %v1054, %v2070
  %v2121 = vmax.f32 %v1055, %v2071
  %v2122 = vmax.f32 %v1056, %v2072
  %v2123 = vld [vmem:[%s5] sm:$0x1]
  %v2125 = vlaneseq
  %v2126 = vshrl.u32 %v2125, 7
  %v2127 = vsub.s32 0, %v2126
  %v2128 = vrot.slane %v2123, %v2127
  %v2130 = vadd.f32 %v2073, %v2128
  %v2131 = vadd.f32 %v2074, %v2128
  %v2132 = vadd.f32 %v2075, %v2128
  %v2133 = vadd.f32 %v2076, %v2128
  %v2134 = vadd.f32 %v2077, %v2128
  %v2135 = vadd.f32 %v2078, %v2128
  %v2136 = vadd.f32 %v2079, %v2128
  %v2137 = vadd.f32 %v2080, %v2128
  %v2138 = vadd.f32 %v2081, %v2128
  %v2139 = vadd.f32 %v2082, %v2128
  %v2140 = vadd.f32 %v2083, %v2128
  %v2141 = vadd.f32 %v2084, %v2128
  %v2142 = vadd.f32 %v2085, %v2128
  %v2143 = vadd.f32 %v2086, %v2128
  %v2144 = vadd.f32 %v2087, %v2128
  %v2145 = vadd.f32 %v2088, %v2128
  %v2146 = vadd.f32 %v2089, %v2128
  %v2147 = vadd.f32 %v2090, %v2128
  %v2148 = vadd.f32 %v2091, %v2128
  %v2149 = vadd.f32 %v2092, %v2128
  %v2150 = vadd.f32 %v2093, %v2128
  %v2151 = vadd.f32 %v2094, %v2128
  %v2152 = vadd.f32 %v2095, %v2128
  %v2153 = vadd.f32 %v2096, %v2128
  %v2154 = vadd.f32 %v2097, %v2128
  %v2155 = vadd.f32 %v2098, %v2128
  %v2156 = vadd.f32 %v2099, %v2128
  %v2157 = vadd.f32 %v2100, %v2128
  %v2158 = vadd.f32 %v2101, %v2128
  %v2159 = vadd.f32 %v2102, %v2128
  %v2160 = vadd.f32 %v2103, %v2128
  %v2161 = vadd.f32 %v2104, %v2128
  %v2162 = vadd.f32 %v2105, %v2128
  %v2163 = vadd.f32 %v2106, %v2128
  %v2164 = vadd.f32 %v2107, %v2128
  %v2165 = vadd.f32 %v2108, %v2128
  %v2166 = vadd.f32 %v2109, %v2128
  %v2167 = vadd.f32 %v2110, %v2128
  %v2168 = vadd.f32 %v2111, %v2128
  %v2169 = vadd.f32 %v2112, %v2128
  %v2170 = vadd.f32 %v2113, %v2128
  %v2171 = vadd.f32 %v2114, %v2128
  %v2172 = vadd.f32 %v2115, %v2128
  %v2173 = vadd.f32 %v2116, %v2128
  %v2174 = vadd.f32 %v2117, %v2128
  %v2175 = vadd.f32 %v2118, %v2128
  %v2176 = vadd.f32 %v2119, %v2128
  %v2177 = vadd.f32 %v2120, %v2128
  %v2178 = vadd.f32 %v2121, %v2128
  %v2179 = vadd.f32 %v2122, %v2128
  %v2180 = vmax.f32 %v2130, 0.0
  %v2181 = vmax.f32 %v2131, 0.0
  %v2182 = vmax.f32 %v2132, 0.0
  %v2183 = vmax.f32 %v2133, 0.0
  %v2184 = vmax.f32 %v2134, 0.0
  %v2185 = vmax.f32 %v2135, 0.0
  %v2186 = vmax.f32 %v2136, 0.0
  %v2187 = vmax.f32 %v2137, 0.0
  %v2188 = vmax.f32 %v2138, 0.0
  %v2189 = vmax.f32 %v2139, 0.0
  %v2190 = vmax.f32 %v2140, 0.0
  %v2191 = vmax.f32 %v2141, 0.0
  %v2192 = vmax.f32 %v2142, 0.0
  %v2193 = vmax.f32 %v2143, 0.0
  %v2194 = vmax.f32 %v2144, 0.0
  %v2195 = vmax.f32 %v2145, 0.0
  %v2196 = vmax.f32 %v2146, 0.0
  %v2197 = vmax.f32 %v2147, 0.0
  %v2198 = vmax.f32 %v2148, 0.0
  %v2199 = vmax.f32 %v2149, 0.0
  %v2200 = vmax.f32 %v2150, 0.0
  %v2201 = vmax.f32 %v2151, 0.0
  %v2202 = vmax.f32 %v2152, 0.0
  %v2203 = vmax.f32 %v2153, 0.0
  %v2204 = vmax.f32 %v2154, 0.0
  %v2205 = vmax.f32 %v2155, 0.0
  %v2206 = vmax.f32 %v2156, 0.0
  %v2207 = vmax.f32 %v2157, 0.0
  %v2208 = vmax.f32 %v2158, 0.0
  %v2209 = vmax.f32 %v2159, 0.0
  %v2210 = vmax.f32 %v2160, 0.0
  %v2211 = vmax.f32 %v2161, 0.0
  %v2212 = vmax.f32 %v2162, 0.0
  %v2213 = vmax.f32 %v2163, 0.0
  %v2214 = vmax.f32 %v2164, 0.0
  %v2215 = vmax.f32 %v2165, 0.0
  %v2216 = vmax.f32 %v2166, 0.0
  %v2217 = vmax.f32 %v2167, 0.0
  %v2218 = vmax.f32 %v2168, 0.0
  %v2219 = vmax.f32 %v2169, 0.0
  %v2220 = vmax.f32 %v2170, 0.0
  %v2221 = vmax.f32 %v2171, 0.0
  %v2222 = vmax.f32 %v2172, 0.0
  %v2223 = vmax.f32 %v2173, 0.0
  %v2224 = vmax.f32 %v2174, 0.0
  %v2225 = vmax.f32 %v2175, 0.0
  %v2226 = vmax.f32 %v2176, 0.0
  %v2227 = vmax.f32 %v2177, 0.0
  %v2228 = vmax.f32 %v2178, 0.0
  %v2229 = vmax.f32 %v2179, 0.0
  %v2230 = vpack.c.bf16 %v2181, %v2180
  %v2231 = vpack.c.bf16 %v2183, %v2182
  %v2232 = vpack.c.bf16 %v2185, %v2184
  %v2233 = vpack.c.bf16 %v2187, %v2186
  %v2234 = vpack.c.bf16 %v2189, %v2188
  %v2235 = vpack.c.bf16 %v2191, %v2190
  %v2236 = vpack.c.bf16 %v2193, %v2192
  %v2237 = vpack.c.bf16 %v2195, %v2194
  %v2238 = vpack.c.bf16 %v2197, %v2196
  %v2239 = vpack.c.bf16 %v2199, %v2198
  %v2240 = vpack.c.bf16 %v2201, %v2200
  %v2241 = vpack.c.bf16 %v2203, %v2202
  %v2242 = vpack.c.bf16 %v2205, %v2204
  %v2243 = vpack.c.bf16 %v2207, %v2206
  %v2244 = vpack.c.bf16 %v2209, %v2208
  %v2245 = vpack.c.bf16 %v2211, %v2210
  %v2246 = vpack.c.bf16 %v2213, %v2212
  %v2247 = vpack.c.bf16 %v2215, %v2214
  %v2248 = vpack.c.bf16 %v2217, %v2216
  %v2249 = vpack.c.bf16 %v2219, %v2218
  %v2250 = vpack.c.bf16 %v2221, %v2220
  %v2251 = vpack.c.bf16 %v2223, %v2222
  %v2252 = vpack.c.bf16 %v2225, %v2224
  %v2253 = vpack.c.bf16 %v2227, %v2226
  %v2254 = vpack.c.bf16 %v2229, %v2228
  %v2280 = vunpack.c.l.b16 %v2230
  %v2281 = vunpack.c.h.b16 %v2230
  %v2282 = vunpack.c.l.b16 %v2231
  %v2283 = vunpack.c.h.b16 %v2231
  %v2284 = vunpack.c.l.b16 %v2232
  %v2285 = vunpack.c.h.b16 %v2232
  %v2286 = vunpack.c.l.b16 %v2233
  %v2287 = vunpack.c.h.b16 %v2233
  %v2288 = vunpack.c.l.b16 %v2234
  %v2289 = vunpack.c.h.b16 %v2234
  %v2290 = vunpack.c.l.b16 %v2235
  %v2291 = vunpack.c.h.b16 %v2235
  %v2292 = vunpack.c.l.b16 %v2236
  %v2293 = vunpack.c.h.b16 %v2236
  %v2294 = vunpack.c.l.b16 %v2237
  %v2295 = vunpack.c.h.b16 %v2237
  %v2296 = vunpack.c.l.b16 %v2238
  %v2297 = vunpack.c.h.b16 %v2238
  %v2298 = vunpack.c.l.b16 %v2239
  %v2299 = vunpack.c.h.b16 %v2239
  %v2300 = vunpack.c.l.b16 %v2240
  %v2301 = vunpack.c.h.b16 %v2240
  %v2302 = vunpack.c.l.b16 %v2241
  %v2303 = vunpack.c.h.b16 %v2241
  %v2304 = vunpack.c.l.b16 %v2242
  %v2305 = vunpack.c.h.b16 %v2242
  %v2306 = vunpack.c.l.b16 %v2243
  %v2307 = vunpack.c.h.b16 %v2243
  %v2308 = vunpack.c.l.b16 %v2244
  %v2309 = vunpack.c.h.b16 %v2244
  %v2310 = vunpack.c.l.b16 %v2245
  %v2311 = vunpack.c.h.b16 %v2245
  %v2312 = vunpack.c.l.b16 %v2246
  %v2313 = vunpack.c.h.b16 %v2246
  %v2314 = vunpack.c.l.b16 %v2247
  %v2315 = vunpack.c.h.b16 %v2247
  %v2316 = vunpack.c.l.b16 %v2248
  %v2317 = vunpack.c.h.b16 %v2248
  %v2318 = vunpack.c.l.b16 %v2249
  %v2319 = vunpack.c.h.b16 %v2249
  %v2320 = vunpack.c.l.b16 %v2250
  %v2321 = vunpack.c.h.b16 %v2250
  %v2322 = vunpack.c.l.b16 %v2251
  %v2323 = vunpack.c.h.b16 %v2251
  %v2324 = vunpack.c.l.b16 %v2252
  %v2325 = vunpack.c.h.b16 %v2252
  %v2326 = vunpack.c.l.b16 %v2253
  %v2327 = vunpack.c.h.b16 %v2253
  %v2328 = vunpack.c.l.b16 %v2254
  %v2329 = vunpack.c.h.b16 %v2254
  %v2330 = vpack.c.b16 %v2280, %v2280
  %v2331 = vpack.c.b16 %v2281, %v2281
  %v2332 = vpack.c.b16 %v2282, %v2282
  %v2333 = vpack.c.b16 %v2283, %v2283
  %v2334 = vpack.c.b16 %v2284, %v2284
  %v2335 = vpack.c.b16 %v2285, %v2285
  %v2336 = vpack.c.b16 %v2286, %v2286
  %v2337 = vpack.c.b16 %v2287, %v2287
  %v2338 = vpack.c.b16 %v2288, %v2288
  %v2339 = vpack.c.b16 %v2289, %v2289
  %v2340 = vpack.c.b16 %v2290, %v2290
  %v2341 = vpack.c.b16 %v2291, %v2291
  %v2342 = vpack.c.b16 %v2292, %v2292
  %v2343 = vpack.c.b16 %v2293, %v2293
  %v2344 = vpack.c.b16 %v2294, %v2294
  %v2345 = vpack.c.b16 %v2295, %v2295
  %v2346 = vpack.c.b16 %v2296, %v2296
  %v2347 = vpack.c.b16 %v2297, %v2297
  %v2348 = vpack.c.b16 %v2298, %v2298
  %v2349 = vpack.c.b16 %v2299, %v2299
  %v2350 = vpack.c.b16 %v2300, %v2300
  %v2351 = vpack.c.b16 %v2301, %v2301
  %v2352 = vpack.c.b16 %v2302, %v2302
  %v2353 = vpack.c.b16 %v2303, %v2303
  %v2354 = vpack.c.b16 %v2304, %v2304
  %v2355 = vpack.c.b16 %v2305, %v2305
  %v2356 = vpack.c.b16 %v2306, %v2306
  %v2357 = vpack.c.b16 %v2307, %v2307
  %v2358 = vpack.c.b16 %v2308, %v2308
  %v2359 = vpack.c.b16 %v2309, %v2309
  %v2360 = vpack.c.b16 %v2310, %v2310
  %v2361 = vpack.c.b16 %v2311, %v2311
  %v2362 = vpack.c.b16 %v2312, %v2312
  %v2363 = vpack.c.b16 %v2313, %v2313
  %v2364 = vpack.c.b16 %v2314, %v2314
  %v2365 = vpack.c.b16 %v2315, %v2315
  %v2366 = vpack.c.b16 %v2316, %v2316
  %v2367 = vpack.c.b16 %v2317, %v2317
  %v2368 = vpack.c.b16 %v2318, %v2318
  %v2369 = vpack.c.b16 %v2319, %v2319
  %v2370 = vpack.c.b16 %v2320, %v2320
  %v2371 = vpack.c.b16 %v2321, %v2321
  %v2372 = vpack.c.b16 %v2322, %v2322
  %v2373 = vpack.c.b16 %v2323, %v2323
  %v2374 = vpack.c.b16 %v2324, %v2324
  %v2375 = vpack.c.b16 %v2325, %v2325
  %v2376 = vpack.c.b16 %v2326, %v2326
  %v2377 = vpack.c.b16 %v2327, %v2327
  %v2378 = vpack.c.b16 %v2328, %v2328
  %v2379 = vpack.c.b16 %v2329, %v2329
  %vm2430 = vcmask 125952
  %2431 = vst.msk [vmem:[%s6] sm:$0xf] %vm2430, %v2330
  %2432 = vst.msk [vmem:[%s6 + $0x4] sm:$0xf] %vm2430, %v2331
  %2433 = vst.msk [vmem:[%s6 + $0x8] sm:$0xf] %vm2430, %v2332
  %2434 = vst.msk [vmem:[%s6 + $0xc] sm:$0xf] %vm2430, %v2333
  %2435 = vst.msk [vmem:[%s6 + $0x10] sm:$0xf] %vm2430, %v2334
  %2436 = vst.msk [vmem:[%s6 + $0x14] sm:$0xf] %vm2430, %v2335
  %2437 = vst.msk [vmem:[%s6 + $0x18] sm:$0xf] %vm2430, %v2336
  %2438 = vst.msk [vmem:[%s6 + $0x1c] sm:$0xf] %vm2430, %v2337
  %2439 = vst.msk [vmem:[%s6 + $0x20] sm:$0xf] %vm2430, %v2338
  %2440 = vst.msk [vmem:[%s6 + $0x24] sm:$0xf] %vm2430, %v2339
  %2441 = vst.msk [vmem:[%s6 + $0x28] sm:$0xf] %vm2430, %v2340
  %2442 = vst.msk [vmem:[%s6 + $0x2c] sm:$0xf] %vm2430, %v2341
  %2443 = vst.msk [vmem:[%s6 + $0x30] sm:$0xf] %vm2430, %v2342
  %2444 = vst.msk [vmem:[%s6 + $0x34] sm:$0xf] %vm2430, %v2343
  %2445 = vst.msk [vmem:[%s6 + $0x38] sm:$0xf] %vm2430, %v2344
  %2446 = vst.msk [vmem:[%s6 + $0x3c] sm:$0xf] %vm2430, %v2345
  %2447 = vst.msk [vmem:[%s6 + $0x40] sm:$0xf] %vm2430, %v2346
  %2448 = vst.msk [vmem:[%s6 + $0x44] sm:$0xf] %vm2430, %v2347
  %2449 = vst.msk [vmem:[%s6 + $0x48] sm:$0xf] %vm2430, %v2348
  %2450 = vst.msk [vmem:[%s6 + $0x4c] sm:$0xf] %vm2430, %v2349
  %2451 = vst.msk [vmem:[%s6 + $0x50] sm:$0xf] %vm2430, %v2350
  %2452 = vst.msk [vmem:[%s6 + $0x54] sm:$0xf] %vm2430, %v2351
  %2453 = vst.msk [vmem:[%s6 + $0x58] sm:$0xf] %vm2430, %v2352
  %2454 = vst.msk [vmem:[%s6 + $0x5c] sm:$0xf] %vm2430, %v2353
  %2455 = vst.msk [vmem:[%s6 + $0x60] sm:$0xf] %vm2430, %v2354
  %2456 = vst.msk [vmem:[%s6 + $0x64] sm:$0xf] %vm2430, %v2355
  %2457 = vst.msk [vmem:[%s6 + $0x68] sm:$0xf] %vm2430, %v2356
  %2458 = vst.msk [vmem:[%s6 + $0x6c] sm:$0xf] %vm2430, %v2357
  %2459 = vst.msk [vmem:[%s6 + $0x70] sm:$0xf] %vm2430, %v2358
  %2460 = vst.msk [vmem:[%s6 + $0x74] sm:$0xf] %vm2430, %v2359
  %2461 = vst.msk [vmem:[%s6 + $0x78] sm:$0xf] %vm2430, %v2360
  %2462 = vst.msk [vmem:[%s6 + $0x7c] sm:$0xf] %vm2430, %v2361
  %2463 = vst.msk [vmem:[%s6 + $0x80] sm:$0xf] %vm2430, %v2362
  %2464 = vst.msk [vmem:[%s6 + $0x84] sm:$0xf] %vm2430, %v2363
  %2465 = vst.msk [vmem:[%s6 + $0x88] sm:$0xf] %vm2430, %v2364
  %2466 = vst.msk [vmem:[%s6 + $0x8c] sm:$0xf] %vm2430, %v2365
  %2467 = vst.msk [vmem:[%s6 + $0x90] sm:$0xf] %vm2430, %v2366
  %2468 = vst.msk [vmem:[%s6 + $0x94] sm:$0xf] %vm2430, %v2367
  %2469 = vst.msk [vmem:[%s6 + $0x98] sm:$0xf] %vm2430, %v2368
  %2470 = vst.msk [vmem:[%s6 + $0x9c] sm:$0xf] %vm2430, %v2369
  %2471 = vst.msk [vmem:[%s6 + $0xa0] sm:$0xf] %vm2430, %v2370
  %2472 = vst.msk [vmem:[%s6 + $0xa4] sm:$0xf] %vm2430, %v2371
  %2473 = vst.msk [vmem:[%s6 + $0xa8] sm:$0xf] %vm2430, %v2372
  %2474 = vst.msk [vmem:[%s6 + $0xac] sm:$0xf] %vm2430, %v2373
  %2475 = vst.msk [vmem:[%s6 + $0xb0] sm:$0xf] %vm2430, %v2374
  %2476 = vst.msk [vmem:[%s6 + $0xb4] sm:$0xf] %vm2430, %v2375
  %2477 = vst.msk [vmem:[%s6 + $0xb8] sm:$0xf] %vm2430, %v2376
  %2478 = vst.msk [vmem:[%s6 + $0xbc] sm:$0xf] %vm2430, %v2377
  %2479 = vst.msk [vmem:[%s6 + $0xc0] sm:$0xf] %vm2430, %v2378
  %2480 = vst.msk [vmem:[%s6 + $0xc4] sm:$0xf] %vm2430, %v2379
  // Predicated region
  $region26: #{cnn_forward.3} parent=0 // pred_check
    _
  $region27: #{cnn_forward.3} parent=0 // pred_check_branch
    %2482 = sbr.rel (0) target = $region29
  $region28: #{cnn_forward.3} parent=0 // pred_region
    _
  $region29: #{cnn_forward.3} parent=0 // pred_fallthru
    _
  // Predicated region
  $region30: #{cnn_forward.3} parent=0 // pred_check
    _
  $region31: #{cnn_forward.3} parent=0 // pred_check_branch
    %2484 = sbr.rel (0) target = $region33
  $region32: #{cnn_forward.3} parent=0 // pred_region
    _
  $region33: #{cnn_forward.3} parent=0 // pred_fallthru
    _

// kernel: cnn_forward.4
$region0: #{cnn_forward.4}
  #allocation0 [shape = 'u32[]', space=smem, size = 0x4, offset = 0x4, fixed_abs, tag = 'smem constant byte address 0x4 - core index']
  #allocation1 [shape = 'u32[144,128]{1,0:T(1,128)}', space=vmem, size = 0x12000, scoped, tag = 'internal scratch']
  %s0 = inlined_call_operand.vmem [shape: bf16[112,400], index: 0, kind: input, shape index: {}]
  %s1 = inlined_call_operand.vmem [shape: bf16[112,400], index: 1, kind: input, shape index: {}]
  %s2 = inlined_call_operand.vmem [shape: bf16[112,400], index: 2, kind: input, shape index: {}]
  %s3 = inlined_call_operand.vmem [shape: bf16[112,400], index: 3, kind: input, shape index: {}]
  %s4 = inlined_call_operand.vmem [shape: bf16[400,32], index: 4, kind: input, shape index: {}]
  %s5 = inlined_call_operand.vmem [shape: f32[1,32], index: 5, kind: input, shape index: {}]
  %s6 = inlined_call_operand.vmem [shape: bf16[112,32], index: 6, kind: output, shape index: {}]
  %s7 = sld [smem:[#allocation0]]
  $region34: #{cnn_forward.4} parent=0
    _
  %s9 = ssub.s32 1, %s7
  %s10 = scalar_select 0, %s9, %s7
  // Predicated region
  $region2: #{cnn_forward.4} parent=0 // pred_check
    _
  $region3: #{cnn_forward.4} parent=0 // pred_check_branch
    %12 = sbr.rel (0) target = $region5
  $region4: #{cnn_forward.4} parent=0 // pred_region
    _
  $region5: #{cnn_forward.4} parent=0 // pred_fallthru
    _
  // Predicated region
  $region6: #{cnn_forward.4} parent=0 // pred_check
    _
  $region7: #{cnn_forward.4} parent=0 // pred_check_branch
    %14 = sbr.rel (0) target = $region9
  $region8: #{cnn_forward.4} parent=0 // pred_region
    _
  $region9: #{cnn_forward.4} parent=0 // pred_fallthru
    _
  // Predicated region
  $region10: #{cnn_forward.4} parent=0 // pred_check
    _
  $region11: #{cnn_forward.4} parent=0 // pred_check_branch
    %16 = sbr.rel (0) target = $region13
  $region12: #{cnn_forward.4} parent=0 // pred_region
    _
  $region13: #{cnn_forward.4} parent=0 // pred_fallthru
    _
  // Predicated region
  $region14: #{cnn_forward.4} parent=0 // pred_check
    _
  $region15: #{cnn_forward.4} parent=0 // pred_check_branch
    %18 = sbr.rel (0) target = $region17
  $region16: #{cnn_forward.4} parent=0 // pred_region
    _
  $region17: #{cnn_forward.4} parent=0 // pred_fallthru
    _
  // Predicated region
  $region18: #{cnn_forward.4} parent=0 // pred_check
    _
  $region19: #{cnn_forward.4} parent=0 // pred_check_branch
    %20 = sbr.rel (0) target = $region21
  $region20: #{cnn_forward.4} parent=0 // pred_region
    _
  $region21: #{cnn_forward.4} parent=0 // pred_fallthru
    _
  // Predicated region
  $region22: #{cnn_forward.4} parent=0 // pred_check
    _
  $region23: #{cnn_forward.4} parent=0 // pred_check_branch
    %22 = sbr.rel (0) target = $region25
  $region24: #{cnn_forward.4} parent=0 // pred_region
    _
  $region25: #{cnn_forward.4} parent=0 // pred_fallthru
    _
  %v24 = vld [vmem:[%s4] sm:$0xf]
  %v25 = vld [vmem:[%s4 + $0x4] sm:$0xf]
  %v26 = vld [vmem:[%s4 + $0x8] sm:$0xf]
  %v27 = vld [vmem:[%s4 + $0xc] sm:$0xf]
  %v28 = vld [vmem:[%s4 + $0x10] sm:$0xf]
  %v29 = vld [vmem:[%s4 + $0x14] sm:$0xf]
  %v30 = vld [vmem:[%s4 + $0x18] sm:$0xf]
  %v31 = vld [vmem:[%s4 + $0x1c] sm:$0xf]
  %v32 = vld [vmem:[%s4 + $0x20] sm:$0xf]
  %v33 = vld [vmem:[%s4 + $0x24] sm:$0xf]
  %v34 = vld [vmem:[%s4 + $0x28] sm:$0xf]
  %v35 = vld [vmem:[%s4 + $0x2c] sm:$0xf]
  %v36 = vld [vmem:[%s4 + $0x30] sm:$0xf]
  %v37 = vld [vmem:[%s4 + $0x34] sm:$0xf]
  %v38 = vld [vmem:[%s4 + $0x38] sm:$0xf]
  %v39 = vld [vmem:[%s4 + $0x3c] sm:$0xf]
  %v40 = vld [vmem:[%s4 + $0x40] sm:$0xf]
  %v41 = vld [vmem:[%s4 + $0x44] sm:$0xf]
  %v42 = vld [vmem:[%s4 + $0x48] sm:$0xf]
  %v43 = vld [vmem:[%s4 + $0x4c] sm:$0xf]
  %v44 = vld [vmem:[%s4 + $0x50] sm:$0xf]
  %v45 = vld [vmem:[%s4 + $0x54] sm:$0xf]
  %v46 = vld [vmem:[%s4 + $0x58] sm:$0xf]
  %v47 = vld [vmem:[%s4 + $0x5c] sm:$0xf]
  %v48 = vld [vmem:[%s4 + $0x60] sm:$0xf]
  %v49 = vld [vmem:[%s4 + $0x64] sm:$0xf]
  %v50 = vld [vmem:[%s4 + $0x68] sm:$0xf]
  %v51 = vld [vmem:[%s4 + $0x6c] sm:$0xf]
  %v52 = vld [vmem:[%s4 + $0x70] sm:$0xf]
  %v53 = vld [vmem:[%s4 + $0x74] sm:$0xf]
  %v54 = vld [vmem:[%s4 + $0x78] sm:$0xf]
  %v55 = vld [vmem:[%s4 + $0x7c] sm:$0xf]
  %v56 = vld [vmem:[%s4 + $0x80] sm:$0xf]
  %v57 = vld [vmem:[%s4 + $0x84] sm:$0xf]
  %v58 = vld [vmem:[%s4 + $0x88] sm:$0xf]
  %v59 = vld [vmem:[%s4 + $0x8c] sm:$0xf]
  %v60 = vld [vmem:[%s4 + $0x90] sm:$0xf]
  %v61 = vld [vmem:[%s4 + $0x94] sm:$0xf]
  %v62 = vld [vmem:[%s4 + $0x98] sm:$0xf]
  %v63 = vld [vmem:[%s4 + $0x9c] sm:$0xf]
  %v64 = vld [vmem:[%s4 + $0xa0] sm:$0xf]
  %v65 = vld [vmem:[%s4 + $0xa4] sm:$0xf]
  %v66 = vld [vmem:[%s4 + $0xa8] sm:$0xf]
  %v67 = vld [vmem:[%s4 + $0xac] sm:$0xf]
  %v68 = vld [vmem:[%s4 + $0xb0] sm:$0xf]
  %v69 = vld [vmem:[%s4 + $0xb4] sm:$0xf]
  %v70 = vld [vmem:[%s4 + $0xb8] sm:$0xf]
  %v71 = vld [vmem:[%s4 + $0xbc] sm:$0xf]
  %v72 = vld [vmem:[%s4 + $0xc0] sm:$0xf]
  %v73 = vld [vmem:[%s4 + $0xc4] sm:$0xf]
  %v74 = vld [vmem:[%s0] sm:$0xff]
  %v75 = vld [vmem:[%s0 + $0x8] sm:$0xff]
  %v76 = vld [vmem:[%s0 + $0x10] sm:$0xff]
  %v77 = vld [vmem:[%s0 + $0x18] sm:$0xff]
  %v78 = vld [vmem:[%s0 + $0x20] sm:$0xff]
  %v79 = vld [vmem:[%s0 + $0x28] sm:$0xff]
  %v80 = vld [vmem:[%s0 + $0x30] sm:$0xff]
  %v81 = vld [vmem:[%s0 + $0x38] sm:$0xff]
  %v82 = vld [vmem:[%s0 + $0x40] sm:$0xff]
  %v83 = vld [vmem:[%s0 + $0x48] sm:$0xff]
  %v84 = vld [vmem:[%s0 + $0x50] sm:$0xff]
  %v85 = vld [vmem:[%s0 + $0x58] sm:$0xff]
  %v86 = vld [vmem:[%s0 + $0x60] sm:$0xff]
  %v87 = vld [vmem:[%s0 + $0x68] sm:$0xff]
  %v88 = vld [vmem:[%s0 + $0x70] sm:$0xff]
  %v89 = vld [vmem:[%s0 + $0x78] sm:$0xff]
  %v90 = vld [vmem:[%s0 + $0x80] sm:$0xff]
  %v91 = vld [vmem:[%s0 + $0x88] sm:$0xff]
  %v92 = vld [vmem:[%s0 + $0x90] sm:$0xff]
  %v93 = vld [vmem:[%s0 + $0x98] sm:$0xff]
  %v94 = vld [vmem:[%s0 + $0xa0] sm:$0xff]
  %v95 = vld [vmem:[%s0 + $0xa8] sm:$0xff]
  %v96 = vld [vmem:[%s0 + $0xb0] sm:$0xff]
  %v97 = vld [vmem:[%s0 + $0xb8] sm:$0xff]
  %v98 = vld [vmem:[%s0 + $0xc0] sm:$0xff]
  %v99 = vld [vmem:[%s0 + $0xc8] sm:$0xff]
  %v100 = vld [vmem:[%s0 + $0xd0] sm:$0xff]
  %v101 = vld [vmem:[%s0 + $0xd8] sm:$0xff]
  %v130 = vunpack.c.l.b16 %v74
  %v131 = vunpack.c.h.b16 %v74
  %v132 = vunpack.c.l.b16 %v75
  %v133 = vunpack.c.h.b16 %v75
  %v134 = vunpack.c.l.b16 %v76
  %v135 = vunpack.c.h.b16 %v76
  %v136 = vunpack.c.l.b16 %v77
  %v137 = vunpack.c.h.b16 %v77
  %v138 = vunpack.c.l.b16 %v78
  %v139 = vunpack.c.h.b16 %v78
  %v140 = vunpack.c.l.b16 %v79
  %v141 = vunpack.c.h.b16 %v79
  %v142 = vunpack.c.l.b16 %v80
  %v143 = vunpack.c.h.b16 %v80
  %v144 = vunpack.c.l.b16 %v81
  %v145 = vunpack.c.h.b16 %v81
  %v146 = vunpack.c.l.b16 %v82
  %v147 = vunpack.c.h.b16 %v82
  %v148 = vunpack.c.l.b16 %v83
  %v149 = vunpack.c.h.b16 %v83
  %v150 = vunpack.c.l.b16 %v84
  %v151 = vunpack.c.h.b16 %v84
  %v152 = vunpack.c.l.b16 %v85
  %v153 = vunpack.c.h.b16 %v85
  %v154 = vunpack.c.l.b16 %v86
  %v155 = vunpack.c.h.b16 %v86
  %v156 = vunpack.c.l.b16 %v87
  %v157 = vunpack.c.h.b16 %v87
  %v158 = vunpack.c.l.b16 %v88
  %v159 = vunpack.c.h.b16 %v88
  %v160 = vunpack.c.l.b16 %v89
  %v161 = vunpack.c.h.b16 %v89
  %v162 = vunpack.c.l.b16 %v90
  %v163 = vunpack.c.h.b16 %v90
  %v164 = vunpack.c.l.b16 %v91
  %v165 = vunpack.c.h.b16 %v91
  %v166 = vunpack.c.l.b16 %v92
  %v167 = vunpack.c.h.b16 %v92
  %v168 = vunpack.c.l.b16 %v93
  %v169 = vunpack.c.h.b16 %v93
  %v170 = vunpack.c.l.b16 %v94
  %v171 = vunpack.c.h.b16 %v94
  %v172 = vunpack.c.l.b16 %v95
  %v173 = vunpack.c.h.b16 %v95
  %v174 = vunpack.c.l.b16 %v96
  %v175 = vunpack.c.h.b16 %v96
  %v176 = vunpack.c.l.b16 %v97
  %v177 = vunpack.c.h.b16 %v97
  %v178 = vunpack.c.l.b16 %v98
  %v179 = vunpack.c.h.b16 %v98
  %v180 = vunpack.c.l.b16 %v99
  %v181 = vunpack.c.h.b16 %v99
  %v182 = vunpack.c.l.b16 %v100
  %v183 = vunpack.c.h.b16 %v100
  %v184 = vunpack.c.l.b16 %v101
  %v185 = vunpack.c.h.b16 %v101
  %v186 = vpack.c.b16 %v134, %v130
  %v187 = vpack.c.b16 %v135, %v131
  %v188 = vpack.c.b16 %v136, %v132
  %v189 = vpack.c.b16 %v137, %v133
  %v190 = vpack.c.b16 %v142, %v138
  %v191 = vpack.c.b16 %v143, %v139
  %v192 = vpack.c.b16 %v144, %v140
  %v193 = vpack.c.b16 %v145, %v141
  %v194 = vpack.c.b16 %v150, %v146
  %v195 = vpack.c.b16 %v151, %v147
  %v196 = vpack.c.b16 %v152, %v148
  %v197 = vpack.c.b16 %v153, %v149
  %v198 = vpack.c.b16 %v158, %v154
  %v199 = vpack.c.b16 %v159, %v155
  %v200 = vpack.c.b16 %v160, %v156
  %v201 = vpack.c.b16 %v161, %v157
  %v202 = vpack.c.b16 %v166, %v162
  %v203 = vpack.c.b16 %v167, %v163
  %v204 = vpack.c.b16 %v168, %v164
  %v205 = vpack.c.b16 %v169, %v165
  %v206 = vpack.c.b16 %v174, %v170
  %v207 = vpack.c.b16 %v175, %v171
  %v208 = vpack.c.b16 %v176, %v172
  %v209 = vpack.c.b16 %v177, %v173
  %v210 = vpack.c.b16 %v182, %v178
  %v211 = vpack.c.b16 %v183, %v179
  %v212 = vpack.c.b16 %v184, %v180
  %v213 = vpack.c.b16 %v185, %v181
  %v285 = vunpack.c.l.b16 %v24
  %v286 = vunpack.c.l.b16 %v25
  %v287 = vunpack.c.l.b16 %v26
  %v288 = vunpack.c.l.b16 %v27
  %v289 = vunpack.c.l.b16 %v28
  %v290 = vunpack.c.l.b16 %v29
  %v291 = vunpack.c.l.b16 %v30
  %v292 = vunpack.c.l.b16 %v31
  %v293 = vunpack.c.l.b16 %v32
  %v294 = vunpack.c.l.b16 %v33
  %v295 = vunpack.c.l.b16 %v34
  %v296 = vunpack.c.l.b16 %v35
  %v297 = vunpack.c.l.b16 %v36
  %v298 = vunpack.c.l.b16 %v37
  %v299 = vunpack.c.l.b16 %v38
  %v300 = vunpack.c.l.b16 %v39
  %v301 = vunpack.c.l.b16 %v40
  %v302 = vunpack.c.l.b16 %v41
  %v303 = vunpack.c.l.b16 %v42
  %v304 = vunpack.c.l.b16 %v43
  %v305 = vunpack.c.l.b16 %v44
  %v306 = vunpack.c.l.b16 %v45
  %v307 = vunpack.c.l.b16 %v46
  %v308 = vunpack.c.l.b16 %v47
  %v309 = vunpack.c.l.b16 %v48
  %v310 = vunpack.c.l.b16 %v49
  %v311 = vunpack.c.l.b16 %v50
  %v312 = vunpack.c.l.b16 %v51
  %v313 = vunpack.c.l.b16 %v52
  %v314 = vunpack.c.l.b16 %v53
  %v315 = vunpack.c.l.b16 %v54
  %v316 = vunpack.c.l.b16 %v55
  %v317 = vunpack.c.l.b16 %v56
  %v318 = vunpack.c.l.b16 %v57
  %v319 = vunpack.c.l.b16 %v58
  %v320 = vunpack.c.l.b16 %v59
  %v321 = vunpack.c.l.b16 %v60
  %v322 = vunpack.c.l.b16 %v61
  %v323 = vunpack.c.l.b16 %v62
  %v324 = vunpack.c.l.b16 %v63
  %v325 = vunpack.c.l.b16 %v64
  %v326 = vunpack.c.l.b16 %v65
  %v327 = vunpack.c.l.b16 %v66
  %v328 = vunpack.c.l.b16 %v67
  %v329 = vunpack.c.l.b16 %v68
  %v330 = vunpack.c.l.b16 %v69
  %v331 = vunpack.c.l.b16 %v70
  %v332 = vunpack.c.l.b16 %v71
  %v333 = vunpack.c.l.b16 %v72
  %v334 = vunpack.c.l.b16 %v73
  %v335 = vpack.c.b16 %v286, %v285
  %v336 = vpack.c.b16 %v288, %v287
  %v337 = vpack.c.b16 %v290, %v289
  %v338 = vpack.c.b16 %v292, %v291
  %v339 = vpack.c.b16 %v294, %v293
  %v340 = vpack.c.b16 %v296, %v295
  %v341 = vpack.c.b16 %v298, %v297
  %v342 = vpack.c.b16 %v300, %v299
  %v343 = vpack.c.b16 %v302, %v301
  %v344 = vpack.c.b16 %v304, %v303
  %v345 = vpack.c.b16 %v306, %v305
  %v346 = vpack.c.b16 %v308, %v307
  %v347 = vpack.c.b16 %v310, %v309
  %v348 = vpack.c.b16 %v312, %v311
  %v349 = vpack.c.b16 %v314, %v313
  %v350 = vpack.c.b16 %v316, %v315
  %v351 = vpack.c.b16 %v318, %v317
  %v352 = vpack.c.b16 %v320, %v319
  %v353 = vpack.c.b16 %v322, %v321
  %v354 = vpack.c.b16 %v324, %v323
  %v355 = vpack.c.b16 %v326, %v325
  %v356 = vpack.c.b16 %v328, %v327
  %v357 = vpack.c.b16 %v330, %v329
  %v358 = vpack.c.b16 %v332, %v331
  %v359 = vpack.c.b16 %v334, %v333
  %vm385 = vcmask 130048
  %v387 = vsel %vm385, %v189, 0
  %v390 = vsel %vm385, %v193, 0
  %v393 = vsel %vm385, %v197, 0
  %v396 = vsel %vm385, %v201, 0
  %v399 = vsel %vm385, %v205, 0
  %v402 = vsel %vm385, %v209, 0
  %v405 = vsel %vm385, %v213, 0
  %407 = vmatprep.subr.bf16.mxu0 0
  %408 = vmatpush1.bf16.msra.mxu0 %v335
  %409 = vmatprep.subr.bf16.mxu0 0
  %410 = vmatpush1.bf16.msra.mxu0 %v336
  %411 = vmatprep.subr.bf16.mxu0 0
  %412 = vmatpush1.bf16.msra.mxu0 %v337
  %413 = vmatprep.subr.bf16.mxu0 0
  %414 = vmatpush1.bf16.msra.mxu0 %v338
  %415 = vmatprep.subr.bf16.mxu0 0
  %416 = vmatpush1.bf16.msra.mxu0 %v339
  %417 = vmatprep.subr.bf16.mxu0 0
  %418 = vmatpush1.bf16.msra.mxu0 %v340
  %419 = vmatprep.subr.bf16.mxu0 0
  %420 = vmatpush1.bf16.msra.mxu0 %v341
  %421 = vmatprep.subr.bf16.mxu0 0
  %422 = vmatpush1.bf16.msra.mxu0 %v342
  %423 = vmatprep.subr.bf16.mxu0 0
  %424 = vmatpush1.bf16.msra.mxu0 %v343
  %425 = vmatprep.subr.bf16.mxu0 0
  %426 = vmatpush1.bf16.msra.mxu0 %v344
  %427 = vmatprep.subr.bf16.mxu0 0
  %428 = vmatpush1.bf16.msra.mxu0 %v345
  %429 = vmatprep.subr.bf16.mxu0 0
  %430 = vmatpush1.bf16.msra.mxu0 %v346
  %431 = vmatprep.subr.bf16.mxu0 0
  %432 = vmatpush1.bf16.msra.mxu0 %v347
  %433 = vmatprep.subr.bf16.mxu0 0
  %434 = vmatpush1.bf16.msra.mxu0 %v348
  %435 = vmatprep.subr.bf16.mxu0 0
  %436 = vmatpush1.bf16.msra.mxu0 %v349
  %437 = vmatprep.subr.bf16.mxu0 0
  %438 = vmatpush1.bf16.msra.mxu0 %v350
  %439 = vmatprep.mubr.bf16.mxu0 %v187
  %440 = vmatmul.mubr.bf16.gmra.mrb[0].mxu0 %v186
  %v441 = vpop.f32.mrb[0].mxu0
  %v442 = vadd.f32 0.0, %v441
  %v443 = vpop.f32.mrb[0].mxu0
  %v444 = vpop.f32.mrb[0].mxu0
  %v445 = vadd.f32 0.0, %v444
  %v446 = vpop.f32.mrb[0].mxu0
  %447 = vmatprep.mubr.bf16.mxu0 %v191
  %448 = vmatmul.mubr.bf16.gmra.mrb[0].mxu0 %v190
  %v449 = vpop.f32.mrb[0].mxu0
  %v450 = vadd.f32 0.0, %v449
  %v451 = vpop.f32.mrb[0].mxu0
  %v452 = vpop.f32.mrb[0].mxu0
  %v453 = vadd.f32 0.0, %v452
  %v454 = vpop.f32.mrb[0].mxu0
  %455 = vmatprep.mubr.bf16.mxu0 %v195
  %456 = vmatmul.mubr.bf16.gmra.mrb[0].mxu0 %v194
  %v457 = vpop.f32.mrb[0].mxu0
  %v458 = vadd.f32 0.0, %v457
  %v459 = vpop.f32.mrb[0].mxu0
  %v460 = vpop.f32.mrb[0].mxu0
  %v461 = vadd.f32 0.0, %v460
  %v462 = vpop.f32.mrb[0].mxu0
  %463 = vmatprep.mubr.bf16.mxu0 %v199
  %464 = vmatmul.mubr.bf16.gmra.mrb[0].mxu0 %v198
  %v465 = vpop.f32.mrb[0].mxu0
  %v466 = vadd.f32 0.0, %v465
  %v467 = vpop.f32.mrb[0].mxu0
  %v468 = vpop.f32.mrb[0].mxu0
  %v469 = vadd.f32 0.0, %v468
  %v470 = vpop.f32.mrb[0].mxu0
  %471 = vmatprep.mubr.bf16.mxu0 %v203
  %472 = vmatmul.mubr.bf16.gmra.mrb[0].mxu0 %v202
  %v473 = vpop.f32.mrb[0].mxu0
  %v474 = vadd.f32 0.0, %v473
  %v475 = vpop.f32.mrb[0].mxu0
  %v476 = vpop.f32.mrb[0].mxu0
  %v477 = vadd.f32 0.0, %v476
  %v478 = vpop.f32.mrb[0].mxu0
  %479 = vmatprep.mubr.bf16.mxu0 %v207
  %480 = vmatmul.mubr.bf16.gmra.mrb[0].mxu0 %v206
  %v481 = vpop.f32.mrb[0].mxu0
  %v482 = vadd.f32 0.0, %v481
  %v483 = vpop.f32.mrb[0].mxu0
  %v484 = vpop.f32.mrb[0].mxu0
  %v485 = vadd.f32 0.0, %v484
  %v486 = vpop.f32.mrb[0].mxu0
  %487 = vmatprep.mubr.bf16.mxu0 %v211
  %488 = vmatmul.mubr.bf16.gmra.mrb[0].mxu0 %v210
  %v489 = vpop.f32.mrb[0].mxu0
  %v490 = vadd.f32 0.0, %v489
  %v491 = vpop.f32.mrb[0].mxu0
  %v492 = vpop.f32.mrb[0].mxu0
  %v493 = vadd.f32 0.0, %v492
  %v494 = vpop.f32.mrb[0].mxu0
  %495 = vdwg.mxu0
  %496 = vmatprep.subr.bf16.mxu0 0
  %497 = vmatpush1.bf16.msra.mxu0 %v351
  %498 = vmatprep.subr.bf16.mxu0 0
  %499 = vmatpush1.bf16.msra.mxu0 %v352
  %500 = vmatprep.subr.bf16.mxu0 0
  %501 = vmatpush1.bf16.msra.mxu0 %v353
  %502 = vmatprep.subr.bf16.mxu0 0
  %503 = vmatpush1.bf16.msra.mxu0 %v354
  %504 = vmatprep.subr.bf16.mxu0 0
  %505 = vmatpush1.bf16.msra.mxu0 %v355
  %506 = vmatprep.subr.bf16.mxu0 0
  %507 = vmatpush1.bf16.msra.mxu0 %v356
  %508 = vmatprep.subr.bf16.mxu0 0
  %509 = vmatpush1.bf16.msra.mxu0 %v357
  %510 = vmatprep.subr.bf16.mxu0 0
  %511 = vmatpush1.bf16.msra.mxu0 %v358
  %512 = vmatprep.subr.bf16.mxu0 0
  %513 = vmatpush1.bf16.msra.mxu0 %v359
  %514 = vmatprep.subr.bf16.mxu0 0
  %515 = vmatpush1.bf16.msra.mxu0 0
  %516 = vmatprep.subr.bf16.mxu0 0
  %517 = vmatpush1.bf16.msra.mxu0 0
  %518 = vmatprep.subr.bf16.mxu0 0
  %519 = vmatpush1.bf16.msra.mxu0 0
  %520 = vmatprep.subr.bf16.mxu0 0
  %521 = vmatpush1.bf16.msra.mxu0 0
  %522 = vmatprep.subr.bf16.mxu0 0
  %523 = vmatpush1.bf16.msra.mxu0 0
  %524 = vmatprep.subr.bf16.mxu0 0
  %525 = vmatpush1.bf16.msra.mxu0 0
  %526 = vmatprep.subr.bf16.mxu0 0
  %527 = vmatpush1.bf16.msra.mxu0 0
  %528 = vmatprep.mubr.bf16.mxu0 %v387
  %529 = vmatmul.mubr.bf16.gmra.mrb[0].mxu0 %v188
  %v530 = vpop.f32.mrb[0].mxu0
  %v531 = vadd.f32 %v442, %v530
  %v532 = vpop.f32.mrb[0].mxu0
  %v533 = vpop.f32.mrb[0].mxu0
  %v534 = vadd.f32 %v445, %v533
  %v535 = vpop.f32.mrb[0].mxu0
  %536 = vmatprep.mubr.bf16.mxu0 %v390
  %537 = vmatmul.mubr.bf16.gmra.mrb[0].mxu0 %v192
  %v538 = vpop.f32.mrb[0].mxu0
  %v539 = vadd.f32 %v450, %v538
  %v540 = vpop.f32.mrb[0].mxu0
  %v541 = vpop.f32.mrb[0].mxu0
  %v542 = vadd.f32 %v453, %v541
  %v543 = vpop.f32.mrb[0].mxu0
  %544 = vmatprep.mubr.bf16.mxu0 %v393
  %545 = vmatmul.mubr.bf16.gmra.mrb[0].mxu0 %v196
  %v546 = vpop.f32.mrb[0].mxu0
  %v547 = vadd.f32 %v458, %v546
  %v548 = vpop.f32.mrb[0].mxu0
  %v549 = vpop.f32.mrb[0].mxu0
  %v550 = vadd.f32 %v461, %v549
  %v551 = vpop.f32.mrb[0].mxu0
  %552 = vmatprep.mubr.bf16.mxu0 %v396
  %553 = vmatmul.mubr.bf16.gmra.mrb[0].mxu0 %v200
  %v554 = vpop.f32.mrb[0].mxu0
  %v555 = vadd.f32 %v466, %v554
  %v556 = vpop.f32.mrb[0].mxu0
  %v557 = vpop.f32.mrb[0].mxu0
  %v558 = vadd.f32 %v469, %v557
  %v559 = vpop.f32.mrb[0].mxu0
  %560 = vmatprep.mubr.bf16.mxu0 %v399
  %561 = vmatmul.mubr.bf16.gmra.mrb[0].mxu0 %v204
  %v562 = vpop.f32.mrb[0].mxu0
  %v563 = vadd.f32 %v474, %v562
  %v564 = vpop.f32.mrb[0].mxu0
  %v565 = vpop.f32.mrb[0].mxu0
  %v566 = vadd.f32 %v477, %v565
  %v567 = vpop.f32.mrb[0].mxu0
  %568 = vmatprep.mubr.bf16.mxu0 %v402
  %569 = vmatmul.mubr.bf16.gmra.mrb[0].mxu0 %v208
  %v570 = vpop.f32.mrb[0].mxu0
  %v571 = vadd.f32 %v482, %v570
  %v572 = vpop.f32.mrb[0].mxu0
  %v573 = vpop.f32.mrb[0].mxu0
  %v574 = vadd.f32 %v485, %v573
  %v575 = vpop.f32.mrb[0].mxu0
  %576 = vmatprep.mubr.bf16.mxu0 %v405
  %577 = vmatmul.mubr.bf16.gmra.mrb[0].mxu0 %v212
  %v578 = vpop.f32.mrb[0].mxu0
  %v579 = vadd.f32 %v490, %v578
  %v580 = vpop.f32.mrb[0].mxu0
  %v581 = vpop.f32.mrb[0].mxu0
  %v582 = vadd.f32 %v493, %v581
  %v583 = vpop.f32.mrb[0].mxu0
  %584 = vdwg.mxu0
  %v585 = vld [vmem:[%s1] sm:$0xff]
  %v586 = vld [vmem:[%s1 + $0x8] sm:$0xff]
  %v587 = vld [vmem:[%s1 + $0x10] sm:$0xff]
  %v588 = vld [vmem:[%s1 + $0x18] sm:$0xff]
  %v589 = vld [vmem:[%s1 + $0x20] sm:$0xff]
  %v590 = vld [vmem:[%s1 + $0x28] sm:$0xff]
  %v591 = vld [vmem:[%s1 + $0x30] sm:$0xff]
  %v592 = vld [vmem:[%s1 + $0x38] sm:$0xff]
  %v593 = vld [vmem:[%s1 + $0x40] sm:$0xff]
  %v594 = vld [vmem:[%s1 + $0x48] sm:$0xff]
  %v595 = vld [vmem:[%s1 + $0x50] sm:$0xff]
  %v596 = vld [vmem:[%s1 + $0x58] sm:$0xff]
  %v597 = vld [vmem:[%s1 + $0x60] sm:$0xff]
  %v598 = vld [vmem:[%s1 + $0x68] sm:$0xff]
  %v599 = vld [vmem:[%s1 + $0x70] sm:$0xff]
  %v600 = vld [vmem:[%s1 + $0x78] sm:$0xff]
  %v601 = vld [vmem:[%s1 + $0x80] sm:$0xff]
  %v602 = vld [vmem:[%s1 + $0x88] sm:$0xff]
  %v603 = vld [vmem:[%s1 + $0x90] sm:$0xff]
  %v604 = vld [vmem:[%s1 + $0x98] sm:$0xff]
  %v605 = vld [vmem:[%s1 + $0xa0] sm:$0xff]
  %v606 = vld [vmem:[%s1 + $0xa8] sm:$0xff]
  %v607 = vld [vmem:[%s1 + $0xb0] sm:$0xff]
  %v608 = vld [vmem:[%s1 + $0xb8] sm:$0xff]
  %v609 = vld [vmem:[%s1 + $0xc0] sm:$0xff]
  %v610 = vld [vmem:[%s1 + $0xc8] sm:$0xff]
  %v611 = vld [vmem:[%s1 + $0xd0] sm:$0xff]
  %v612 = vld [vmem:[%s1 + $0xd8] sm:$0xff]
  %v641 = vunpack.c.l.b16 %v585
  %v642 = vunpack.c.h.b16 %v585
  %v643 = vunpack.c.l.b16 %v586
  %v644 = vunpack.c.h.b16 %v586
  %v645 = vunpack.c.l.b16 %v587
  %v646 = vunpack.c.h.b16 %v587
  %v647 = vunpack.c.l.b16 %v588
  %v648 = vunpack.c.h.b16 %v588
  %v649 = vunpack.c.l.b16 %v589
  %v650 = vunpack.c.h.b16 %v589
  %v651 = vunpack.c.l.b16 %v590
  %v652 = vunpack.c.h.b16 %v590
  %v653 = vunpack.c.l.b16 %v591
  %v654 = vunpack.c.h.b16 %v591
  %v655 = vunpack.c.l.b16 %v592
  %v656 = vunpack.c.h.b16 %v592
  %v657 = vunpack.c.l.b16 %v593
  %v658 = vunpack.c.h.b16 %v593
  %v659 = vunpack.c.l.b16 %v594
  %v660 = vunpack.c.h.b16 %v594
  %v661 = vunpack.c.l.b16 %v595
  %v662 = vunpack.c.h.b16 %v595
  %v663 = vunpack.c.l.b16 %v596
  %v664 = vunpack.c.h.b16 %v596
  %v665 = vunpack.c.l.b16 %v597
  %v666 = vunpack.c.h.b16 %v597
  %v667 = vunpack.c.l.b16 %v598
  %v668 = vunpack.c.h.b16 %v598
  %v669 = vunpack.c.l.b16 %v599
  %v670 = vunpack.c.h.b16 %v599
  %v671 = vunpack.c.l.b16 %v600
  %v672 = vunpack.c.h.b16 %v600
  %v673 = vunpack.c.l.b16 %v601
  %v674 = vunpack.c.h.b16 %v601
  %v675 = vunpack.c.l.b16 %v602
  %v676 = vunpack.c.h.b16 %v602
  %v677 = vunpack.c.l.b16 %v603
  %v678 = vunpack.c.h.b16 %v603
  %v679 = vunpack.c.l.b16 %v604
  %v680 = vunpack.c.h.b16 %v604
  %v681 = vunpack.c.l.b16 %v605
  %v682 = vunpack.c.h.b16 %v605
  %v683 = vunpack.c.l.b16 %v606
  %v684 = vunpack.c.h.b16 %v606
  %v685 = vunpack.c.l.b16 %v607
  %v686 = vunpack.c.h.b16 %v607
  %v687 = vunpack.c.l.b16 %v608
  %v688 = vunpack.c.h.b16 %v608
  %v689 = vunpack.c.l.b16 %v609
  %v690 = vunpack.c.h.b16 %v609
  %v691 = vunpack.c.l.b16 %v610
  %v692 = vunpack.c.h.b16 %v610
  %v693 = vunpack.c.l.b16 %v611
  %v694 = vunpack.c.h.b16 %v611
  %v695 = vunpack.c.l.b16 %v612
  %v696 = vunpack.c.h.b16 %v612
  %v697 = vpack.c.b16 %v645, %v641
  %v698 = vpack.c.b16 %v646, %v642
  %v699 = vpack.c.b16 %v647, %v643
  %v700 = vpack.c.b16 %v648, %v644
  %v701 = vpack.c.b16 %v653, %v649
  %v702 = vpack.c.b16 %v654, %v650
  %v703 = vpack.c.b16 %v655, %v651
  %v704 = vpack.c.b16 %v656, %v652
  %v705 = vpack.c.b16 %v661, %v657
  %v706 = vpack.c.b16 %v662, %v658
  %v707 = vpack.c.b16 %v663, %v659
  %v708 = vpack.c.b16 %v664, %v660
  %v709 = vpack.c.b16 %v669, %v665
  %v710 = vpack.c.b16 %v670, %v666
  %v711 = vpack.c.b16 %v671, %v667
  %v712 = vpack.c.b16 %v672, %v668
  %v713 = vpack.c.b16 %v677, %v673
  %v714 = vpack.c.b16 %v678, %v674
  %v715 = vpack.c.b16 %v679, %v675
  %v716 = vpack.c.b16 %v680, %v676
  %v717 = vpack.c.b16 %v685, %v681
  %v718 = vpack.c.b16 %v686, %v682
  %v719 = vpack.c.b16 %v687, %v683
  %v720 = vpack.c.b16 %v688, %v684
  %v721 = vpack.c.b16 %v693, %v689
  %v722 = vpack.c.b16 %v694, %v690
  %v723 = vpack.c.b16 %v695, %v691
  %v724 = vpack.c.b16 %v696, %v692
  %v747 = vsel %vm385, %v700, 0
  %v750 = vsel %vm385, %v704, 0
  %v753 = vsel %vm385, %v708, 0
  %v756 = vsel %vm385, %v712, 0
  %v759 = vsel %vm385, %v716, 0
  %v762 = vsel %vm385, %v720, 0
  %v765 = vsel %vm385, %v724, 0
  %767 = vmatprep.subr.bf16.mxu0 0
  %768 = vmatpush1.bf16.msra.mxu0 %v335
  %769 = vmatprep.subr.bf16.mxu0 0
  %770 = vmatpush1.bf16.msra.mxu0 %v336
  %771 = vmatprep.subr.bf16.mxu0 0
  %772 = vmatpush1.bf16.msra.mxu0 %v337
  %773 = vmatprep.subr.bf16.mxu0 0
  %774 = vmatpush1.bf16.msra.mxu0 %v338
  %775 = vmatprep.subr.bf16.mxu0 0
  %776 = vmatpush1.bf16.msra.mxu0 %v339
  %777 = vmatprep.subr.bf16.mxu0 0
  %778 = vmatpush1.bf16.msra.mxu0 %v340
  %779 = vmatprep.subr.bf16.mxu0 0
  %780 = vmatpush1.bf16.msra.mxu0 %v341
  %781 = vmatprep.subr.bf16.mxu0 0
  %782 = vmatpush1.bf16.msra.mxu0 %v342
  %783 = vmatprep.subr.bf16.mxu0 0
  %784 = vmatpush1.bf16.msra.mxu0 %v343
  %785 = vmatprep.subr.bf16.mxu0 0
  %786 = vmatpush1.bf16.msra.mxu0 %v344
  %787 = vmatprep.subr.bf16.mxu0 0
  %788 = vmatpush1.bf16.msra.mxu0 %v345
  %789 = vmatprep.subr.bf16.mxu0 0
  %790 = vmatpush1.bf16.msra.mxu0 %v346
  %791 = vmatprep.subr.bf16.mxu0 0
  %792 = vmatpush1.bf16.msra.mxu0 %v347
  %793 = vmatprep.subr.bf16.mxu0 0
  %794 = vmatpush1.bf16.msra.mxu0 %v348
  %795 = vmatprep.subr.bf16.mxu0 0
  %796 = vmatpush1.bf16.msra.mxu0 %v349
  %797 = vmatprep.subr.bf16.mxu0 0
  %798 = vmatpush1.bf16.msra.mxu0 %v350
  %799 = vmatprep.mubr.bf16.mxu0 %v698
  %800 = vmatmul.mubr.bf16.gmra.mrb[0].mxu0 %v697
  %v801 = vpop.f32.mrb[0].mxu0
  %v802 = vadd.f32 0.0, %v801
  %v803 = vpop.f32.mrb[0].mxu0
  %v804 = vpop.f32.mrb[0].mxu0
  %v805 = vadd.f32 0.0, %v804
  %v806 = vpop.f32.mrb[0].mxu0
  %807 = vmatprep.mubr.bf16.mxu0 %v702
  %808 = vmatmul.mubr.bf16.gmra.mrb[0].mxu0 %v701
  %v809 = vpop.f32.mrb[0].mxu0
  %v810 = vadd.f32 0.0, %v809
  %v811 = vpop.f32.mrb[0].mxu0
  %v812 = vpop.f32.mrb[0].mxu0
  %v813 = vadd.f32 0.0, %v812
  %v814 = vpop.f32.mrb[0].mxu0
  %815 = vmatprep.mubr.bf16.mxu0 %v706
  %816 = vmatmul.mubr.bf16.gmra.mrb[0].mxu0 %v705
  %v817 = vpop.f32.mrb[0].mxu0
  %v818 = vadd.f32 0.0, %v817
  %v819 = vpop.f32.mrb[0].mxu0
  %v820 = vpop.f32.mrb[0].mxu0
  %v821 = vadd.f32 0.0, %v820
  %v822 = vpop.f32.mrb[0].mxu0
  %823 = vmatprep.mubr.bf16.mxu0 %v710
  %824 = vmatmul.mubr.bf16.gmra.mrb[0].mxu0 %v709
  %v825 = vpop.f32.mrb[0].mxu0
  %v826 = vadd.f32 0.0, %v825
  %v827 = vpop.f32.mrb[0].mxu0
  %v828 = vpop.f32.mrb[0].mxu0
  %v829 = vadd.f32 0.0, %v828
  %v830 = vpop.f32.mrb[0].mxu0
  %831 = vmatprep.mubr.bf16.mxu0 %v714
  %832 = vmatmul.mubr.bf16.gmra.mrb[0].mxu0 %v713
  %v833 = vpop.f32.mrb[0].mxu0
  %v834 = vadd.f32 0.0, %v833
  %v835 = vpop.f32.mrb[0].mxu0
  %v836 = vpop.f32.mrb[0].mxu0
  %v837 = vadd.f32 0.0, %v836
  %v838 = vpop.f32.mrb[0].mxu0
  %839 = vmatprep.mubr.bf16.mxu0 %v718
  %840 = vmatmul.mubr.bf16.gmra.mrb[0].mxu0 %v717
  %v841 = vpop.f32.mrb[0].mxu0
  %v842 = vadd.f32 0.0, %v841
  %v843 = vpop.f32.mrb[0].mxu0
  %v844 = vpop.f32.mrb[0].mxu0
  %v845 = vadd.f32 0.0, %v844
  %v846 = vpop.f32.mrb[0].mxu0
  %847 = vmatprep.mubr.bf16.mxu0 %v722
  %848 = vmatmul.mubr.bf16.gmra.mrb[0].mxu0 %v721
  %v849 = vpop.f32.mrb[0].mxu0
  %v850 = vadd.f32 0.0, %v849
  %v851 = vpop.f32.mrb[0].mxu0
  %v852 = vpop.f32.mrb[0].mxu0
  %v853 = vadd.f32 0.0, %v852
  %v854 = vpop.f32.mrb[0].mxu0
  %855 = vdwg.mxu0
  %856 = vmatprep.subr.bf16.mxu0 0
  %857 = vmatpush1.bf16.msra.mxu0 %v351
  %858 = vmatprep.subr.bf16.mxu0 0
  %859 = vmatpush1.bf16.msra.mxu0 %v352
  %860 = vmatprep.subr.bf16.mxu0 0
  %861 = vmatpush1.bf16.msra.mxu0 %v353
  %862 = vmatprep.subr.bf16.mxu0 0
  %863 = vmatpush1.bf16.msra.mxu0 %v354
  %864 = vmatprep.subr.bf16.mxu0 0
  %865 = vmatpush1.bf16.msra.mxu0 %v355
  %866 = vmatprep.subr.bf16.mxu0 0
  %867 = vmatpush1.bf16.msra.mxu0 %v356
  %868 = vmatprep.subr.bf16.mxu0 0
  %869 = vmatpush1.bf16.msra.mxu0 %v357
  %870 = vmatprep.subr.bf16.mxu0 0
  %871 = vmatpush1.bf16.msra.mxu0 %v358
  %872 = vmatprep.subr.bf16.mxu0 0
  %873 = vmatpush1.bf16.msra.mxu0 %v359
  %874 = vmatprep.subr.bf16.mxu0 0
  %875 = vmatpush1.bf16.msra.mxu0 0
  %876 = vmatprep.subr.bf16.mxu0 0
  %877 = vmatpush1.bf16.msra.mxu0 0
  %878 = vmatprep.subr.bf16.mxu0 0
  %879 = vmatpush1.bf16.msra.mxu0 0
  %880 = vmatprep.subr.bf16.mxu0 0
  %881 = vmatpush1.bf16.msra.mxu0 0
  %882 = vmatprep.subr.bf16.mxu0 0
  %883 = vmatpush1.bf16.msra.mxu0 0
  %884 = vmatprep.subr.bf16.mxu0 0
  %885 = vmatpush1.bf16.msra.mxu0 0
  %886 = vmatprep.subr.bf16.mxu0 0
  %887 = vmatpush1.bf16.msra.mxu0 0
  %888 = vmatprep.mubr.bf16.mxu0 %v747
  %889 = vmatmul.mubr.bf16.gmra.mrb[0].mxu0 %v699
  %v890 = vpop.f32.mrb[0].mxu0
  %v891 = vadd.f32 %v802, %v890
  %v892 = vpop.f32.mrb[0].mxu0
  %v893 = vpop.f32.mrb[0].mxu0
  %v894 = vadd.f32 %v805, %v893
  %v895 = vpop.f32.mrb[0].mxu0
  %896 = vmatprep.mubr.bf16.mxu0 %v750
  %897 = vmatmul.mubr.bf16.gmra.mrb[0].mxu0 %v703
  %v898 = vpop.f32.mrb[0].mxu0
  %v899 = vadd.f32 %v810, %v898
  %v900 = vpop.f32.mrb[0].mxu0
  %v901 = vpop.f32.mrb[0].mxu0
  %v902 = vadd.f32 %v813, %v901
  %v903 = vpop.f32.mrb[0].mxu0
  %904 = vmatprep.mubr.bf16.mxu0 %v753
  %905 = vmatmul.mubr.bf16.gmra.mrb[0].mxu0 %v707
  %v906 = vpop.f32.mrb[0].mxu0
  %v907 = vadd.f32 %v818, %v906
  %v908 = vpop.f32.mrb[0].mxu0
  %v909 = vpop.f32.mrb[0].mxu0
  %v910 = vadd.f32 %v821, %v909
  %v911 = vpop.f32.mrb[0].mxu0
  %912 = vmatprep.mubr.bf16.mxu0 %v756
  %913 = vmatmul.mubr.bf16.gmra.mrb[0].mxu0 %v711
  %v914 = vpop.f32.mrb[0].mxu0
  %v915 = vadd.f32 %v826, %v914
  %v916 = vpop.f32.mrb[0].mxu0
  %v917 = vpop.f32.mrb[0].mxu0
  %v918 = vadd.f32 %v829, %v917
  %v919 = vpop.f32.mrb[0].mxu0
  %920 = vmatprep.mubr.bf16.mxu0 %v759
  %921 = vmatmul.mubr.bf16.gmra.mrb[0].mxu0 %v715
  %v922 = vpop.f32.mrb[0].mxu0
  %v923 = vadd.f32 %v834, %v922
  %v924 = vpop.f32.mrb[0].mxu0
  %v925 = vpop.f32.mrb[0].mxu0
  %v926 = vadd.f32 %v837, %v925
  %v927 = vpop.f32.mrb[0].mxu0
  %928 = vmatprep.mubr.bf16.mxu0 %v762
  %929 = vmatmul.mubr.bf16.gmra.mrb[0].mxu0 %v719
  %v930 = vpop.f32.mrb[0].mxu0
  %v931 = vadd.f32 %v842, %v930
  %v932 = vpop.f32.mrb[0].mxu0
  %v933 = vpop.f32.mrb[0].mxu0
  %v934 = vadd.f32 %v845, %v933
  %v935 = vpop.f32.mrb[0].mxu0
  %936 = vmatprep.mubr.bf16.mxu0 %v765
  %937 = vmatmul.mubr.bf16.gmra.mrb[0].mxu0 %v723
  %v938 = vpop.f32.mrb[0].mxu0
  %v939 = vadd.f32 %v850, %v938
  %v940 = vpop.f32.mrb[0].mxu0
  %v941 = vpop.f32.mrb[0].mxu0
  %v942 = vadd.f32 %v853, %v941
  %v943 = vpop.f32.mrb[0].mxu0
  %944 = vdwg.mxu0
  %v945 = vmax.f32 %v531, %v891
  %v946 = vmax.f32 %v534, %v894
  %v947 = vmax.f32 %v539, %v899
  %v948 = vmax.f32 %v542, %v902
  %v949 = vmax.f32 %v547, %v907
  %v950 = vmax.f32 %v550, %v910
  %v951 = vmax.f32 %v555, %v915
  %v952 = vmax.f32 %v558, %v918
  %v953 = vmax.f32 %v563, %v923
  %v954 = vmax.f32 %v566, %v926
  %v955 = vmax.f32 %v571, %v931
  %v956 = vmax.f32 %v574, %v934
  %v957 = vmax.f32 %v579, %v939
  %v958 = vmax.f32 %v582, %v942
  %v959 = vld [vmem:[%s2] sm:$0xff]
  %v960 = vld [vmem:[%s2 + $0x8] sm:$0xff]
  %v961 = vld [vmem:[%s2 + $0x10] sm:$0xff]
  %v962 = vld [vmem:[%s2 + $0x18] sm:$0xff]
  %v963 = vld [vmem:[%s2 + $0x20] sm:$0xff]
  %v964 = vld [vmem:[%s2 + $0x28] sm:$0xff]
  %v965 = vld [vmem:[%s2 + $0x30] sm:$0xff]
  %v966 = vld [vmem:[%s2 + $0x38] sm:$0xff]
  %v967 = vld [vmem:[%s2 + $0x40] sm:$0xff]
  %v968 = vld [vmem:[%s2 + $0x48] sm:$0xff]
  %v969 = vld [vmem:[%s2 + $0x50] sm:$0xff]
  %v970 = vld [vmem:[%s2 + $0x58] sm:$0xff]
  %v971 = vld [vmem:[%s2 + $0x60] sm:$0xff]
  %v972 = vld [vmem:[%s2 + $0x68] sm:$0xff]
  %v973 = vld [vmem:[%s2 + $0x70] sm:$0xff]
  %v974 = vld [vmem:[%s2 + $0x78] sm:$0xff]
  %v975 = vld [vmem:[%s2 + $0x80] sm:$0xff]
  %v976 = vld [vmem:[%s2 + $0x88] sm:$0xff]
  %v977 = vld [vmem:[%s2 + $0x90] sm:$0xff]
  %v978 = vld [vmem:[%s2 + $0x98] sm:$0xff]
  %v979 = vld [vmem:[%s2 + $0xa0] sm:$0xff]
  %v980 = vld [vmem:[%s2 + $0xa8] sm:$0xff]
  %v981 = vld [vmem:[%s2 + $0xb0] sm:$0xff]
  %v982 = vld [vmem:[%s2 + $0xb8] sm:$0xff]
  %v983 = vld [vmem:[%s2 + $0xc0] sm:$0xff]
  %v984 = vld [vmem:[%s2 + $0xc8] sm:$0xff]
  %v985 = vld [vmem:[%s2 + $0xd0] sm:$0xff]
  %v986 = vld [vmem:[%s2 + $0xd8] sm:$0xff]
  %v1015 = vunpack.c.l.b16 %v959
  %v1016 = vunpack.c.h.b16 %v959
  %v1017 = vunpack.c.l.b16 %v960
  %v1018 = vunpack.c.h.b16 %v960
  %v1019 = vunpack.c.l.b16 %v961
  %v1020 = vunpack.c.h.b16 %v961
  %v1021 = vunpack.c.l.b16 %v962
  %v1022 = vunpack.c.h.b16 %v962
  %v1023 = vunpack.c.l.b16 %v963
  %v1024 = vunpack.c.h.b16 %v963
  %v1025 = vunpack.c.l.b16 %v964
  %v1026 = vunpack.c.h.b16 %v964
  %v1027 = vunpack.c.l.b16 %v965
  %v1028 = vunpack.c.h.b16 %v965
  %v1029 = vunpack.c.l.b16 %v966
  %v1030 = vunpack.c.h.b16 %v966
  %v1031 = vunpack.c.l.b16 %v967
  %v1032 = vunpack.c.h.b16 %v967
  %v1033 = vunpack.c.l.b16 %v968
  %v1034 = vunpack.c.h.b16 %v968
  %v1035 = vunpack.c.l.b16 %v969
  %v1036 = vunpack.c.h.b16 %v969
  %v1037 = vunpack.c.l.b16 %v970
  %v1038 = vunpack.c.h.b16 %v970
  %v1039 = vunpack.c.l.b16 %v971
  %v1040 = vunpack.c.h.b16 %v971
  %v1041 = vunpack.c.l.b16 %v972
  %v1042 = vunpack.c.h.b16 %v972
  %v1043 = vunpack.c.l.b16 %v973
  %v1044 = vunpack.c.h.b16 %v973
  %v1045 = vunpack.c.l.b16 %v974
  %v1046 = vunpack.c.h.b16 %v974
  %v1047 = vunpack.c.l.b16 %v975
  %v1048 = vunpack.c.h.b16 %v975
  %v1049 = vunpack.c.l.b16 %v976
  %v1050 = vunpack.c.h.b16 %v976
  %v1051 = vunpack.c.l.b16 %v977
  %v1052 = vunpack.c.h.b16 %v977
  %v1053 = vunpack.c.l.b16 %v978
  %v1054 = vunpack.c.h.b16 %v978
  %v1055 = vunpack.c.l.b16 %v979
  %v1056 = vunpack.c.h.b16 %v979
  %v1057 = vunpack.c.l.b16 %v980
  %v1058 = vunpack.c.h.b16 %v980
  %v1059 = vunpack.c.l.b16 %v981
  %v1060 = vunpack.c.h.b16 %v981
  %v1061 = vunpack.c.l.b16 %v982
  %v1062 = vunpack.c.h.b16 %v982
  %v1063 = vunpack.c.l.b16 %v983
  %v1064 = vunpack.c.h.b16 %v983
  %v1065 = vunpack.c.l.b16 %v984
  %v1066 = vunpack.c.h.b16 %v984
  %v1067 = vunpack.c.l.b16 %v985
  %v1068 = vunpack.c.h.b16 %v985
  %v1069 = vunpack.c.l.b16 %v986
  %v1070 = vunpack.c.h.b16 %v986
  %v1071 = vpack.c.b16 %v1019, %v1015
  %v1072 = vpack.c.b16 %v1020, %v1016
  %v1073 = vpack.c.b16 %v1021, %v1017
  %v1074 = vpack.c.b16 %v1022, %v1018
  %v1075 = vpack.c.b16 %v1027, %v1023
  %v1076 = vpack.c.b16 %v1028, %v1024
  %v1077 = vpack.c.b16 %v1029, %v1025
  %v1078 = vpack.c.b16 %v1030, %v1026
  %v1079 = vpack.c.b16 %v1035, %v1031
  %v1080 = vpack.c.b16 %v1036, %v1032
  %v1081 = vpack.c.b16 %v1037, %v1033
  %v1082 = vpack.c.b16 %v1038, %v1034
  %v1083 = vpack.c.b16 %v1043, %v1039
  %v1084 = vpack.c.b16 %v1044, %v1040
  %v1085 = vpack.c.b16 %v1045, %v1041
  %v1086 = vpack.c.b16 %v1046, %v1042
  %v1087 = vpack.c.b16 %v1051, %v1047
  %v1088 = vpack.c.b16 %v1052, %v1048
  %v1089 = vpack.c.b16 %v1053, %v1049
  %v1090 = vpack.c.b16 %v1054, %v1050
  %v1091 = vpack.c.b16 %v1059, %v1055
  %v1092 = vpack.c.b16 %v1060, %v1056
  %v1093 = vpack.c.b16 %v1061, %v1057
  %v1094 = vpack.c.b16 %v1062, %v1058
  %v1095 = vpack.c.b16 %v1067, %v1063
  %v1096 = vpack.c.b16 %v1068, %v1064
  %v1097 = vpack.c.b16 %v1069, %v1065
  %v1098 = vpack.c.b16 %v1070, %v1066
  %v1121 = vsel %vm385, %v1074, 0
  %v1124 = vsel %vm385, %v1078, 0
  %v1127 = vsel %vm385, %v1082, 0
  %v1130 = vsel %vm385, %v1086, 0
  %v1133 = vsel %vm385, %v1090, 0
  %v1136 = vsel %vm385, %v1094, 0
  %v1139 = vsel %vm385, %v1098, 0
  %1141 = vmatprep.subr.bf16.mxu0 0
  %1142 = vmatpush1.bf16.msra.mxu0 %v335
  %1143 = vmatprep.subr.bf16.mxu0 0
  %1144 = vmatpush1.bf16.msra.mxu0 %v336
  %1145 = vmatprep.subr.bf16.mxu0 0
  %1146 = vmatpush1.bf16.msra.mxu0 %v337
  %1147 = vmatprep.subr.bf16.mxu0 0
  %1148 = vmatpush1.bf16.msra.mxu0 %v338
  %1149 = vmatprep.subr.bf16.mxu0 0
  %1150 = vmatpush1.bf16.msra.mxu0 %v339
  %1151 = vmatprep.subr.bf16.mxu0 0
  %1152 = vmatpush1.bf16.msra.mxu0 %v340
  %1153 = vmatprep.subr.bf16.mxu0 0
  %1154 = vmatpush1.bf16.msra.mxu0 %v341
  %1155 = vmatprep.subr.bf16.mxu0 0
  %1156 = vmatpush1.bf16.msra.mxu0 %v342
  %1157 = vmatprep.subr.bf16.mxu0 0
  %1158 = vmatpush1.bf16.msra.mxu0 %v343
  %1159 = vmatprep.subr.bf16.mxu0 0
  %1160 = vmatpush1.bf16.msra.mxu0 %v344
  %1161 = vmatprep.subr.bf16.mxu0 0
  %1162 = vmatpush1.bf16.msra.mxu0 %v345
  %1163 = vmatprep.subr.bf16.mxu0 0
  %1164 = vmatpush1.bf16.msra.mxu0 %v346
  %1165 = vmatprep.subr.bf16.mxu0 0
  %1166 = vmatpush1.bf16.msra.mxu0 %v347
  %1167 = vmatprep.subr.bf16.mxu0 0
  %1168 = vmatpush1.bf16.msra.mxu0 %v348
  %1169 = vmatprep.subr.bf16.mxu0 0
  %1170 = vmatpush1.bf16.msra.mxu0 %v349
  %1171 = vmatprep.subr.bf16.mxu0 0
  %1172 = vmatpush1.bf16.msra.mxu0 %v350
  %1173 = vmatprep.mubr.bf16.mxu0 %v1072
  %1174 = vmatmul.mubr.bf16.gmra.mrb[0].mxu0 %v1071
  %v1175 = vpop.f32.mrb[0].mxu0
  %v1176 = vadd.f32 0.0, %v1175
  %v1177 = vpop.f32.mrb[0].mxu0
  %v1178 = vpop.f32.mrb[0].mxu0
  %v1179 = vadd.f32 0.0, %v1178
  %v1180 = vpop.f32.mrb[0].mxu0
  %1181 = vmatprep.mubr.bf16.mxu0 %v1076
  %1182 = vmatmul.mubr.bf16.gmra.mrb[0].mxu0 %v1075
  %v1183 = vpop.f32.mrb[0].mxu0
  %v1184 = vadd.f32 0.0, %v1183
  %v1185 = vpop.f32.mrb[0].mxu0
  %v1186 = vpop.f32.mrb[0].mxu0
  %v1187 = vadd.f32 0.0, %v1186
  %v1188 = vpop.f32.mrb[0].mxu0
  %1189 = vmatprep.mubr.bf16.mxu0 %v1080
  %1190 = vmatmul.mubr.bf16.gmra.mrb[0].mxu0 %v1079
  %v1191 = vpop.f32.mrb[0].mxu0
  %v1192 = vadd.f32 0.0, %v1191
  %v1193 = vpop.f32.mrb[0].mxu0
  %v1194 = vpop.f32.mrb[0].mxu0
  %v1195 = vadd.f32 0.0, %v1194
  %v1196 = vpop.f32.mrb[0].mxu0
  %1197 = vmatprep.mubr.bf16.mxu0 %v1084
  %1198 = vmatmul.mubr.bf16.gmra.mrb[0].mxu0 %v1083
  %v1199 = vpop.f32.mrb[0].mxu0
  %v1200 = vadd.f32 0.0, %v1199
  %v1201 = vpop.f32.mrb[0].mxu0
  %v1202 = vpop.f32.mrb[0].mxu0
  %v1203 = vadd.f32 0.0, %v1202
  %v1204 = vpop.f32.mrb[0].mxu0
  %1205 = vmatprep.mubr.bf16.mxu0 %v1088
  %1206 = vmatmul.mubr.bf16.gmra.mrb[0].mxu0 %v1087
  %v1207 = vpop.f32.mrb[0].mxu0
  %v1208 = vadd.f32 0.0, %v1207
  %v1209 = vpop.f32.mrb[0].mxu0
  %v1210 = vpop.f32.mrb[0].mxu0
  %v1211 = vadd.f32 0.0, %v1210
  %v1212 = vpop.f32.mrb[0].mxu0
  %1213 = vmatprep.mubr.bf16.mxu0 %v1092
  %1214 = vmatmul.mubr.bf16.gmra.mrb[0].mxu0 %v1091
  %v1215 = vpop.f32.mrb[0].mxu0
  %v1216 = vadd.f32 0.0, %v1215
  %v1217 = vpop.f32.mrb[0].mxu0
  %v1218 = vpop.f32.mrb[0].mxu0
  %v1219 = vadd.f32 0.0, %v1218
  %v1220 = vpop.f32.mrb[0].mxu0
  %1221 = vmatprep.mubr.bf16.mxu0 %v1096
  %1222 = vmatmul.mubr.bf16.gmra.mrb[0].mxu0 %v1095
  %v1223 = vpop.f32.mrb[0].mxu0
  %v1224 = vadd.f32 0.0, %v1223
  %v1225 = vpop.f32.mrb[0].mxu0
  %v1226 = vpop.f32.mrb[0].mxu0
  %v1227 = vadd.f32 0.0, %v1226
  %v1228 = vpop.f32.mrb[0].mxu0
  %1229 = vdwg.mxu0
  %1230 = vmatprep.subr.bf16.mxu0 0
  %1231 = vmatpush1.bf16.msra.mxu0 %v351
  %1232 = vmatprep.subr.bf16.mxu0 0
  %1233 = vmatpush1.bf16.msra.mxu0 %v352
  %1234 = vmatprep.subr.bf16.mxu0 0
  %1235 = vmatpush1.bf16.msra.mxu0 %v353
  %1236 = vmatprep.subr.bf16.mxu0 0
  %1237 = vmatpush1.bf16.msra.mxu0 %v354
  %1238 = vmatprep.subr.bf16.mxu0 0
  %1239 = vmatpush1.bf16.msra.mxu0 %v355
  %1240 = vmatprep.subr.bf16.mxu0 0
  %1241 = vmatpush1.bf16.msra.mxu0 %v356
  %1242 = vmatprep.subr.bf16.mxu0 0
  %1243 = vmatpush1.bf16.msra.mxu0 %v357
  %1244 = vmatprep.subr.bf16.mxu0 0
  %1245 = vmatpush1.bf16.msra.mxu0 %v358
  %1246 = vmatprep.subr.bf16.mxu0 0
  %1247 = vmatpush1.bf16.msra.mxu0 %v359
  %1248 = vmatprep.subr.bf16.mxu0 0
  %1249 = vmatpush1.bf16.msra.mxu0 0
  %1250 = vmatprep.subr.bf16.mxu0 0
  %1251 = vmatpush1.bf16.msra.mxu0 0
  %1252 = vmatprep.subr.bf16.mxu0 0
  %1253 = vmatpush1.bf16.msra.mxu0 0
  %1254 = vmatprep.subr.bf16.mxu0 0
  %1255 = vmatpush1.bf16.msra.mxu0 0
  %1256 = vmatprep.subr.bf16.mxu0 0
  %1257 = vmatpush1.bf16.msra.mxu0 0
  %1258 = vmatprep.subr.bf16.mxu0 0
  %1259 = vmatpush1.bf16.msra.mxu0 0
  %1260 = vmatprep.subr.bf16.mxu0 0
  %1261 = vmatpush1.bf16.msra.mxu0 0
  %1262 = vmatprep.mubr.bf16.mxu0 %v1121
  %1263 = vmatmul.mubr.bf16.gmra.mrb[0].mxu0 %v1073
  %v1264 = vpop.f32.mrb[0].mxu0
  %v1265 = vadd.f32 %v1176, %v1264
  %v1266 = vpop.f32.mrb[0].mxu0
  %v1267 = vpop.f32.mrb[0].mxu0
  %v1268 = vadd.f32 %v1179, %v1267
  %v1269 = vpop.f32.mrb[0].mxu0
  %1270 = vmatprep.mubr.bf16.mxu0 %v1124
  %1271 = vmatmul.mubr.bf16.gmra.mrb[0].mxu0 %v1077
  %v1272 = vpop.f32.mrb[0].mxu0
  %v1273 = vadd.f32 %v1184, %v1272
  %v1274 = vpop.f32.mrb[0].mxu0
  %v1275 = vpop.f32.mrb[0].mxu0
  %v1276 = vadd.f32 %v1187, %v1275
  %v1277 = vpop.f32.mrb[0].mxu0
  %1278 = vmatprep.mubr.bf16.mxu0 %v1127
  %1279 = vmatmul.mubr.bf16.gmra.mrb[0].mxu0 %v1081
  %v1280 = vpop.f32.mrb[0].mxu0
  %v1281 = vadd.f32 %v1192, %v1280
  %v1282 = vpop.f32.mrb[0].mxu0
  %v1283 = vpop.f32.mrb[0].mxu0
  %v1284 = vadd.f32 %v1195, %v1283
  %v1285 = vpop.f32.mrb[0].mxu0
  %1286 = vmatprep.mubr.bf16.mxu0 %v1130
  %1287 = vmatmul.mubr.bf16.gmra.mrb[0].mxu0 %v1085
  %v1288 = vpop.f32.mrb[0].mxu0
  %v1289 = vadd.f32 %v1200, %v1288
  %v1290 = vpop.f32.mrb[0].mxu0
  %v1291 = vpop.f32.mrb[0].mxu0
  %v1292 = vadd.f32 %v1203, %v1291
  %v1293 = vpop.f32.mrb[0].mxu0
  %1294 = vmatprep.mubr.bf16.mxu0 %v1133
  %1295 = vmatmul.mubr.bf16.gmra.mrb[0].mxu0 %v1089
  %v1296 = vpop.f32.mrb[0].mxu0
  %v1297 = vadd.f32 %v1208, %v1296
  %v1298 = vpop.f32.mrb[0].mxu0
  %v1299 = vpop.f32.mrb[0].mxu0
  %v1300 = vadd.f32 %v1211, %v1299
  %v1301 = vpop.f32.mrb[0].mxu0
  %1302 = vmatprep.mubr.bf16.mxu0 %v1136
  %1303 = vmatmul.mubr.bf16.gmra.mrb[0].mxu0 %v1093
  %v1304 = vpop.f32.mrb[0].mxu0
  %v1305 = vadd.f32 %v1216, %v1304
  %v1306 = vpop.f32.mrb[0].mxu0
  %v1307 = vpop.f32.mrb[0].mxu0
  %v1308 = vadd.f32 %v1219, %v1307
  %v1309 = vpop.f32.mrb[0].mxu0
  %1310 = vmatprep.mubr.bf16.mxu0 %v1139
  %1311 = vmatmul.mubr.bf16.gmra.mrb[0].mxu0 %v1097
  %v1312 = vpop.f32.mrb[0].mxu0
  %v1313 = vadd.f32 %v1224, %v1312
  %v1314 = vpop.f32.mrb[0].mxu0
  %v1315 = vpop.f32.mrb[0].mxu0
  %v1316 = vadd.f32 %v1227, %v1315
  %v1317 = vpop.f32.mrb[0].mxu0
  %1318 = vdwg.mxu0
  %v1319 = vld [vmem:[%s3] sm:$0xff]
  %v1320 = vld [vmem:[%s3 + $0x8] sm:$0xff]
  %v1321 = vld [vmem:[%s3 + $0x10] sm:$0xff]
  %v1322 = vld [vmem:[%s3 + $0x18] sm:$0xff]
  %v1323 = vld [vmem:[%s3 + $0x20] sm:$0xff]
  %v1324 = vld [vmem:[%s3 + $0x28] sm:$0xff]
  %v1325 = vld [vmem:[%s3 + $0x30] sm:$0xff]
  %v1326 = vld [vmem:[%s3 + $0x38] sm:$0xff]
  %v1327 = vld [vmem:[%s3 + $0x40] sm:$0xff]
  %v1328 = vld [vmem:[%s3 + $0x48] sm:$0xff]
  %v1329 = vld [vmem:[%s3 + $0x50] sm:$0xff]
  %v1330 = vld [vmem:[%s3 + $0x58] sm:$0xff]
  %v1331 = vld [vmem:[%s3 + $0x60] sm:$0xff]
  %v1332 = vld [vmem:[%s3 + $0x68] sm:$0xff]
  %v1333 = vld [vmem:[%s3 + $0x70] sm:$0xff]
  %v1334 = vld [vmem:[%s3 + $0x78] sm:$0xff]
  %v1335 = vld [vmem:[%s3 + $0x80] sm:$0xff]
  %v1336 = vld [vmem:[%s3 + $0x88] sm:$0xff]
  %v1337 = vld [vmem:[%s3 + $0x90] sm:$0xff]
  %v1338 = vld [vmem:[%s3 + $0x98] sm:$0xff]
  %v1339 = vld [vmem:[%s3 + $0xa0] sm:$0xff]
  %v1340 = vld [vmem:[%s3 + $0xa8] sm:$0xff]
  %v1341 = vld [vmem:[%s3 + $0xb0] sm:$0xff]
  %v1342 = vld [vmem:[%s3 + $0xb8] sm:$0xff]
  %v1343 = vld [vmem:[%s3 + $0xc0] sm:$0xff]
  %v1344 = vld [vmem:[%s3 + $0xc8] sm:$0xff]
  %v1345 = vld [vmem:[%s3 + $0xd0] sm:$0xff]
  %v1346 = vld [vmem:[%s3 + $0xd8] sm:$0xff]
  %v1375 = vunpack.c.l.b16 %v1319
  %v1376 = vunpack.c.h.b16 %v1319
  %v1377 = vunpack.c.l.b16 %v1320
  %v1378 = vunpack.c.h.b16 %v1320
  %v1379 = vunpack.c.l.b16 %v1321
  %v1380 = vunpack.c.h.b16 %v1321
  %v1381 = vunpack.c.l.b16 %v1322
  %v1382 = vunpack.c.h.b16 %v1322
  %v1383 = vunpack.c.l.b16 %v1323
  %v1384 = vunpack.c.h.b16 %v1323
  %v1385 = vunpack.c.l.b16 %v1324
  %v1386 = vunpack.c.h.b16 %v1324
  %v1387 = vunpack.c.l.b16 %v1325
  %v1388 = vunpack.c.h.b16 %v1325
  %v1389 = vunpack.c.l.b16 %v1326
  %v1390 = vunpack.c.h.b16 %v1326
  %v1391 = vunpack.c.l.b16 %v1327
  %v1392 = vunpack.c.h.b16 %v1327
  %v1393 = vunpack.c.l.b16 %v1328
  %v1394 = vunpack.c.h.b16 %v1328
  %v1395 = vunpack.c.l.b16 %v1329
  %v1396 = vunpack.c.h.b16 %v1329
  %v1397 = vunpack.c.l.b16 %v1330
  %v1398 = vunpack.c.h.b16 %v1330
  %v1399 = vunpack.c.l.b16 %v1331
  %v1400 = vunpack.c.h.b16 %v1331
  %v1401 = vunpack.c.l.b16 %v1332
  %v1402 = vunpack.c.h.b16 %v1332
  %v1403 = vunpack.c.l.b16 %v1333
  %v1404 = vunpack.c.h.b16 %v1333
  %v1405 = vunpack.c.l.b16 %v1334
  %v1406 = vunpack.c.h.b16 %v1334
  %v1407 = vunpack.c.l.b16 %v1335
  %v1408 = vunpack.c.h.b16 %v1335
  %v1409 = vunpack.c.l.b16 %v1336
  %v1410 = vunpack.c.h.b16 %v1336
  %v1411 = vunpack.c.l.b16 %v1337
  %v1412 = vunpack.c.h.b16 %v1337
  %v1413 = vunpack.c.l.b16 %v1338
  %v1414 = vunpack.c.h.b16 %v1338
  %v1415 = vunpack.c.l.b16 %v1339
  %v1416 = vunpack.c.h.b16 %v1339
  %v1417 = vunpack.c.l.b16 %v1340
  %v1418 = vunpack.c.h.b16 %v1340
  %v1419 = vunpack.c.l.b16 %v1341
  %v1420 = vunpack.c.h.b16 %v1341
  %v1421 = vunpack.c.l.b16 %v1342
  %v1422 = vunpack.c.h.b16 %v1342
  %v1423 = vunpack.c.l.b16 %v1343
  %v1424 = vunpack.c.h.b16 %v1343
  %v1425 = vunpack.c.l.b16 %v1344
  %v1426 = vunpack.c.h.b16 %v1344
  %v1427 = vunpack.c.l.b16 %v1345
  %v1428 = vunpack.c.h.b16 %v1345
  %v1429 = vunpack.c.l.b16 %v1346
  %v1430 = vunpack.c.h.b16 %v1346
  %v1431 = vpack.c.b16 %v1379, %v1375
  %v1432 = vpack.c.b16 %v1380, %v1376
  %v1433 = vpack.c.b16 %v1381, %v1377
  %v1434 = vpack.c.b16 %v1382, %v1378
  %v1435 = vpack.c.b16 %v1387, %v1383
  %v1436 = vpack.c.b16 %v1388, %v1384
  %v1437 = vpack.c.b16 %v1389, %v1385
  %v1438 = vpack.c.b16 %v1390, %v1386
  %v1439 = vpack.c.b16 %v1395, %v1391
  %v1440 = vpack.c.b16 %v1396, %v1392
  %v1441 = vpack.c.b16 %v1397, %v1393
  %v1442 = vpack.c.b16 %v1398, %v1394
  %v1443 = vpack.c.b16 %v1403, %v1399
  %v1444 = vpack.c.b16 %v1404, %v1400
  %v1445 = vpack.c.b16 %v1405, %v1401
  %v1446 = vpack.c.b16 %v1406, %v1402
  %v1447 = vpack.c.b16 %v1411, %v1407
  %v1448 = vpack.c.b16 %v1412, %v1408
  %v1449 = vpack.c.b16 %v1413, %v1409
  %v1450 = vpack.c.b16 %v1414, %v1410
  %v1451 = vpack.c.b16 %v1419, %v1415
  %v1452 = vpack.c.b16 %v1420, %v1416
  %v1453 = vpack.c.b16 %v1421, %v1417
  %v1454 = vpack.c.b16 %v1422, %v1418
  %v1455 = vpack.c.b16 %v1427, %v1423
  %v1456 = vpack.c.b16 %v1428, %v1424
  %v1457 = vpack.c.b16 %v1429, %v1425
  %v1458 = vpack.c.b16 %v1430, %v1426
  %v1481 = vsel %vm385, %v1434, 0
  %v1484 = vsel %vm385, %v1438, 0
  %v1487 = vsel %vm385, %v1442, 0
  %v1490 = vsel %vm385, %v1446, 0
  %v1493 = vsel %vm385, %v1450, 0
  %v1496 = vsel %vm385, %v1454, 0
  %v1499 = vsel %vm385, %v1458, 0
  %1501 = vmatprep.subr.bf16.mxu0 0
  %1502 = vmatpush1.bf16.msra.mxu0 %v335
  %1503 = vmatprep.subr.bf16.mxu0 0
  %1504 = vmatpush1.bf16.msra.mxu0 %v336
  %1505 = vmatprep.subr.bf16.mxu0 0
  %1506 = vmatpush1.bf16.msra.mxu0 %v337
  %1507 = vmatprep.subr.bf16.mxu0 0
  %1508 = vmatpush1.bf16.msra.mxu0 %v338
  %1509 = vmatprep.subr.bf16.mxu0 0
  %1510 = vmatpush1.bf16.msra.mxu0 %v339
  %1511 = vmatprep.subr.bf16.mxu0 0
  %1512 = vmatpush1.bf16.msra.mxu0 %v340
  %1513 = vmatprep.subr.bf16.mxu0 0
  %1514 = vmatpush1.bf16.msra.mxu0 %v341
  %1515 = vmatprep.subr.bf16.mxu0 0
  %1516 = vmatpush1.bf16.msra.mxu0 %v342
  %1517 = vmatprep.subr.bf16.mxu0 0
  %1518 = vmatpush1.bf16.msra.mxu0 %v343
  %1519 = vmatprep.subr.bf16.mxu0 0
  %1520 = vmatpush1.bf16.msra.mxu0 %v344
  %1521 = vmatprep.subr.bf16.mxu0 0
  %1522 = vmatpush1.bf16.msra.mxu0 %v345
  %1523 = vmatprep.subr.bf16.mxu0 0
  %1524 = vmatpush1.bf16.msra.mxu0 %v346
  %1525 = vmatprep.subr.bf16.mxu0 0
  %1526 = vmatpush1.bf16.msra.mxu0 %v347
  %1527 = vmatprep.subr.bf16.mxu0 0
  %1528 = vmatpush1.bf16.msra.mxu0 %v348
  %1529 = vmatprep.subr.bf16.mxu0 0
  %1530 = vmatpush1.bf16.msra.mxu0 %v349
  %1531 = vmatprep.subr.bf16.mxu0 0
  %1532 = vmatpush1.bf16.msra.mxu0 %v350
  %1533 = vmatprep.mubr.bf16.mxu0 %v1432
  %1534 = vmatmul.mubr.bf16.gmra.mrb[0].mxu0 %v1431
  %v1535 = vpop.f32.mrb[0].mxu0
  %v1536 = vadd.f32 0.0, %v1535
  %v1537 = vpop.f32.mrb[0].mxu0
  %v1538 = vpop.f32.mrb[0].mxu0
  %v1539 = vadd.f32 0.0, %v1538
  %v1540 = vpop.f32.mrb[0].mxu0
  %1541 = vmatprep.mubr.bf16.mxu0 %v1436
  %1542 = vmatmul.mubr.bf16.gmra.mrb[0].mxu0 %v1435
  %v1543 = vpop.f32.mrb[0].mxu0
  %v1544 = vadd.f32 0.0, %v1543
  %v1545 = vpop.f32.mrb[0].mxu0
  %v1546 = vpop.f32.mrb[0].mxu0
  %v1547 = vadd.f32 0.0, %v1546
  %v1548 = vpop.f32.mrb[0].mxu0
  %1549 = vmatprep.mubr.bf16.mxu0 %v1440
  %1550 = vmatmul.mubr.bf16.gmra.mrb[0].mxu0 %v1439
  %v1551 = vpop.f32.mrb[0].mxu0
  %v1552 = vadd.f32 0.0, %v1551
  %v1553 = vpop.f32.mrb[0].mxu0
  %v1554 = vpop.f32.mrb[0].mxu0
  %v1555 = vadd.f32 0.0, %v1554
  %v1556 = vpop.f32.mrb[0].mxu0
  %1557 = vmatprep.mubr.bf16.mxu0 %v1444
  %1558 = vmatmul.mubr.bf16.gmra.mrb[0].mxu0 %v1443
  %v1559 = vpop.f32.mrb[0].mxu0
  %v1560 = vadd.f32 0.0, %v1559
  %v1561 = vpop.f32.mrb[0].mxu0
  %v1562 = vpop.f32.mrb[0].mxu0
  %v1563 = vadd.f32 0.0, %v1562
  %v1564 = vpop.f32.mrb[0].mxu0
  %1565 = vmatprep.mubr.bf16.mxu0 %v1448
  %1566 = vmatmul.mubr.bf16.gmra.mrb[0].mxu0 %v1447
  %v1567 = vpop.f32.mrb[0].mxu0
  %v1568 = vadd.f32 0.0, %v1567
  %v1569 = vpop.f32.mrb[0].mxu0
  %v1570 = vpop.f32.mrb[0].mxu0
  %v1571 = vadd.f32 0.0, %v1570
  %v1572 = vpop.f32.mrb[0].mxu0
  %1573 = vmatprep.mubr.bf16.mxu0 %v1452
  %1574 = vmatmul.mubr.bf16.gmra.mrb[0].mxu0 %v1451
  %v1575 = vpop.f32.mrb[0].mxu0
  %v1576 = vadd.f32 0.0, %v1575
  %v1577 = vpop.f32.mrb[0].mxu0
  %v1578 = vpop.f32.mrb[0].mxu0
  %v1579 = vadd.f32 0.0, %v1578
  %v1580 = vpop.f32.mrb[0].mxu0
  %1581 = vmatprep.mubr.bf16.mxu0 %v1456
  %1582 = vmatmul.mubr.bf16.gmra.mrb[0].mxu0 %v1455
  %v1583 = vpop.f32.mrb[0].mxu0
  %v1584 = vadd.f32 0.0, %v1583
  %v1585 = vpop.f32.mrb[0].mxu0
  %v1586 = vpop.f32.mrb[0].mxu0
  %v1587 = vadd.f32 0.0, %v1586
  %v1588 = vpop.f32.mrb[0].mxu0
  %1589 = vdwg.mxu0
  %1590 = vmatprep.subr.bf16.mxu0 0
  %1591 = vmatpush1.bf16.msra.mxu0 %v351
  %1592 = vmatprep.subr.bf16.mxu0 0
  %1593 = vmatpush1.bf16.msra.mxu0 %v352
  %1594 = vmatprep.subr.bf16.mxu0 0
  %1595 = vmatpush1.bf16.msra.mxu0 %v353
  %1596 = vmatprep.subr.bf16.mxu0 0
  %1597 = vmatpush1.bf16.msra.mxu0 %v354
  %1598 = vmatprep.subr.bf16.mxu0 0
  %1599 = vmatpush1.bf16.msra.mxu0 %v355
  %1600 = vmatprep.subr.bf16.mxu0 0
  %1601 = vmatpush1.bf16.msra.mxu0 %v356
  %1602 = vmatprep.subr.bf16.mxu0 0
  %1603 = vmatpush1.bf16.msra.mxu0 %v357
  %1604 = vmatprep.subr.bf16.mxu0 0
  %1605 = vmatpush1.bf16.msra.mxu0 %v358
  %1606 = vmatprep.subr.bf16.mxu0 0
  %1607 = vmatpush1.bf16.msra.mxu0 %v359
  %1608 = vmatprep.subr.bf16.mxu0 0
  %1609 = vmatpush1.bf16.msra.mxu0 0
  %1610 = vmatprep.subr.bf16.mxu0 0
  %1611 = vmatpush1.bf16.msra.mxu0 0
  %1612 = vmatprep.subr.bf16.mxu0 0
  %1613 = vmatpush1.bf16.msra.mxu0 0
  %1614 = vmatprep.subr.bf16.mxu0 0
  %1615 = vmatpush1.bf16.msra.mxu0 0
  %1616 = vmatprep.subr.bf16.mxu0 0
  %1617 = vmatpush1.bf16.msra.mxu0 0
  %1618 = vmatprep.subr.bf16.mxu0 0
  %1619 = vmatpush1.bf16.msra.mxu0 0
  %1620 = vmatprep.subr.bf16.mxu0 0
  %1621 = vmatpush1.bf16.msra.mxu0 0
  %1622 = vmatprep.mubr.bf16.mxu0 %v1481
  %1623 = vmatmul.mubr.bf16.gmra.mrb[0].mxu0 %v1433
  %v1624 = vpop.f32.mrb[0].mxu0
  %v1625 = vadd.f32 %v1536, %v1624
  %v1626 = vpop.f32.mrb[0].mxu0
  %v1627 = vpop.f32.mrb[0].mxu0
  %v1628 = vadd.f32 %v1539, %v1627
  %v1629 = vpop.f32.mrb[0].mxu0
  %1630 = vmatprep.mubr.bf16.mxu0 %v1484
  %1631 = vmatmul.mubr.bf16.gmra.mrb[0].mxu0 %v1437
  %v1632 = vpop.f32.mrb[0].mxu0
  %v1633 = vadd.f32 %v1544, %v1632
  %v1634 = vpop.f32.mrb[0].mxu0
  %v1635 = vpop.f32.mrb[0].mxu0
  %v1636 = vadd.f32 %v1547, %v1635
  %v1637 = vpop.f32.mrb[0].mxu0
  %1638 = vmatprep.mubr.bf16.mxu0 %v1487
  %1639 = vmatmul.mubr.bf16.gmra.mrb[0].mxu0 %v1441
  %v1640 = vpop.f32.mrb[0].mxu0
  %v1641 = vadd.f32 %v1552, %v1640
  %v1642 = vpop.f32.mrb[0].mxu0
  %v1643 = vpop.f32.mrb[0].mxu0
  %v1644 = vadd.f32 %v1555, %v1643
  %v1645 = vpop.f32.mrb[0].mxu0
  %1646 = vmatprep.mubr.bf16.mxu0 %v1490
  %1647 = vmatmul.mubr.bf16.gmra.mrb[0].mxu0 %v1445
  %v1648 = vpop.f32.mrb[0].mxu0
  %v1649 = vadd.f32 %v1560, %v1648
  %v1650 = vpop.f32.mrb[0].mxu0
  %v1651 = vpop.f32.mrb[0].mxu0
  %v1652 = vadd.f32 %v1563, %v1651
  %v1653 = vpop.f32.mrb[0].mxu0
  %1654 = vmatprep.mubr.bf16.mxu0 %v1493
  %1655 = vmatmul.mubr.bf16.gmra.mrb[0].mxu0 %v1449
  %v1656 = vpop.f32.mrb[0].mxu0
  %v1657 = vadd.f32 %v1568, %v1656
  %v1658 = vpop.f32.mrb[0].mxu0
  %v1659 = vpop.f32.mrb[0].mxu0
  %v1660 = vadd.f32 %v1571, %v1659
  %v1661 = vpop.f32.mrb[0].mxu0
  %1662 = vmatprep.mubr.bf16.mxu0 %v1496
  %1663 = vmatmul.mubr.bf16.gmra.mrb[0].mxu0 %v1453
  %v1664 = vpop.f32.mrb[0].mxu0
  %v1665 = vadd.f32 %v1576, %v1664
  %v1666 = vpop.f32.mrb[0].mxu0
  %v1667 = vpop.f32.mrb[0].mxu0
  %v1668 = vadd.f32 %v1579, %v1667
  %v1669 = vpop.f32.mrb[0].mxu0
  %1670 = vmatprep.mubr.bf16.mxu0 %v1499
  %1671 = vmatmul.mubr.bf16.gmra.mrb[0].mxu0 %v1457
  %v1672 = vpop.f32.mrb[0].mxu0
  %v1673 = vadd.f32 %v1584, %v1672
  %v1674 = vpop.f32.mrb[0].mxu0
  %v1675 = vpop.f32.mrb[0].mxu0
  %v1676 = vadd.f32 %v1587, %v1675
  %v1677 = vpop.f32.mrb[0].mxu0
  %1678 = vdwg.mxu0
  %v1679 = vmax.f32 %v1265, %v1625
  %v1680 = vmax.f32 %v1268, %v1628
  %v1681 = vmax.f32 %v1273, %v1633
  %v1682 = vmax.f32 %v1276, %v1636
  %v1683 = vmax.f32 %v1281, %v1641
  %v1684 = vmax.f32 %v1284, %v1644
  %v1685 = vmax.f32 %v1289, %v1649
  %v1686 = vmax.f32 %v1292, %v1652
  %v1687 = vmax.f32 %v1297, %v1657
  %v1688 = vmax.f32 %v1300, %v1660
  %v1689 = vmax.f32 %v1305, %v1665
  %v1690 = vmax.f32 %v1308, %v1668
  %v1691 = vmax.f32 %v1313, %v1673
  %v1692 = vmax.f32 %v1316, %v1676
  %v1693 = vmax.f32 %v945, %v1679
  %v1694 = vmax.f32 %v946, %v1680
  %v1695 = vmax.f32 %v947, %v1681
  %v1696 = vmax.f32 %v948, %v1682
  %v1697 = vmax.f32 %v949, %v1683
  %v1698 = vmax.f32 %v950, %v1684
  %v1699 = vmax.f32 %v951, %v1685
  %v1700 = vmax.f32 %v952, %v1686
  %v1701 = vmax.f32 %v953, %v1687
  %v1702 = vmax.f32 %v954, %v1688
  %v1703 = vmax.f32 %v955, %v1689
  %v1704 = vmax.f32 %v956, %v1690
  %v1705 = vmax.f32 %v957, %v1691
  %v1706 = vmax.f32 %v958, %v1692
  %v1707 = vld [vmem:[%s5] sm:$0x1]
  %v1709 = vlaneseq
  %v1710 = vshrl.u32 %v1709, 7
  %v1711 = vsub.s32 0, %v1710
  %v1712 = vrot.slane %v1707, %v1711
  %v1714 = vadd.f32 %v1693, %v1712
  %v1715 = vadd.f32 %v1694, %v1712
  %v1716 = vadd.f32 %v1695, %v1712
  %v1717 = vadd.f32 %v1696, %v1712
  %v1718 = vadd.f32 %v1697, %v1712
  %v1719 = vadd.f32 %v1698, %v1712
  %v1720 = vadd.f32 %v1699, %v1712
  %v1721 = vadd.f32 %v1700, %v1712
  %v1722 = vadd.f32 %v1701, %v1712
  %v1723 = vadd.f32 %v1702, %v1712
  %v1724 = vadd.f32 %v1703, %v1712
  %v1725 = vadd.f32 %v1704, %v1712
  %v1726 = vadd.f32 %v1705, %v1712
  %v1727 = vadd.f32 %v1706, %v1712
  %v1728 = vmax.f32 %v1714, 0.0
  %v1729 = vmax.f32 %v1715, 0.0
  %v1730 = vmax.f32 %v1716, 0.0
  %v1731 = vmax.f32 %v1717, 0.0
  %v1732 = vmax.f32 %v1718, 0.0
  %v1733 = vmax.f32 %v1719, 0.0
  %v1734 = vmax.f32 %v1720, 0.0
  %v1735 = vmax.f32 %v1721, 0.0
  %v1736 = vmax.f32 %v1722, 0.0
  %v1737 = vmax.f32 %v1723, 0.0
  %v1738 = vmax.f32 %v1724, 0.0
  %v1739 = vmax.f32 %v1725, 0.0
  %v1740 = vmax.f32 %v1726, 0.0
  %v1741 = vmax.f32 %v1727, 0.0
  %v1742 = vpack.c.bf16 %v1729, %v1728
  %v1743 = vpack.c.bf16 %v1731, %v1730
  %v1744 = vpack.c.bf16 %v1733, %v1732
  %v1745 = vpack.c.bf16 %v1735, %v1734
  %v1746 = vpack.c.bf16 %v1737, %v1736
  %v1747 = vpack.c.bf16 %v1739, %v1738
  %v1748 = vpack.c.bf16 %v1741, %v1740
  %v1756 = vunpack.c.l.b16 %v1742
  %v1757 = vunpack.c.h.b16 %v1742
  %v1758 = vunpack.c.l.b16 %v1743
  %v1759 = vunpack.c.h.b16 %v1743
  %v1760 = vunpack.c.l.b16 %v1744
  %v1761 = vunpack.c.h.b16 %v1744
  %v1762 = vunpack.c.l.b16 %v1745
  %v1763 = vunpack.c.h.b16 %v1745
  %v1764 = vunpack.c.l.b16 %v1746
  %v1765 = vunpack.c.h.b16 %v1746
  %v1766 = vunpack.c.l.b16 %v1747
  %v1767 = vunpack.c.h.b16 %v1747
  %v1768 = vunpack.c.l.b16 %v1748
  %v1769 = vunpack.c.h.b16 %v1748
  %v1770 = vpack.c.b16 %v1756, %v1756
  %v1771 = vpack.c.b16 %v1757, %v1757
  %v1772 = vpack.c.b16 %v1758, %v1758
  %v1773 = vpack.c.b16 %v1759, %v1759
  %v1774 = vpack.c.b16 %v1760, %v1760
  %v1775 = vpack.c.b16 %v1761, %v1761
  %v1776 = vpack.c.b16 %v1762, %v1762
  %v1777 = vpack.c.b16 %v1763, %v1763
  %v1778 = vpack.c.b16 %v1764, %v1764
  %v1779 = vpack.c.b16 %v1765, %v1765
  %v1780 = vpack.c.b16 %v1766, %v1766
  %v1781 = vpack.c.b16 %v1767, %v1767
  %v1782 = vpack.c.b16 %v1768, %v1768
  %v1783 = vpack.c.b16 %v1769, %v1769
  %vm1798 = vcmask 257024
  %1799 = vst.msk [vmem:[%s6] sm:$0xf] %vm1798, %v1770
  %1800 = vst.msk [vmem:[%s6 + $0x4] sm:$0xf] %vm1798, %v1771
  %1801 = vst.msk [vmem:[%s6 + $0x8] sm:$0xf] %vm1798, %v1772
  %1802 = vst.msk [vmem:[%s6 + $0xc] sm:$0xf] %vm1798, %v1773
  %1803 = vst.msk [vmem:[%s6 + $0x10] sm:$0xf] %vm1798, %v1774
  %1804 = vst.msk [vmem:[%s6 + $0x14] sm:$0xf] %vm1798, %v1775
  %1805 = vst.msk [vmem:[%s6 + $0x18] sm:$0xf] %vm1798, %v1776
  %1806 = vst.msk [vmem:[%s6 + $0x1c] sm:$0xf] %vm1798, %v1777
  %1807 = vst.msk [vmem:[%s6 + $0x20] sm:$0xf] %vm1798, %v1778
  %1808 = vst.msk [vmem:[%s6 + $0x24] sm:$0xf] %vm1798, %v1779
  %1809 = vst.msk [vmem:[%s6 + $0x28] sm:$0xf] %vm1798, %v1780
  %1810 = vst.msk [vmem:[%s6 + $0x2c] sm:$0xf] %vm1798, %v1781
  %1811 = vst.msk [vmem:[%s6 + $0x30] sm:$0xf] %vm1798, %v1782
  %1812 = vst.msk [vmem:[%s6 + $0x34] sm:$0xf] %vm1798, %v1783
  // Predicated region
  $region26: #{cnn_forward.4} parent=0 // pred_check
    _
  $region27: #{cnn_forward.4} parent=0 // pred_check_branch
    %1814 = sbr.rel (0) target = $region29
  $region28: #{cnn_forward.4} parent=0 // pred_region
    _
  $region29: #{cnn_forward.4} parent=0 // pred_fallthru
    _
  // Predicated region
  $region30: #{cnn_forward.4} parent=0 // pred_check
    _
  $region31: #{cnn_forward.4} parent=0 // pred_check_branch
    %1816 = sbr.rel (0) target = $region33
  $region32: #{cnn_forward.4} parent=0 // pred_region
    _
  $region33: #{cnn_forward.4} parent=0 // pred_fallthru
    _

// kernel: cnn_forward.5
$region0: #{cnn_forward.5}
  #allocation0 [shape = 'u32[]', space=smem, size = 0x4, offset = 0x4, fixed_abs, tag = 'smem constant byte address 0x4 - core index']
  #allocation1 [shape = 'u32[144,128]{1,0:T(1,128)}', space=vmem, size = 0x12000, scoped, tag = 'internal scratch']
  %s0 = inlined_call_operand.vmem [shape: bf16[16,1568], index: 0, kind: input, shape index: {}]
  %s1 = inlined_call_operand.vmem [shape: bf16[1568,128], index: 1, kind: input, shape index: {}]
  %s2 = inlined_call_operand.vmem [shape: f32[1,128], index: 2, kind: input, shape index: {}]
  %s3 = inlined_call_operand.vmem [shape: f32[16,128], index: 3, kind: output, shape index: {}]
  %s4 = sld [smem:[#allocation0]]
  $region22: #{cnn_forward.5} parent=0
    _
  %s6 = ssub.s32 1, %s4
  %s7 = scalar_select 0, %s6, %s4
  // Predicated region
  $region2: #{cnn_forward.5} parent=0 // pred_check
    _
  $region3: #{cnn_forward.5} parent=0 // pred_check_branch
    %9 = sbr.rel (0) target = $region5
  $region4: #{cnn_forward.5} parent=0 // pred_region
    _
  $region5: #{cnn_forward.5} parent=0 // pred_fallthru
    _
  // Predicated region
  $region6: #{cnn_forward.5} parent=0 // pred_check
    _
  $region7: #{cnn_forward.5} parent=0 // pred_check_branch
    %11 = sbr.rel (0) target = $region9
  $region8: #{cnn_forward.5} parent=0 // pred_region
    _
  $region9: #{cnn_forward.5} parent=0 // pred_fallthru
    _
  // Predicated region
  $region10: #{cnn_forward.5} parent=0 // pred_check
    _
  $region11: #{cnn_forward.5} parent=0 // pred_check_branch
    %13 = sbr.rel (0) target = $region13
  $region12: #{cnn_forward.5} parent=0 // pred_region
    _
  $region13: #{cnn_forward.5} parent=0 // pred_fallthru
    _
  %v15 = vld [vmem:[%s0] sm:$0xff]
  %v16 = vld [vmem:[%s0 + $0x8] sm:$0xff]
  %v17 = vld [vmem:[%s0 + $0x10] sm:$0xff]
  %v18 = vld [vmem:[%s0 + $0x18] sm:$0xff]
  %v19 = vld [vmem:[%s0 + $0x20] sm:$0xff]
  %v20 = vld [vmem:[%s0 + $0x28] sm:$0xff]
  %v21 = vld [vmem:[%s0 + $0x30] sm:$0xf]
  %v22 = vld [vmem:[%s0 + $0x34] sm:$0xff]
  %v23 = vld [vmem:[%s0 + $0x3c] sm:$0xff]
  %v24 = vld [vmem:[%s0 + $0x44] sm:$0xff]
  %v25 = vld [vmem:[%s0 + $0x4c] sm:$0xff]
  %v26 = vld [vmem:[%s0 + $0x54] sm:$0xff]
  %v27 = vld [vmem:[%s0 + $0x5c] sm:$0xff]
  %v28 = vld [vmem:[%s0 + $0x64] sm:$0xf]
  %v29 = vld [vmem:[%s1] sm:$0xf]
  %v30 = vld [vmem:[%s1 + $0x4] sm:$0xf]
  %v31 = vld [vmem:[%s1 + $0x8] sm:$0xf]
  %v32 = vld [vmem:[%s1 + $0xc] sm:$0xf]
  %v33 = vld [vmem:[%s1 + $0x10] sm:$0xf]
  %v34 = vld [vmem:[%s1 + $0x14] sm:$0xf]
  %v35 = vld [vmem:[%s1 + $0x18] sm:$0xf]
  %v36 = vld [vmem:[%s1 + $0x1c] sm:$0xf]
  %v37 = vld [vmem:[%s1 + $0x20] sm:$0xf]
  %v38 = vld [vmem:[%s1 + $0x24] sm:$0xf]
  %v39 = vld [vmem:[%s1 + $0x28] sm:$0xf]
  %v40 = vld [vmem:[%s1 + $0x2c] sm:$0xf]
  %v41 = vld [vmem:[%s1 + $0x30] sm:$0xf]
  %v42 = vld [vmem:[%s1 + $0x34] sm:$0xf]
  %v43 = vld [vmem:[%s1 + $0x38] sm:$0xf]
  %v44 = vld [vmem:[%s1 + $0x3c] sm:$0xf]
  %v45 = vld [vmem:[%s1 + $0x40] sm:$0xf]
  %v46 = vld [vmem:[%s1 + $0x44] sm:$0xf]
  %v47 = vld [vmem:[%s1 + $0x48] sm:$0xf]
  %v48 = vld [vmem:[%s1 + $0x4c] sm:$0xf]
  %v49 = vld [vmem:[%s1 + $0x50] sm:$0xf]
  %v50 = vld [vmem:[%s1 + $0x54] sm:$0xf]
  %v51 = vld [vmem:[%s1 + $0x58] sm:$0xf]
  %v52 = vld [vmem:[%s1 + $0x5c] sm:$0xf]
  %v53 = vld [vmem:[%s1 + $0x60] sm:$0xf]
  %v54 = vld [vmem:[%s1 + $0x64] sm:$0xf]
  %v55 = vld [vmem:[%s1 + $0x68] sm:$0xf]
  %v56 = vld [vmem:[%s1 + $0x6c] sm:$0xf]
  %v57 = vld [vmem:[%s1 + $0x70] sm:$0xf]
  %v58 = vld [vmem:[%s1 + $0x74] sm:$0xf]
  %v59 = vld [vmem:[%s1 + $0x78] sm:$0xf]
  %v60 = vld [vmem:[%s1 + $0x7c] sm:$0xf]
  %v61 = vld [vmem:[%s1 + $0x80] sm:$0xf]
  %v62 = vld [vmem:[%s1 + $0x84] sm:$0xf]
  %v63 = vld [vmem:[%s1 + $0x88] sm:$0xf]
  %v64 = vld [vmem:[%s1 + $0x8c] sm:$0xf]
  %v65 = vld [vmem:[%s1 + $0x90] sm:$0xf]
  %v66 = vld [vmem:[%s1 + $0x94] sm:$0xf]
  %v67 = vld [vmem:[%s1 + $0x98] sm:$0xf]
  %v68 = vld [vmem:[%s1 + $0x9c] sm:$0xf]
  %v69 = vld [vmem:[%s1 + $0xa0] sm:$0xf]
  %v70 = vld [vmem:[%s1 + $0xa4] sm:$0xf]
  %v71 = vld [vmem:[%s1 + $0xa8] sm:$0xf]
  %v72 = vld [vmem:[%s1 + $0xac] sm:$0xf]
  %v73 = vld [vmem:[%s1 + $0xb0] sm:$0xf]
  %v74 = vld [vmem:[%s1 + $0xb4] sm:$0xf]
  %v75 = vld [vmem:[%s1 + $0xb8] sm:$0xf]
  %v76 = vld [vmem:[%s1 + $0xbc] sm:$0xf]
  %v77 = vld [vmem:[%s1 + $0xc0] sm:$0xf]
  %v78 = vld [vmem:[%s1 + $0xc4] sm:$0xf]
  %v79 = vld [vmem:[%s1 + $0xc8] sm:$0xf]
  %v80 = vld [vmem:[%s1 + $0xcc] sm:$0xf]
  %v81 = vld [vmem:[%s1 + $0xd0] sm:$0xf]
  %v82 = vld [vmem:[%s1 + $0xd4] sm:$0xf]
  %v83 = vld [vmem:[%s1 + $0xd8] sm:$0xf]
  %v84 = vld [vmem:[%s1 + $0xdc] sm:$0xf]
  %v85 = vld [vmem:[%s1 + $0xe0] sm:$0xf]
  %v86 = vld [vmem:[%s1 + $0xe4] sm:$0xf]
  %v87 = vld [vmem:[%s1 + $0xe8] sm:$0xf]
  %v88 = vld [vmem:[%s1 + $0xec] sm:$0xf]
  %v89 = vld [vmem:[%s1 + $0xf0] sm:$0xf]
  %v90 = vld [vmem:[%s1 + $0xf4] sm:$0xf]
  %v91 = vld [vmem:[%s1 + $0xf8] sm:$0xf]
  %v92 = vld [vmem:[%s1 + $0xfc] sm:$0xf]
  %v93 = vld [vmem:[%s1 + $0x100] sm:$0xf]
  %v94 = vld [vmem:[%s1 + $0x104] sm:$0xf]
  %v95 = vld [vmem:[%s1 + $0x108] sm:$0xf]
  %v96 = vld [vmem:[%s1 + $0x10c] sm:$0xf]
  %v97 = vld [vmem:[%s1 + $0x110] sm:$0xf]
  %v98 = vld [vmem:[%s1 + $0x114] sm:$0xf]
  %v99 = vld [vmem:[%s1 + $0x118] sm:$0xf]
  %v100 = vld [vmem:[%s1 + $0x11c] sm:$0xf]
  %v101 = vld [vmem:[%s1 + $0x120] sm:$0xf]
  %v102 = vld [vmem:[%s1 + $0x124] sm:$0xf]
  %v103 = vld [vmem:[%s1 + $0x128] sm:$0xf]
  %v104 = vld [vmem:[%s1 + $0x12c] sm:$0xf]
  %v105 = vld [vmem:[%s1 + $0x130] sm:$0xf]
  %v106 = vld [vmem:[%s1 + $0x134] sm:$0xf]
  %v107 = vld [vmem:[%s1 + $0x138] sm:$0xf]
  %v108 = vld [vmem:[%s1 + $0x13c] sm:$0xf]
  %v109 = vld [vmem:[%s1 + $0x140] sm:$0xf]
  %v110 = vld [vmem:[%s1 + $0x144] sm:$0xf]
  %v111 = vld [vmem:[%s1 + $0x148] sm:$0xf]
  %v112 = vld [vmem:[%s1 + $0x14c] sm:$0xf]
  %v113 = vld [vmem:[%s1 + $0x150] sm:$0xf]
  %v114 = vld [vmem:[%s1 + $0x154] sm:$0xf]
  %v115 = vld [vmem:[%s1 + $0x158] sm:$0xf]
  %v116 = vld [vmem:[%s1 + $0x15c] sm:$0xf]
  %v117 = vld [vmem:[%s1 + $0x160] sm:$0xf]
  %v118 = vld [vmem:[%s1 + $0x164] sm:$0xf]
  %v119 = vld [vmem:[%s1 + $0x168] sm:$0xf]
  %v120 = vld [vmem:[%s1 + $0x16c] sm:$0xf]
  %v121 = vld [vmem:[%s1 + $0x170] sm:$0xf]
  %v122 = vld [vmem:[%s1 + $0x174] sm:$0xf]
  %v123 = vld [vmem:[%s1 + $0x178] sm:$0xf]
  %v124 = vld [vmem:[%s1 + $0x17c] sm:$0xf]
  %v125 = vld [vmem:[%s1 + $0x180] sm:$0xf]
  %v126 = vld [vmem:[%s1 + $0x184] sm:$0xf]
  %v127 = vld [vmem:[%s1 + $0x188] sm:$0xf]
  %v128 = vld [vmem:[%s1 + $0x18c] sm:$0xf]
  %v129 = vld [vmem:[%s1 + $0x190] sm:$0xf]
  %v130 = vld [vmem:[%s1 + $0x194] sm:$0xf]
  %v131 = vld [vmem:[%s1 + $0x198] sm:$0xf]
  %v132 = vld [vmem:[%s1 + $0x19c] sm:$0xf]
  %v133 = vld [vmem:[%s1 + $0x1a0] sm:$0xf]
  %v134 = vld [vmem:[%s1 + $0x1a4] sm:$0xf]
  %v135 = vld [vmem:[%s1 + $0x1a8] sm:$0xf]
  %v136 = vld [vmem:[%s1 + $0x1ac] sm:$0xf]
  %v137 = vld [vmem:[%s1 + $0x1b0] sm:$0xf]
  %v138 = vld [vmem:[%s1 + $0x1b4] sm:$0xf]
  %v139 = vld [vmem:[%s1 + $0x1b8] sm:$0xf]
  %v140 = vld [vmem:[%s1 + $0x1bc] sm:$0xf]
  %v141 = vld [vmem:[%s1 + $0x1c0] sm:$0xf]
  %v142 = vld [vmem:[%s1 + $0x1c4] sm:$0xf]
  %v143 = vld [vmem:[%s1 + $0x1c8] sm:$0xf]
  %v144 = vld [vmem:[%s1 + $0x1cc] sm:$0xf]
  %v145 = vld [vmem:[%s1 + $0x1d0] sm:$0xf]
  %v146 = vld [vmem:[%s1 + $0x1d4] sm:$0xf]
  %v147 = vld [vmem:[%s1 + $0x1d8] sm:$0xf]
  %v148 = vld [vmem:[%s1 + $0x1dc] sm:$0xf]
  %v149 = vld [vmem:[%s1 + $0x1e0] sm:$0xf]
  %v150 = vld [vmem:[%s1 + $0x1e4] sm:$0xf]
  %v151 = vld [vmem:[%s1 + $0x1e8] sm:$0xf]
  %v152 = vld [vmem:[%s1 + $0x1ec] sm:$0xf]
  %v153 = vld [vmem:[%s1 + $0x1f0] sm:$0xf]
  %v154 = vld [vmem:[%s1 + $0x1f4] sm:$0xf]
  %v155 = vld [vmem:[%s1 + $0x1f8] sm:$0xf]
  %v156 = vld [vmem:[%s1 + $0x1fc] sm:$0xf]
  %v157 = vld [vmem:[%s1 + $0x200] sm:$0xf]
  %v158 = vld [vmem:[%s1 + $0x204] sm:$0xf]
  %v159 = vld [vmem:[%s1 + $0x208] sm:$0xf]
  %v160 = vld [vmem:[%s1 + $0x20c] sm:$0xf]
  %v161 = vld [vmem:[%s1 + $0x210] sm:$0xf]
  %v162 = vld [vmem:[%s1 + $0x214] sm:$0xf]
  %v163 = vld [vmem:[%s1 + $0x218] sm:$0xf]
  %v164 = vld [vmem:[%s1 + $0x21c] sm:$0xf]
  %v165 = vld [vmem:[%s1 + $0x220] sm:$0xf]
  %v166 = vld [vmem:[%s1 + $0x224] sm:$0xf]
  %v167 = vld [vmem:[%s1 + $0x228] sm:$0xf]
  %v168 = vld [vmem:[%s1 + $0x22c] sm:$0xf]
  %v169 = vld [vmem:[%s1 + $0x230] sm:$0xf]
  %v170 = vld [vmem:[%s1 + $0x234] sm:$0xf]
  %v171 = vld [vmem:[%s1 + $0x238] sm:$0xf]
  %v172 = vld [vmem:[%s1 + $0x23c] sm:$0xf]
  %v173 = vld [vmem:[%s1 + $0x240] sm:$0xf]
  %v174 = vld [vmem:[%s1 + $0x244] sm:$0xf]
  %v175 = vld [vmem:[%s1 + $0x248] sm:$0xf]
  %v176 = vld [vmem:[%s1 + $0x24c] sm:$0xf]
  %v177 = vld [vmem:[%s1 + $0x250] sm:$0xf]
  %v178 = vld [vmem:[%s1 + $0x254] sm:$0xf]
  %v179 = vld [vmem:[%s1 + $0x258] sm:$0xf]
  %v180 = vld [vmem:[%s1 + $0x25c] sm:$0xf]
  %v181 = vld [vmem:[%s1 + $0x260] sm:$0xf]
  %v182 = vld [vmem:[%s1 + $0x264] sm:$0xf]
  %v183 = vld [vmem:[%s1 + $0x268] sm:$0xf]
  %v184 = vld [vmem:[%s1 + $0x26c] sm:$0xf]
  %v185 = vld [vmem:[%s1 + $0x270] sm:$0xf]
  %v186 = vld [vmem:[%s1 + $0x274] sm:$0xf]
  %v187 = vld [vmem:[%s1 + $0x278] sm:$0xf]
  %v188 = vld [vmem:[%s1 + $0x27c] sm:$0xf]
  %v189 = vld [vmem:[%s1 + $0x280] sm:$0xf]
  %v190 = vld [vmem:[%s1 + $0x284] sm:$0xf]
  %v191 = vld [vmem:[%s1 + $0x288] sm:$0xf]
  %v192 = vld [vmem:[%s1 + $0x28c] sm:$0xf]
  %v193 = vld [vmem:[%s1 + $0x290] sm:$0xf]
  %v194 = vld [vmem:[%s1 + $0x294] sm:$0xf]
  %v195 = vld [vmem:[%s1 + $0x298] sm:$0xf]
  %v196 = vld [vmem:[%s1 + $0x29c] sm:$0xf]
  %v197 = vld [vmem:[%s1 + $0x2a0] sm:$0xf]
  %v198 = vld [vmem:[%s1 + $0x2a4] sm:$0xf]
  %v199 = vld [vmem:[%s1 + $0x2a8] sm:$0xf]
  %v200 = vld [vmem:[%s1 + $0x2ac] sm:$0xf]
  %v201 = vld [vmem:[%s1 + $0x2b0] sm:$0xf]
  %v202 = vld [vmem:[%s1 + $0x2b4] sm:$0xf]
  %v203 = vld [vmem:[%s1 + $0x2b8] sm:$0xf]
  %v204 = vld [vmem:[%s1 + $0x2bc] sm:$0xf]
  %v205 = vld [vmem:[%s1 + $0x2c0] sm:$0xf]
  %v206 = vld [vmem:[%s1 + $0x2c4] sm:$0xf]
  %v207 = vld [vmem:[%s1 + $0x2c8] sm:$0xf]
  %v208 = vld [vmem:[%s1 + $0x2cc] sm:$0xf]
  %v209 = vld [vmem:[%s1 + $0x2d0] sm:$0xf]
  %v210 = vld [vmem:[%s1 + $0x2d4] sm:$0xf]
  %v211 = vld [vmem:[%s1 + $0x2d8] sm:$0xf]
  %v212 = vld [vmem:[%s1 + $0x2dc] sm:$0xf]
  %v213 = vld [vmem:[%s1 + $0x2e0] sm:$0xf]
  %v214 = vld [vmem:[%s1 + $0x2e4] sm:$0xf]
  %v215 = vld [vmem:[%s1 + $0x2e8] sm:$0xf]
  %v216 = vld [vmem:[%s1 + $0x2ec] sm:$0xf]
  %v217 = vld [vmem:[%s1 + $0x2f0] sm:$0xf]
  %v218 = vld [vmem:[%s1 + $0x2f4] sm:$0xf]
  %v219 = vld [vmem:[%s1 + $0x2f8] sm:$0xf]
  %v220 = vld [vmem:[%s1 + $0x2fc] sm:$0xf]
  %v221 = vld [vmem:[%s1 + $0x300] sm:$0xf]
  %v222 = vld [vmem:[%s1 + $0x304] sm:$0xf]
  %v223 = vld [vmem:[%s1 + $0x308] sm:$0xf]
  %v224 = vld [vmem:[%s1 + $0x30c] sm:$0xf]
  %v225 = vld [vmem:[%s2] sm:$0x1]
  %v227 = vlaneseq
  %v228 = vshrl.u32 %v227, 7
  %v229 = vsub.s32 0, %v228
  %v230 = vrot.slane %v225, %v229
  %v246 = vunpack.c.l.b16 %v15
  %v247 = vunpack.c.h.b16 %v15
  %v248 = vunpack.c.l.b16 %v16
  %v249 = vunpack.c.h.b16 %v16
  %v250 = vunpack.c.l.b16 %v17
  %v251 = vunpack.c.h.b16 %v17
  %v252 = vunpack.c.l.b16 %v18
  %v253 = vunpack.c.h.b16 %v18
  %v254 = vunpack.c.l.b16 %v19
  %v255 = vunpack.c.h.b16 %v19
  %v256 = vunpack.c.l.b16 %v20
  %v257 = vunpack.c.h.b16 %v20
  %v258 = vunpack.c.l.b16 %v21
  %v259 = vunpack.c.l.b16 %v22
  %v260 = vunpack.c.h.b16 %v22
  %v261 = vunpack.c.l.b16 %v23
  %v262 = vunpack.c.h.b16 %v23
  %v263 = vunpack.c.l.b16 %v24
  %v264 = vunpack.c.h.b16 %v24
  %v265 = vunpack.c.l.b16 %v25
  %v266 = vunpack.c.h.b16 %v25
  %v267 = vunpack.c.l.b16 %v26
  %v268 = vunpack.c.h.b16 %v26
  %v269 = vunpack.c.l.b16 %v27
  %v270 = vunpack.c.h.b16 %v27
  %v271 = vunpack.c.l.b16 %v28
  %v272 = vpack.c.b16 %v259, %v246
  %v273 = vpack.c.b16 %v260, %v247
  %v274 = vpack.c.b16 %v261, %v248
  %v275 = vpack.c.b16 %v262, %v249
  %v276 = vpack.c.b16 %v263, %v250
  %v277 = vpack.c.b16 %v264, %v251
  %v278 = vpack.c.b16 %v265, %v252
  %v279 = vpack.c.b16 %v266, %v253
  %v280 = vpack.c.b16 %v267, %v254
  %v281 = vpack.c.b16 %v268, %v255
  %v282 = vpack.c.b16 %v269, %v256
  %v283 = vpack.c.b16 %v270, %v257
  %v284 = vpack.c.b16 %v271, %v258
  %v493 = vunpack.c.l.b16 %v29
  %v494 = vunpack.c.l.b16 %v30
  %v495 = vunpack.c.l.b16 %v31
  %v496 = vunpack.c.l.b16 %v32
  %v497 = vunpack.c.l.b16 %v33
  %v498 = vunpack.c.l.b16 %v34
  %v499 = vunpack.c.l.b16 %v35
  %v500 = vunpack.c.l.b16 %v36
  %v501 = vunpack.c.l.b16 %v37
  %v502 = vunpack.c.l.b16 %v38
  %v503 = vunpack.c.l.b16 %v39
  %v504 = vunpack.c.l.b16 %v40
  %v505 = vunpack.c.l.b16 %v41
  %v506 = vunpack.c.l.b16 %v42
  %v507 = vunpack.c.l.b16 %v43
  %v508 = vunpack.c.l.b16 %v44
  %v509 = vunpack.c.l.b16 %v45
  %v510 = vunpack.c.l.b16 %v46
  %v511 = vunpack.c.l.b16 %v47
  %v512 = vunpack.c.l.b16 %v48
  %v513 = vunpack.c.l.b16 %v49
  %v514 = vunpack.c.l.b16 %v50
  %v515 = vunpack.c.l.b16 %v51
  %v516 = vunpack.c.l.b16 %v52
  %v517 = vunpack.c.l.b16 %v53
  %v518 = vunpack.c.l.b16 %v54
  %v519 = vunpack.c.l.b16 %v55
  %v520 = vunpack.c.l.b16 %v56
  %v521 = vunpack.c.l.b16 %v57
  %v522 = vunpack.c.l.b16 %v58
  %v523 = vunpack.c.l.b16 %v59
  %v524 = vunpack.c.l.b16 %v60
  %v525 = vunpack.c.l.b16 %v61
  %v526 = vunpack.c.l.b16 %v62
  %v527 = vunpack.c.l.b16 %v63
  %v528 = vunpack.c.l.b16 %v64
  %v529 = vunpack.c.l.b16 %v65
  %v530 = vunpack.c.l.b16 %v66
  %v531 = vunpack.c.l.b16 %v67
  %v532 = vunpack.c.l.b16 %v68
  %v533 = vunpack.c.l.b16 %v69
  %v534 = vunpack.c.l.b16 %v70
  %v535 = vunpack.c.l.b16 %v71
  %v536 = vunpack.c.l.b16 %v72
  %v537 = vunpack.c.l.b16 %v73
  %v538 = vunpack.c.l.b16 %v74
  %v539 = vunpack.c.l.b16 %v75
  %v540 = vunpack.c.l.b16 %v76
  %v541 = vunpack.c.l.b16 %v77
  %v542 = vunpack.c.l.b16 %v78
  %v543 = vunpack.c.l.b16 %v79
  %v544 = vunpack.c.l.b16 %v80
  %v545 = vunpack.c.l.b16 %v81
  %v546 = vunpack.c.l.b16 %v82
  %v547 = vunpack.c.l.b16 %v83
  %v548 = vunpack.c.l.b16 %v84
  %v549 = vunpack.c.l.b16 %v85
  %v550 = vunpack.c.l.b16 %v86
  %v551 = vunpack.c.l.b16 %v87
  %v552 = vunpack.c.l.b16 %v88
  %v553 = vunpack.c.l.b16 %v89
  %v554 = vunpack.c.l.b16 %v90
  %v555 = vunpack.c.l.b16 %v91
  %v556 = vunpack.c.l.b16 %v92
  %v557 = vunpack.c.l.b16 %v93
  %v558 = vunpack.c.l.b16 %v94
  %v559 = vunpack.c.l.b16 %v95
  %v560 = vunpack.c.l.b16 %v96
  %v561 = vunpack.c.l.b16 %v97
  %v562 = vunpack.c.l.b16 %v98
  %v563 = vunpack.c.l.b16 %v99
  %v564 = vunpack.c.l.b16 %v100
  %v565 = vunpack.c.l.b16 %v101
  %v566 = vunpack.c.l.b16 %v102
  %v567 = vunpack.c.l.b16 %v103
  %v568 = vunpack.c.l.b16 %v104
  %v569 = vunpack.c.l.b16 %v105
  %v570 = vunpack.c.l.b16 %v106
  %v571 = vunpack.c.l.b16 %v107
  %v572 = vunpack.c.l.b16 %v108
  %v573 = vunpack.c.l.b16 %v109
  %v574 = vunpack.c.l.b16 %v110
  %v575 = vunpack.c.l.b16 %v111
  %v576 = vunpack.c.l.b16 %v112
  %v577 = vunpack.c.l.b16 %v113
  %v578 = vunpack.c.l.b16 %v114
  %v579 = vunpack.c.l.b16 %v115
  %v580 = vunpack.c.l.b16 %v116
  %v581 = vunpack.c.l.b16 %v117
  %v582 = vunpack.c.l.b16 %v118
  %v583 = vunpack.c.l.b16 %v119
  %v584 = vunpack.c.l.b16 %v120
  %v585 = vunpack.c.l.b16 %v121
  %v586 = vunpack.c.l.b16 %v122
  %v587 = vunpack.c.l.b16 %v123
  %v588 = vunpack.c.l.b16 %v124
  %v589 = vunpack.c.l.b16 %v125
  %v590 = vunpack.c.l.b16 %v126
  %v591 = vunpack.c.l.b16 %v127
  %v592 = vunpack.c.l.b16 %v128
  %v593 = vunpack.c.l.b16 %v129
  %v594 = vunpack.c.l.b16 %v130
  %v595 = vunpack.c.l.b16 %v131
  %v596 = vunpack.c.l.b16 %v132
  %v597 = vunpack.c.l.b16 %v133
  %v598 = vunpack.c.l.b16 %v134
  %v599 = vunpack.c.l.b16 %v135
  %v600 = vunpack.c.l.b16 %v136
  %v601 = vunpack.c.l.b16 %v137
  %v602 = vunpack.c.l.b16 %v138
  %v603 = vunpack.c.l.b16 %v139
  %v604 = vunpack.c.l.b16 %v140
  %v605 = vunpack.c.l.b16 %v141
  %v606 = vunpack.c.l.b16 %v142
  %v607 = vunpack.c.l.b16 %v143
  %v608 = vunpack.c.l.b16 %v144
  %v609 = vunpack.c.l.b16 %v145
  %v610 = vunpack.c.l.b16 %v146
  %v611 = vunpack.c.l.b16 %v147
  %v612 = vunpack.c.l.b16 %v148
  %v613 = vunpack.c.l.b16 %v149
  %v614 = vunpack.c.l.b16 %v150
  %v615 = vunpack.c.l.b16 %v151
  %v616 = vunpack.c.l.b16 %v152
  %v617 = vunpack.c.l.b16 %v153
  %v618 = vunpack.c.l.b16 %v154
  %v619 = vunpack.c.l.b16 %v155
  %v620 = vunpack.c.l.b16 %v156
  %v621 = vunpack.c.l.b16 %v157
  %v622 = vunpack.c.l.b16 %v158
  %v623 = vunpack.c.l.b16 %v159
  %v624 = vunpack.c.l.b16 %v160
  %v625 = vunpack.c.l.b16 %v161
  %v626 = vunpack.c.l.b16 %v162
  %v627 = vunpack.c.l.b16 %v163
  %v628 = vunpack.c.l.b16 %v164
  %v629 = vunpack.c.l.b16 %v165
  %v630 = vunpack.c.l.b16 %v166
  %v631 = vunpack.c.l.b16 %v167
  %v632 = vunpack.c.l.b16 %v168
  %v633 = vunpack.c.l.b16 %v169
  %v634 = vunpack.c.l.b16 %v170
  %v635 = vunpack.c.l.b16 %v171
  %v636 = vunpack.c.l.b16 %v172
  %v637 = vunpack.c.l.b16 %v173
  %v638 = vunpack.c.l.b16 %v174
  %v639 = vunpack.c.l.b16 %v175
  %v640 = vunpack.c.l.b16 %v176
  %v641 = vunpack.c.l.b16 %v177
  %v642 = vunpack.c.l.b16 %v178
  %v643 = vunpack.c.l.b16 %v179
  %v644 = vunpack.c.l.b16 %v180
  %v645 = vunpack.c.l.b16 %v181
  %v646 = vunpack.c.l.b16 %v182
  %v647 = vunpack.c.l.b16 %v183
  %v648 = vunpack.c.l.b16 %v184
  %v649 = vunpack.c.l.b16 %v185
  %v650 = vunpack.c.l.b16 %v186
  %v651 = vunpack.c.l.b16 %v187
  %v652 = vunpack.c.l.b16 %v188
  %v653 = vunpack.c.l.b16 %v189
  %v654 = vunpack.c.l.b16 %v190
  %v655 = vunpack.c.l.b16 %v191
  %v656 = vunpack.c.l.b16 %v192
  %v657 = vunpack.c.l.b16 %v193
  %v658 = vunpack.c.l.b16 %v194
  %v659 = vunpack.c.l.b16 %v195
  %v660 = vunpack.c.l.b16 %v196
  %v661 = vunpack.c.l.b16 %v197
  %v662 = vunpack.c.l.b16 %v198
  %v663 = vunpack.c.l.b16 %v199
  %v664 = vunpack.c.l.b16 %v200
  %v665 = vunpack.c.l.b16 %v201
  %v666 = vunpack.c.l.b16 %v202
  %v667 = vunpack.c.l.b16 %v203
  %v668 = vunpack.c.l.b16 %v204
  %v669 = vunpack.c.l.b16 %v205
  %v670 = vunpack.c.l.b16 %v206
  %v671 = vunpack.c.l.b16 %v207
  %v672 = vunpack.c.l.b16 %v208
  %v673 = vunpack.c.l.b16 %v209
  %v674 = vunpack.c.l.b16 %v210
  %v675 = vunpack.c.l.b16 %v211
  %v676 = vunpack.c.l.b16 %v212
  %v677 = vunpack.c.l.b16 %v213
  %v678 = vunpack.c.l.b16 %v214
  %v679 = vunpack.c.l.b16 %v215
  %v680 = vunpack.c.l.b16 %v216
  %v681 = vunpack.c.l.b16 %v217
  %v682 = vunpack.c.l.b16 %v218
  %v683 = vunpack.c.l.b16 %v219
  %v684 = vunpack.c.l.b16 %v220
  %v685 = vunpack.c.l.b16 %v221
  %v686 = vunpack.c.l.b16 %v222
  %v687 = vunpack.c.l.b16 %v223
  %v688 = vunpack.c.l.b16 %v224
  %v689 = vpack.c.b16 %v494, %v493
  %v690 = vpack.c.b16 %v496, %v495
  %v691 = vpack.c.b16 %v498, %v497
  %v692 = vpack.c.b16 %v500, %v499
  %v693 = vpack.c.b16 %v502, %v501
  %v694 = vpack.c.b16 %v504, %v503
  %v695 = vpack.c.b16 %v506, %v505
  %v696 = vpack.c.b16 %v508, %v507
  %v697 = vpack.c.b16 %v510, %v509
  %v698 = vpack.c.b16 %v512, %v511
  %v699 = vpack.c.b16 %v514, %v513
  %v700 = vpack.c.b16 %v516, %v515
  %v701 = vpack.c.b16 %v518, %v517
  %v702 = vpack.c.b16 %v520, %v519
  %v703 = vpack.c.b16 %v522, %v521
  %v704 = vpack.c.b16 %v524, %v523
  %v705 = vpack.c.b16 %v526, %v525
  %v706 = vpack.c.b16 %v528, %v527
  %v707 = vpack.c.b16 %v530, %v529
  %v708 = vpack.c.b16 %v532, %v531
  %v709 = vpack.c.b16 %v534, %v533
  %v710 = vpack.c.b16 %v536, %v535
  %v711 = vpack.c.b16 %v538, %v537
  %v712 = vpack.c.b16 %v540, %v539
  %v713 = vpack.c.b16 %v542, %v541
  %v714 = vpack.c.b16 %v544, %v543
  %v715 = vpack.c.b16 %v546, %v545
  %v716 = vpack.c.b16 %v548, %v547
  %v717 = vpack.c.b16 %v550, %v549
  %v718 = vpack.c.b16 %v552, %v551
  %v719 = vpack.c.b16 %v554, %v553
  %v720 = vpack.c.b16 %v556, %v555
  %v721 = vpack.c.b16 %v558, %v557
  %v722 = vpack.c.b16 %v560, %v559
  %v723 = vpack.c.b16 %v562, %v561
  %v724 = vpack.c.b16 %v564, %v563
  %v725 = vpack.c.b16 %v566, %v565
  %v726 = vpack.c.b16 %v568, %v567
  %v727 = vpack.c.b16 %v570, %v569
  %v728 = vpack.c.b16 %v572, %v571
  %v729 = vpack.c.b16 %v574, %v573
  %v730 = vpack.c.b16 %v576, %v575
  %v731 = vpack.c.b16 %v578, %v577
  %v732 = vpack.c.b16 %v580, %v579
  %v733 = vpack.c.b16 %v582, %v581
  %v734 = vpack.c.b16 %v584, %v583
  %v735 = vpack.c.b16 %v586, %v585
  %v736 = vpack.c.b16 %v588, %v587
  %v737 = vpack.c.b16 %v590, %v589
  %v738 = vpack.c.b16 %v592, %v591
  %v739 = vpack.c.b16 %v594, %v593
  %v740 = vpack.c.b16 %v596, %v595
  %v741 = vpack.c.b16 %v598, %v597
  %v742 = vpack.c.b16 %v600, %v599
  %v743 = vpack.c.b16 %v602, %v601
  %v744 = vpack.c.b16 %v604, %v603
  %v745 = vpack.c.b16 %v606, %v605
  %v746 = vpack.c.b16 %v608, %v607
  %v747 = vpack.c.b16 %v610, %v609
  %v748 = vpack.c.b16 %v612, %v611
  %v749 = vpack.c.b16 %v614, %v613
  %v750 = vpack.c.b16 %v616, %v615
  %v751 = vpack.c.b16 %v618, %v617
  %v752 = vpack.c.b16 %v620, %v619
  %v753 = vpack.c.b16 %v622, %v621
  %v754 = vpack.c.b16 %v624, %v623
  %v755 = vpack.c.b16 %v626, %v625
  %v756 = vpack.c.b16 %v628, %v627
  %v757 = vpack.c.b16 %v630, %v629
  %v758 = vpack.c.b16 %v632, %v631
  %v759 = vpack.c.b16 %v634, %v633
  %v760 = vpack.c.b16 %v636, %v635
  %v761 = vpack.c.b16 %v638, %v637
  %v762 = vpack.c.b16 %v640, %v639
  %v763 = vpack.c.b16 %v642, %v641
  %v764 = vpack.c.b16 %v644, %v643
  %v765 = vpack.c.b16 %v646, %v645
  %v766 = vpack.c.b16 %v648, %v647
  %v767 = vpack.c.b16 %v650, %v649
  %v768 = vpack.c.b16 %v652, %v651
  %v769 = vpack.c.b16 %v654, %v653
  %v770 = vpack.c.b16 %v656, %v655
  %v771 = vpack.c.b16 %v658, %v657
  %v772 = vpack.c.b16 %v660, %v659
  %v773 = vpack.c.b16 %v662, %v661
  %v774 = vpack.c.b16 %v664, %v663
  %v775 = vpack.c.b16 %v666, %v665
  %v776 = vpack.c.b16 %v668, %v667
  %v777 = vpack.c.b16 %v670, %v669
  %v778 = vpack.c.b16 %v672, %v671
  %v779 = vpack.c.b16 %v674, %v673
  %v780 = vpack.c.b16 %v676, %v675
  %v781 = vpack.c.b16 %v678, %v677
  %v782 = vpack.c.b16 %v680, %v679
  %v783 = vpack.c.b16 %v682, %v681
  %v784 = vpack.c.b16 %v684, %v683
  %v785 = vpack.c.b16 %v686, %v685
  %v786 = vpack.c.b16 %v688, %v687
  %vm885 = vcmask 261120
  %v887 = vsel %vm885, %v284, 0
  %889 = vmatprep.subr.bf16.mxu0 0
  %890 = vmatpush1.bf16.msra.mxu0 %v689
  %891 = vmatprep.subr.bf16.mxu0 0
  %892 = vmatpush1.bf16.msra.mxu0 %v690
  %893 = vmatprep.subr.bf16.mxu0 0
  %894 = vmatpush1.bf16.msra.mxu0 %v691
  %895 = vmatprep.subr.bf16.mxu0 0
  %896 = vmatpush1.bf16.msra.mxu0 %v692
  %897 = vmatprep.subr.bf16.mxu0 0
  %898 = vmatpush1.bf16.msra.mxu0 %v693
  %899 = vmatprep.subr.bf16.mxu0 0
  %900 = vmatpush1.bf16.msra.mxu0 %v694
  %901 = vmatprep.subr.bf16.mxu0 0
  %902 = vmatpush1.bf16.msra.mxu0 %v695
  %903 = vmatprep.subr.bf16.mxu0 0
  %904 = vmatpush1.bf16.msra.mxu0 %v696
  %905 = vmatprep.subr.bf16.mxu0 0
  %906 = vmatpush1.bf16.msra.mxu0 %v697
  %907 = vmatprep.subr.bf16.mxu0 0
  %908 = vmatpush1.bf16.msra.mxu0 %v698
  %909 = vmatprep.subr.bf16.mxu0 0
  %910 = vmatpush1.bf16.msra.mxu0 %v699
  %911 = vmatprep.subr.bf16.mxu0 0
  %912 = vmatpush1.bf16.msra.mxu0 %v700
  %913 = vmatprep.subr.bf16.mxu0 0
  %914 = vmatpush1.bf16.msra.mxu0 %v701
  %915 = vmatprep.subr.bf16.mxu0 0
  %916 = vmatpush1.bf16.msra.mxu0 %v702
  %917 = vmatprep.subr.bf16.mxu0 0
  %918 = vmatpush1.bf16.msra.mxu0 %v703
  %919 = vmatprep.subr.bf16.mxu0 0
  %920 = vmatpush1.bf16.msra.mxu0 %v704
  %921 = vmatprep.mubr.bf16.mxu0 %v273
  %922 = vmatmul.mubr.bf16.gmra.mrb[0].mxu0 %v272
  %v923 = vpop.f32.mrb[0].mxu0
  %v924 = vadd.f32 %v230, %v923
  %v925 = vpop.f32.mrb[0].mxu0
  %v926 = vpop.f32.mrb[0].mxu0
  %v927 = vadd.f32 %v230, %v926
  %v928 = vpop.f32.mrb[0].mxu0
  %929 = vdwg.mxu0
  %930 = vmatprep.subr.bf16.mxu0 0
  %931 = vmatpush1.bf16.msra.mxu0 %v705
  %932 = vmatprep.subr.bf16.mxu0 0
  %933 = vmatpush1.bf16.msra.mxu0 %v706
  %934 = vmatprep.subr.bf16.mxu0 0
  %935 = vmatpush1.bf16.msra.mxu0 %v707
  %936 = vmatprep.subr.bf16.mxu0 0
  %937 = vmatpush1.bf16.msra.mxu0 %v708
  %938 = vmatprep.subr.bf16.mxu0 0
  %939 = vmatpush1.bf16.msra.mxu0 %v709
  %940 = vmatprep.subr.bf16.mxu0 0
  %941 = vmatpush1.bf16.msra.mxu0 %v710
  %942 = vmatprep.subr.bf16.mxu0 0
  %943 = vmatpush1.bf16.msra.mxu0 %v711
  %944 = vmatprep.subr.bf16.mxu0 0
  %945 = vmatpush1.bf16.msra.mxu0 %v712
  %946 = vmatprep.subr.bf16.mxu0 0
  %947 = vmatpush1.bf16.msra.mxu0 %v713
  %948 = vmatprep.subr.bf16.mxu0 0
  %949 = vmatpush1.bf16.msra.mxu0 %v714
  %950 = vmatprep.subr.bf16.mxu0 0
  %951 = vmatpush1.bf16.msra.mxu0 %v715
  %952 = vmatprep.subr.bf16.mxu0 0
  %953 = vmatpush1.bf16.msra.mxu0 %v716
  %954 = vmatprep.subr.bf16.mxu0 0
  %955 = vmatpush1.bf16.msra.mxu0 %v717
  %956 = vmatprep.subr.bf16.mxu0 0
  %957 = vmatpush1.bf16.msra.mxu0 %v718
  %958 = vmatprep.subr.bf16.mxu0 0
  %959 = vmatpush1.bf16.msra.mxu0 %v719
  %960 = vmatprep.subr.bf16.mxu0 0
  %961 = vmatpush1.bf16.msra.mxu0 %v720
  %962 = vmatprep.mubr.bf16.mxu0 %v275
  %963 = vmatmul.mubr.bf16.gmra.mrb[0].mxu0 %v274
  %v964 = vpop.f32.mrb[0].mxu0
  %v965 = vadd.f32 %v924, %v964
  %v966 = vpop.f32.mrb[0].mxu0
  %v967 = vpop.f32.mrb[0].mxu0
  %v968 = vadd.f32 %v927, %v967
  %v969 = vpop.f32.mrb[0].mxu0
  %970 = vdwg.mxu0
  %971 = vmatprep.subr.bf16.mxu0 0
  %972 = vmatpush1.bf16.msra.mxu0 %v721
  %973 = vmatprep.subr.bf16.mxu0 0
  %974 = vmatpush1.bf16.msra.mxu0 %v722
  %975 = vmatprep.subr.bf16.mxu0 0
  %976 = vmatpush1.bf16.msra.mxu0 %v723
  %977 = vmatprep.subr.bf16.mxu0 0
  %978 = vmatpush1.bf16.msra.mxu0 %v724
  %979 = vmatprep.subr.bf16.mxu0 0
  %980 = vmatpush1.bf16.msra.mxu0 %v725
  %981 = vmatprep.subr.bf16.mxu0 0
  %982 = vmatpush1.bf16.msra.mxu0 %v726
  %983 = vmatprep.subr.bf16.mxu0 0
  %984 = vmatpush1.bf16.msra.mxu0 %v727
  %985 = vmatprep.subr.bf16.mxu0 0
  %986 = vmatpush1.bf16.msra.mxu0 %v728
  %987 = vmatprep.subr.bf16.mxu0 0
  %988 = vmatpush1.bf16.msra.mxu0 %v729
  %989 = vmatprep.subr.bf16.mxu0 0
  %990 = vmatpush1.bf16.msra.mxu0 %v730
  %991 = vmatprep.subr.bf16.mxu0 0
  %992 = vmatpush1.bf16.msra.mxu0 %v731
  %993 = vmatprep.subr.bf16.mxu0 0
  %994 = vmatpush1.bf16.msra.mxu0 %v732
  %995 = vmatprep.subr.bf16.mxu0 0
  %996 = vmatpush1.bf16.msra.mxu0 %v733
  %997 = vmatprep.subr.bf16.mxu0 0
  %998 = vmatpush1.bf16.msra.mxu0 %v734
  %999 = vmatprep.subr.bf16.mxu0 0
  %1000 = vmatpush1.bf16.msra.mxu0 %v735
  %1001 = vmatprep.subr.bf16.mxu0 0
  %1002 = vmatpush1.bf16.msra.mxu0 %v736
  %1003 = vmatprep.mubr.bf16.mxu0 %v277
  %1004 = vmatmul.mubr.bf16.gmra.mrb[0].mxu0 %v276
  %v1005 = vpop.f32.mrb[0].mxu0
  %v1006 = vadd.f32 %v965, %v1005
  %v1007 = vpop.f32.mrb[0].mxu0
  %v1008 = vpop.f32.mrb[0].mxu0
  %v1009 = vadd.f32 %v968, %v1008
  %v1010 = vpop.f32.mrb[0].mxu0
  %1011 = vdwg.mxu0
  %1012 = vmatprep.subr.bf16.mxu0 0
  %1013 = vmatpush1.bf16.msra.mxu0 %v737
  %1014 = vmatprep.subr.bf16.mxu0 0
  %1015 = vmatpush1.bf16.msra.mxu0 %v738
  %1016 = vmatprep.subr.bf16.mxu0 0
  %1017 = vmatpush1.bf16.msra.mxu0 %v739
  %1018 = vmatprep.subr.bf16.mxu0 0
  %1019 = vmatpush1.bf16.msra.mxu0 %v740
  %1020 = vmatprep.subr.bf16.mxu0 0
  %1021 = vmatpush1.bf16.msra.mxu0 %v741
  %1022 = vmatprep.subr.bf16.mxu0 0
  %1023 = vmatpush1.bf16.msra.mxu0 %v742
  %1024 = vmatprep.subr.bf16.mxu0 0
  %1025 = vmatpush1.bf16.msra.mxu0 %v743
  %1026 = vmatprep.subr.bf16.mxu0 0
  %1027 = vmatpush1.bf16.msra.mxu0 %v744
  %1028 = vmatprep.subr.bf16.mxu0 0
  %1029 = vmatpush1.bf16.msra.mxu0 %v745
  %1030 = vmatprep.subr.bf16.mxu0 0
  %1031 = vmatpush1.bf16.msra.mxu0 %v746
  %1032 = vmatprep.subr.bf16.mxu0 0
  %1033 = vmatpush1.bf16.msra.mxu0 %v747
  %1034 = vmatprep.subr.bf16.mxu0 0
  %1035 = vmatpush1.bf16.msra.mxu0 %v748
  %1036 = vmatprep.subr.bf16.mxu0 0
  %1037 = vmatpush1.bf16.msra.mxu0 %v749
  %1038 = vmatprep.subr.bf16.mxu0 0
  %1039 = vmatpush1.bf16.msra.mxu0 %v750
  %1040 = vmatprep.subr.bf16.mxu0 0
  %1041 = vmatpush1.bf16.msra.mxu0 %v751
  %1042 = vmatprep.subr.bf16.mxu0 0
  %1043 = vmatpush1.bf16.msra.mxu0 %v752
  %1044 = vmatprep.mubr.bf16.mxu0 %v279
  %1045 = vmatmul.mubr.bf16.gmra.mrb[0].mxu0 %v278
  %v1046 = vpop.f32.mrb[0].mxu0
  %v1047 = vadd.f32 %v1006, %v1046
  %v1048 = vpop.f32.mrb[0].mxu0
  %v1049 = vpop.f32.mrb[0].mxu0
  %v1050 = vadd.f32 %v1009, %v1049
  %v1051 = vpop.f32.mrb[0].mxu0
  %1052 = vdwg.mxu0
  %1053 = vmatprep.subr.bf16.mxu0 0
  %1054 = vmatpush1.bf16.msra.mxu0 %v753
  %1055 = vmatprep.subr.bf16.mxu0 0
  %1056 = vmatpush1.bf16.msra.mxu0 %v754
  %1057 = vmatprep.subr.bf16.mxu0 0
  %1058 = vmatpush1.bf16.msra.mxu0 %v755
  %1059 = vmatprep.subr.bf16.mxu0 0
  %1060 = vmatpush1.bf16.msra.mxu0 %v756
  %1061 = vmatprep.subr.bf16.mxu0 0
  %1062 = vmatpush1.bf16.msra.mxu0 %v757
  %1063 = vmatprep.subr.bf16.mxu0 0
  %1064 = vmatpush1.bf16.msra.mxu0 %v758
  %1065 = vmatprep.subr.bf16.mxu0 0
  %1066 = vmatpush1.bf16.msra.mxu0 %v759
  %1067 = vmatprep.subr.bf16.mxu0 0
  %1068 = vmatpush1.bf16.msra.mxu0 %v760
  %1069 = vmatprep.subr.bf16.mxu0 0
  %1070 = vmatpush1.bf16.msra.mxu0 %v761
  %1071 = vmatprep.subr.bf16.mxu0 0
  %1072 = vmatpush1.bf16.msra.mxu0 %v762
  %1073 = vmatprep.subr.bf16.mxu0 0
  %1074 = vmatpush1.bf16.msra.mxu0 %v763
  %1075 = vmatprep.subr.bf16.mxu0 0
  %1076 = vmatpush1.bf16.msra.mxu0 %v764
  %1077 = vmatprep.subr.bf16.mxu0 0
  %1078 = vmatpush1.bf16.msra.mxu0 %v765
  %1079 = vmatprep.subr.bf16.mxu0 0
  %1080 = vmatpush1.bf16.msra.mxu0 %v766
  %1081 = vmatprep.subr.bf16.mxu0 0
  %1082 = vmatpush1.bf16.msra.mxu0 %v767
  %1083 = vmatprep.subr.bf16.mxu0 0
  %1084 = vmatpush1.bf16.msra.mxu0 %v768
  %1085 = vmatprep.mubr.bf16.mxu0 %v281
  %1086 = vmatmul.mubr.bf16.gmra.mrb[0].mxu0 %v280
  %v1087 = vpop.f32.mrb[0].mxu0
  %v1088 = vadd.f32 %v1047, %v1087
  %v1089 = vpop.f32.mrb[0].mxu0
  %v1090 = vpop.f32.mrb[0].mxu0
  %v1091 = vadd.f32 %v1050, %v1090
  %v1092 = vpop.f32.mrb[0].mxu0
  %1093 = vdwg.mxu0
  %1094 = vmatprep.subr.bf16.mxu0 0
  %1095 = vmatpush1.bf16.msra.mxu0 %v769
  %1096 = vmatprep.subr.bf16.mxu0 0
  %1097 = vmatpush1.bf16.msra.mxu0 %v770
  %1098 = vmatprep.subr.bf16.mxu0 0
  %1099 = vmatpush1.bf16.msra.mxu0 %v771
  %1100 = vmatprep.subr.bf16.mxu0 0
  %1101 = vmatpush1.bf16.msra.mxu0 %v772
  %1102 = vmatprep.subr.bf16.mxu0 0
  %1103 = vmatpush1.bf16.msra.mxu0 %v773
  %1104 = vmatprep.subr.bf16.mxu0 0
  %1105 = vmatpush1.bf16.msra.mxu0 %v774
  %1106 = vmatprep.subr.bf16.mxu0 0
  %1107 = vmatpush1.bf16.msra.mxu0 %v775
  %1108 = vmatprep.subr.bf16.mxu0 0
  %1109 = vmatpush1.bf16.msra.mxu0 %v776
  %1110 = vmatprep.subr.bf16.mxu0 0
  %1111 = vmatpush1.bf16.msra.mxu0 %v777
  %1112 = vmatprep.subr.bf16.mxu0 0
  %1113 = vmatpush1.bf16.msra.mxu0 %v778
  %1114 = vmatprep.subr.bf16.mxu0 0
  %1115 = vmatpush1.bf16.msra.mxu0 %v779
  %1116 = vmatprep.subr.bf16.mxu0 0
  %1117 = vmatpush1.bf16.msra.mxu0 %v780
  %1118 = vmatprep.subr.bf16.mxu0 0
  %1119 = vmatpush1.bf16.msra.mxu0 %v781
  %1120 = vmatprep.subr.bf16.mxu0 0
  %1121 = vmatpush1.bf16.msra.mxu0 %v782
  %1122 = vmatprep.subr.bf16.mxu0 0
  %1123 = vmatpush1.bf16.msra.mxu0 %v783
  %1124 = vmatprep.subr.bf16.mxu0 0
  %1125 = vmatpush1.bf16.msra.mxu0 %v784
  %1126 = vmatprep.mubr.bf16.mxu0 %v283
  %1127 = vmatmul.mubr.bf16.gmra.mrb[0].mxu0 %v282
  %v1128 = vpop.f32.mrb[0].mxu0
  %v1129 = vadd.f32 %v1088, %v1128
  %v1130 = vpop.f32.mrb[0].mxu0
  %v1131 = vpop.f32.mrb[0].mxu0
  %v1132 = vadd.f32 %v1091, %v1131
  %v1133 = vpop.f32.mrb[0].mxu0
  %1134 = vdwg.mxu0
  %1135 = vmatprep.subr.bf16.mxu0 0
  %1136 = vmatpush1.bf16.msra.mxu0 %v785
  %1137 = vmatprep.subr.bf16.mxu0 0
  %1138 = vmatpush1.bf16.msra.mxu0 %v786
  %1139 = vmatprep.subr.bf16.mxu0 0
  %1140 = vmatpush1.bf16.msra.mxu0 0
  %1141 = vmatprep.subr.bf16.mxu0 0
  %1142 = vmatpush1.bf16.msra.mxu0 0
  %1143 = vmatprep.subr.bf16.mxu0 0
  %1144 = vmatpush1.bf16.msra.mxu0 0
  %1145 = vmatprep.subr.bf16.mxu0 0
  %1146 = vmatpush1.bf16.msra.mxu0 0
  %1147 = vmatprep.subr.bf16.mxu0 0
  %1148 = vmatpush1.bf16.msra.mxu0 0
  %1149 = vmatprep.subr.bf16.mxu0 0
  %1150 = vmatpush1.bf16.msra.mxu0 0
  %1151 = vmatprep.subr.bf16.mxu0 0
  %1152 = vmatpush1.bf16.msra.mxu0 0
  %1153 = vmatprep.subr.bf16.mxu0 0
  %1154 = vmatpush1.bf16.msra.mxu0 0
  %1155 = vmatprep.subr.bf16.mxu0 0
  %1156 = vmatpush1.bf16.msra.mxu0 0
  %1157 = vmatprep.subr.bf16.mxu0 0
  %1158 = vmatpush1.bf16.msra.mxu0 0
  %1159 = vmatprep.subr.bf16.mxu0 0
  %1160 = vmatpush1.bf16.msra.mxu0 0
  %1161 = vmatprep.subr.bf16.mxu0 0
  %1162 = vmatpush1.bf16.msra.mxu0 0
  %1163 = vmatprep.subr.bf16.mxu0 0
  %1164 = vmatpush1.bf16.msra.mxu0 0
  %1165 = vmatprep.subr.bf16.mxu0 0
  %1166 = vmatpush1.bf16.msra.mxu0 0
  %1167 = vmatprep.mubr.bf16.mxu0 0
  %1168 = vmatmul.mubr.bf16.gmra.mrb[0].mxu0 %v887
  %v1169 = vpop.f32.mrb[0].mxu0
  %v1170 = vadd.f32 %v1129, %v1169
  %v1171 = vpop.f32.mrb[0].mxu0
  %v1172 = vpop.f32.mrb[0].mxu0
  %v1173 = vadd.f32 %v1132, %v1172
  %v1174 = vpop.f32.mrb[0].mxu0
  %1175 = vdwg.mxu0
  %1176 = vst [vmem:[%s3] sm:$0xff] %v1170
  %1177 = vst [vmem:[%s3 + $0x8] sm:$0xff] %v1173
  // Predicated region
  $region14: #{cnn_forward.5} parent=0 // pred_check
    _
  $region15: #{cnn_forward.5} parent=0 // pred_check_branch
    %1179 = sbr.rel (0) target = $region17
  $region16: #{cnn_forward.5} parent=0 // pred_region
    _
  $region17: #{cnn_forward.5} parent=0 // pred_fallthru
    _
  // Predicated region
  $region18: #{cnn_forward.5} parent=0 // pred_check
    _
  $region19: #{cnn_forward.5} parent=0 // pred_check_branch
    %1181 = sbr.rel (0) target = $region21
  $region20: #{cnn_forward.5} parent=0 // pred_region
    _
  $region21: #{cnn_forward.5} parent=0 // pred_fallthru
    _

</llo_original>
